<compile_context>
chip_gen: v7x
topology: tpu7x:2x2x1
jax: 0.10.0
libtpu: 0.0.40
codegen_flags: <defaults>
</compile_context>

<pallas_src>
import functools
import math

import jax
import jax.numpy as jnp
from jax import lax
from jax.experimental import pallas as pl
from jax.experimental.pallas import tpu as pltpu

_LANES = 128


def _gsplat_kernel(params_ref, hf_ref, wf_ref, o_ref, *, H, W, C, L, G, stride,
                   unroll):
    """grid = (pixel_tiles, gaussian_chunks); the chunk axis is a reduction.

    params_ref : SMEM f32[(Npad * stride,)]; per gaussian (stride = 17 + C):
                 [m00, 2*m01, m11, fy, fx,
                  (cx, cy, c0) * 4 taps,        # c0 already holds log(w) - zmax
                  color_0 .. color_{C-1}]
                 with (m00, m01, m11) = -0.5 * inv(COV + 1e-6) and (fy, fx) the
                 floor of the grid_sample fractional pixel shift.
    hf_ref/wf_ref : VMEM f32[(TR, 128)] pixel row / col indices of this tile.
    o_ref      : VMEM f32[(C, TR, 128)] accumulator, resident across chunks.
    """
    gi = pl.program_id(1)
    n_chunks = pl.num_programs(1)

    step_x = 2.0 * L / max(H - 1, 1)   # x spacing: x runs along H ('ij' meshgrid)
    step_y = 2.0 * L / max(W - 1, 1)   # y spacing: y runs along W

    # Tile-invariant planes: computed once per grid step, amortized over G.
    hf = hf_ref[...]
    wf = wf_ref[...]
    xf = -L + hf * step_x
    yf = -L + wf * step_y
    x2 = xf * xf
    y2 = yf * yf
    xy = xf * yf

    @pl.when(gi == 0)
    def _():
        o_ref[...] = jnp.zeros_like(o_ref)

    neg = jnp.float32(-1e30)
    col_off = stride - C

    def splat_one(g, carry):
        base = (gi * G + g) * stride
        m00 = params_ref[base + 0]
        m01_2 = params_ref[base + 1]
        m11 = params_ref[base + 2]
        fy = params_ref[base + 3]
        fx = params_ref[base + 4]

        # Un-shifted log-kernel plane (zmax already folded into each tap's c0).
        z = m00 * x2 + m01_2 * xy + m11 * y2

        # grid_sample(align_corners=True, zeros padding): validity of the 4
        # integer-shifted taps at (h + fy + a, w + fx + b).
        hv = hf + fy
        wv = wf + fx
        mh = ((hv >= 0.0) & (hv <= H - 1.0),
              (hv >= -1.0) & (hv <= H - 2.0))
        mw = ((wv >= 0.0) & (wv <= W - 1.0),
              (wv >= -1.0) & (wv <= W - 2.0))

        kn = None
        for t in range(4):
            a, b = divmod(t, 2)
            cx = params_ref[base + 5 + 3 * t + 0]
            cy = params_ref[base + 5 + 3 * t + 1]
            c0 = params_ref[base + 5 + 3 * t + 2]   # includes log(w_ab) - zmax
            e = z + (cx * xf + cy * yf + c0)        # = z(x+a,y+b) + log w - zmax
            e = jnp.where(mh[a] & mw[b], e, neg)
            tap = jnp.exp(e)                        # EUP; 0 when masked or w == 0
            kn = tap if kn is None else kn + tap

        # Per-channel in-place FMA into the resident accumulator (no stacked
        # loop-carried (C, TR, 128) accumulator).
        for c in range(C):
            col = params_ref[base + col_off + c]
            o_ref[c, :, :] = o_ref[c, :, :] + col * kn
        return carry

    lax.fori_loop(0, G, splat_one, 0, unroll=unroll)

    @pl.when(gi == n_chunks - 1)
    def _():
        o_ref[...] = jnp.clip(o_ref[...], 0.0, 1.0)


def rasterize_pallas(scale, rot, mean, color, image_size,
                     gaussians_per_step=32, tile_rows=256, unroll=True):
    """JAX/Pallas equivalent of rasterize(). Returns (H, W, C) float32 in [0,1]."""
    H, W, C = image_size
    N = color.shape[0]
    rot = rot.reshape(-1)
    L = 5.0
    step_x = 2.0 * L / max(H - 1, 1)
    step_y = 2.0 * L / max(W - 1, 1)

    # --- gaussian-chunk padding (benign identity gaussians with zero color) ---
    G = max(8, min(int(gaussians_per_step), ((N + 7) // 8) * 8))
    n_steps = max(1, -(-N // G))
    n_pad = n_steps * G - N
    if n_pad:
        scale = jnp.concatenate([scale, jnp.ones((n_pad, 2), jnp.float32)], 0)
        rot = jnp.concatenate([rot, jnp.zeros((n_pad,), jnp.float32)], 0)
        mean = jnp.concatenate([mean, jnp.zeros((n_pad, 2), jnp.float32)], 0)
        color = jnp.concatenate([color, jnp.zeros((n_pad, C), jnp.float32)], 0)

    # --- per-gaussian scalars (wrapper side: keeps floor/log/trig and the grid
    # amax out of the kernel's per-gaussian loop) ---
    cos_r = jnp.cos(rot)
    sin_r = jnp.sin(rot)
    s0sq = scale[:, 0] ** 2
    s1sq = scale[:, 1] ** 2
    cov00 = cos_r * cos_r * s0sq + sin_r * sin_r * s1sq     # COV = R diag(s^2) R^T
    cov01 = cos_r * sin_r * (s0sq - s1sq)
    cov11 = sin_r * sin_r * s0sq + cos_r * cos_r * s1sq
    eps = 1e-6                   # torch adds the scalar to EVERY entry of COV
    a_ = cov00 + eps
    b_ = cov01 + eps
    d_ = cov11 + eps
    det = a_ * d_ - b_ * b_
    m00 = -0.5 * d_ / det        # (-0.5 * inv(COV + eps))[0, 0]
    m01 = 0.5 * b_ / det         # (-0.5 * inv(COV + eps))[0, 1]
    m11 = -0.5 * a_ / det        # (-0.5 * inv(COV + eps))[1, 1]
    # 1/(2*pi*sqrt(det COV)) cancels against the /amax normalization (log space).

    # Exact grid max of the concave quadratic z (== torch's kernel.amax in log
    # space): for each grid x the column max in y sits at floor/ceil of the
    # continuous argmax, then reduce over x.  O(N*H) and exact for any rotation.
    xs = -L + jnp.arange(H, dtype=jnp.float32) * jnp.float32(step_x)       # (H,)
    ystar = -(m01[:, None] * xs[None, :]) / m11[:, None]                   # (N,H)
    jf = (ystar + L) / step_y
    j0 = jnp.clip(jnp.floor(jf), 0.0, W - 1.0)
    j1 = jnp.clip(j0 + 1.0, 0.0, W - 1.0)

    def _z_cols(jcol):
        yv = -L + jcol * jnp.float32(step_y)
        xv = xs[None, :]
        return (m00[:, None] * (xv * xv) + (2.0 * m01)[:, None] * (xv * yv)
                + m11[:, None] * (yv * yv))

    zmax = jnp.maximum(_z_cols(j0), _z_cols(j1)).max(axis=1)               # (N,)

    # affine_grid + grid_sample(align_corners=True) for a pure translation ==
    # bilinear sample at (h + dy, w + dx) with zeros padding.
    dx = mean[:, 0] * (W - 1) / 2.0          # shift in pixels along W
    dy = mean[:, 1] * (H - 1) / 2.0          # shift in pixels along H
    fy = jnp.floor(dy)
    fx = jnp.floor(dx)
    wgt_y = (1.0 - (dy - fy), dy - fy)
    wgt_x = (1.0 - (dx - fx), dx - fx)

    # Per-tap exponent coefficients: z(x+alpha, y+beta) = z(x,y) + cx*x + cy*y
    # + quad(alpha, beta); fold log(bilinear weight) and -zmax into c0.
    tap_cols = []
    for a in (0, 1):
        alpha = (fy + a) * step_x
        for b in (0, 1):
            beta = (fx + b) * step_y
            cx = 2.0 * (m00 * alpha + m01 * beta)
            cy = 2.0 * (m01 * alpha + m11 * beta)
            c0 = (m00 * alpha * alpha + 2.0 * m01 * alpha * beta
                  + m11 * beta * beta + jnp.log(wgt_y[a] * wgt_x[b]) - zmax)
            tap_cols += [cx, cy, c0]

    stride = 17 + C   # 5 + 4 taps * 3 + C
    params = jnp.stack(
        [m00, 2.0 * m01, m11, fy, fx] + tap_cols
        + [color[:, c].astype(jnp.float32) for c in range(C)], axis=1)
    params_flat = params.astype(jnp.float32).reshape(-1)

    # --- lane-dense pixel tiling: pixels flattened to rows of 128 lanes ---
    P = H * W
    PR = -(-P // _LANES)
    TR = max(8, min(int(tile_rows), ((PR + 7) // 8) * 8))
    TR = (TR // 8) * 8
    PRpad = -(-PR // TR) * TR
    n_tiles = PRpad // TR

    p = jnp.minimum(jnp.arange(PRpad * _LANES, dtype=jnp.int32), P - 1)
    hf = (p // W).astype(jnp.float32).reshape(PRpad, _LANES)
    wf = (p % W).astype(jnp.float32).reshape(PRpad, _LANES)

    kernel = functools.partial(_gsplat_kernel, H=H, W=W, C=C, L=L, G=G,
                               stride=stride, unroll=unroll)
    out = pl.pallas_call(
        kernel,
        out_shape=jax.ShapeDtypeStruct((C, PRpad, _LANES), jnp.float32),
        grid=(n_tiles, n_steps),
        in_specs=[
            pl.BlockSpec(memory_space=pltpu.MemorySpace.SMEM),   # params (whole)
            pl.BlockSpec((TR, _LANES), lambda t, i: (t, 0)),     # hf tile
            pl.BlockSpec((TR, _LANES), lambda t, i: (t, 0)),     # wf tile
        ],
        out_specs=pl.BlockSpec((C, TR, _LANES), lambda t, i: (0, t, 0)),
        compiler_params=pltpu.CompilerParams(
            dimension_semantics=("parallel", "arbitrary")),
    )(params_flat, hf, wf)

    img = out.reshape(C, PRpad * _LANES)[:, :P].reshape(C, H, W)
    return jnp.transpose(img, (1, 2, 0))   # (H, W, C), matches torch layout


def _rasterize_reference(scale, rot, mean, color, image_size):
    """Pure-JAX transcription of the torch rasterize() (O(N*H*W); test only)."""
    H, W, C = image_size
    N = color.shape[0]
    rot = rot.reshape(-1)
    L = 5.0
    cos_r, sin_r = jnp.cos(rot), jnp.sin(rot)
    R = jnp.stack([jnp.stack([cos_r, -sin_r], -1),
                   jnp.stack([sin_r, cos_r], -1)], -2)            # (N,2,2)
    RS = R * scale[:, None, :]                                    # R @ diag(s)
    COV = jnp.einsum("nij,nkj->nik", RS, RS, precision="highest")
    CINV = jnp.linalg.inv(COV + 1e-6)
    x = jnp.linspace(-L, L, H)
    y = jnp.linspace(-L, L, W)
    xx, yy = jnp.meshgrid(x, y, indexing="ij")
    c00 = CINV[:, 0, 0][:, None, None]
    c01 = CINV[:, 0, 1][:, None, None]
    c11 = CINV[:, 1, 1][:, None, None]
    z = -0.5 * (c00 * xx * xx + 2.0 * c01 * xx * yy + c11 * yy * yy)
    kern = jnp.exp(z) / (2.0 * jnp.pi * jnp.sqrt(jnp.linalg.det(COV)))[:, None, None]
    kern = kern / kern.max(axis=(-2, -1), keepdims=True)
    dx = mean[:, 0] * (W - 1) / 2.0
    dy = mean[:, 1] * (H - 1) / 2.0
    hh = jnp.arange(H, dtype=jnp.float32)[None, :, None] + dy[:, None, None]
    ww = jnp.arange(W, dtype=jnp.float32)[None, None, :] + dx[:, None, None]
    h0 = jnp.floor(hh)
    w0 = jnp.floor(ww)
    n_idx = jnp.arange(N)[:, None, None]
    out = jnp.zeros((N, H, W), jnp.float32)
    for a in (0, 1):
        for b in (0, 1):
            hi = h0 + a
            wi = w0 + b
            wgt = (1.0 - jnp.abs(hh - hi)) * (1.0 - jnp.abs(ww - wi))
            valid = (hi >= 0) & (hi <= H - 1) & (wi >= 0) & (wi <= W - 1)
            samp = kern[n_idx,
                        jnp.clip(hi, 0, H - 1).astype(jnp.int32),
                        jnp.clip(wi, 0, W - 1).astype(jnp.int32)]
            out = out + jnp.where(valid, wgt * samp, 0.0)
    img = (out[:, None] * color[:, :, None, None]).sum(axis=0)    # (C,H,W)
    return jnp.clip(img, 0.0, 1.0).transpose(1, 2, 0)


def init_gsplat_params(key, N, C):
    """Deterministic synthetic init matching GSplat.__init__ shapes/transforms."""
    k1, k2, k3, k4, k5 = jax.random.split(key, 5)
    u = lambda k, shape: jax.random.uniform(k, shape, jnp.float32, 0.05, 0.95)
    logit = lambda p: jnp.log(p / (1.0 - p))
    return {
        "scale": logit(u(k1, (N, 2))),                  # logit(rand(N,2))
        "rot": jnp.arctanh(2.0 * u(k2, (N, 1)) - 1.0),  # atanh(2*rand-1)
        "mean": u(k3, (N, 2)) * 2.0 - 1.0,              # rand*2 - 1
        "color": u(k4, (N, C)),                         # rand(N,C)
        "alpha": logit(u(k5, (N, 1))),                  # logit(rand(N,1))
    }


def _activations(raw_params, n_active):
    scale = jax.nn.sigmoid(raw_params["scale"][:n_active])
    rot = jnp.tanh(raw_params["rot"][:n_active]) * (math.pi / 2.0)
    mean = jnp.tanh(raw_params["mean"][:n_active])
    alpha = jax.nn.sigmoid(raw_params["alpha"][:n_active])
    color = jax.nn.sigmoid(raw_params["color"][:n_active]) * alpha.reshape(-1, 1)
    return scale, rot, mean, color


def gsplat_forward(raw_params, n_active, image_size):
    """GSplat.forward: the mask keeps the first n_active gaussians (static slice)."""
    scale, rot, mean, color = _activations(raw_params, n_active)
    return rasterize_pallas(scale, rot, mean, color, image_size)


if __name__ == "__main__":
    N = 8                      # total gaussians in the module
    n_active = 6               # mask keeps the first n_active
    image_size = [32, 32, 3]   # small H, W, C

    key = jax.random.PRNGKey(0)
    raw_params = init_gsplat_params(key, N, image_size[2])

    image = gsplat_forward(raw_params, n_active, image_size)
    image = jax.block_until_ready(image)

    assert image.shape == (image_size[0], image_size[1], image_size[2])
    assert image.dtype == jnp.float32
    assert bool(jnp.all(jnp.isfinite(image)))
    assert bool(jnp.all((image >= 0.0) & (image <= 1.0)))

    # Correctness vs. a pure-JAX transcription of the torch reference; the
    # non-square case catches any H/W axis or shift-sign mixup.
    scale, rot, mean, color = _activations(raw_params, n_active)
    for isz in (image_size, [24, 40, 3]):
        got = jax.block_until_ready(rasterize_pallas(scale, rot, mean, color, isz))
        ref = _rasterize_reference(scale, rot, mean, color, isz)
        err = float(jnp.max(jnp.abs(got - ref)))
        assert err < 2e-2, f"mismatch vs reference at {isz}: {err}"

    print("KERNEL_OK")
</pallas_src>

<mosaic_0001>
module attributes {stable_mosaic.version = 11 : i64} {
  func.func @_gsplat_kernel(%arg0: i32, %arg1: i32, %arg2: memref<160xf32, #tpu.memory_space<smem>>, %arg3: memref<8x128xf32, #tpu.memory_space<vmem>>, %arg4: memref<8x128xf32, #tpu.memory_space<vmem>>, %arg5: memref<3x8x128xf32, #tpu.memory_space<vmem>>) attributes {dimension_semantics = [#tpu.dimension_semantics<parallel>, #tpu.dimension_semantics<arbitrary>], iteration_bounds = array<i64: 1, 1>, scalar_prefetch = 0 : i64, scratch_operands = 0 : i64, tpu.core_type = #tpu.core_type<tc>, window_params = [{transform_indices = @transform_0, window_bounds = array<i64: 160>}, {transform_indices = @transform_1, window_bounds = array<i64: 8, 128>}, {transform_indices = @transform_2, window_bounds = array<i64: 8, 128>}, {transform_indices = @transform_3, window_bounds = array<i64: 3, 8, 128>}]} {
    %c0 = arith.constant 0 : index
    %c0_0 = arith.constant 0 : index
    %0 = vector.load %arg3[%c0, %c0_0] : memref<8x128xf32, #tpu.memory_space<vmem>>, vector<8x128xf32>
    %c0_1 = arith.constant 0 : index
    %c0_2 = arith.constant 0 : index
    %1 = vector.load %arg4[%c0_1, %c0_2] : memref<8x128xf32, #tpu.memory_space<vmem>>, vector<8x128xf32>
    %cst = arith.constant 0.322580636 : f32
    %2 = vector.broadcast %cst : f32 to vector<8x128xf32>
    %3 = arith.mulf %0, %2 : vector<8x128xf32>
    %cst_3 = arith.constant -5.000000e+00 : f32
    %4 = vector.broadcast %cst_3 : f32 to vector<8x128xf32>
    %5 = arith.addf %4, %3 : vector<8x128xf32>
    %cst_4 = arith.constant 0.322580636 : f32
    %6 = vector.broadcast %cst_4 : f32 to vector<8x128xf32>
    %7 = arith.mulf %1, %6 : vector<8x128xf32>
    %cst_5 = arith.constant -5.000000e+00 : f32
    %8 = vector.broadcast %cst_5 : f32 to vector<8x128xf32>
    %9 = arith.addf %8, %7 : vector<8x128xf32>
    %10 = arith.mulf %5, %5 : vector<8x128xf32>
    %11 = arith.mulf %9, %9 : vector<8x128xf32>
    %12 = arith.mulf %5, %9 : vector<8x128xf32>
    %c0_i32 = arith.constant 0 : i32
    %13 = arith.cmpi eq, %arg1, %c0_i32 : i32
    %14 = arith.extui %13 : i1 to i32
    %c0_i32_6 = arith.constant 0 : i32
    %15 = arith.cmpi ne, %14, %c0_i32_6 : i32
    scf.if %15 {
      %cst_606 = arith.constant 0.000000e+00 : f32
      %1595 = vector.broadcast %cst_606 : f32 to vector<3x8x128xf32>
      %c0_607 = arith.constant 0 : index
      %c0_608 = arith.constant 0 : index
      %c0_609 = arith.constant 0 : index
      %1596 = vector.load %arg5[%c0_607, %c0_608, %c0_609] : memref<3x8x128xf32, #tpu.memory_space<vmem>>, vector<3x8x128xf32>
      tpu.vector_store %arg5[%c0_607, %c0_608, %c0_609], %1595 {strides = array<i32>} : memref<3x8x128xf32, #tpu.memory_space<vmem>>, vector<3x8x128xf32>,
    } else {
    }
    %cst_7 = arith.constant -1.000000e+30 : f32
    %c0_i32_8 = arith.constant 0 : i32
    %c8_i32 = arith.constant 8 : i32
    %16 = arith.muli %arg1, %c8_i32 : i32
    %17 = arith.addi %16, %c0_i32_8 : i32
    %c20_i32 = arith.constant 20 : i32
    %18 = arith.muli %17, %c20_i32 : i32
    %c0_i32_9 = arith.constant 0 : i32
    %19 = arith.addi %18, %c0_i32_9 : i32
    %20 = arith.index_cast %19 : i32 to index
    %21 = memref.load %arg2[%20] : memref<160xf32, #tpu.memory_space<smem>>
    %c1_i32 = arith.constant 1 : i32
    %22 = arith.addi %18, %c1_i32 : i32
    %23 = arith.index_cast %22 : i32 to index
    %24 = memref.load %arg2[%23] : memref<160xf32, #tpu.memory_space<smem>>
    %c2_i32 = arith.constant 2 : i32
    %25 = arith.addi %18, %c2_i32 : i32
    %26 = arith.index_cast %25 : i32 to index
    %27 = memref.load %arg2[%26] : memref<160xf32, #tpu.memory_space<smem>>
    %c3_i32 = arith.constant 3 : i32
    %28 = arith.addi %18, %c3_i32 : i32
    %29 = arith.index_cast %28 : i32 to index
    %30 = memref.load %arg2[%29] : memref<160xf32, #tpu.memory_space<smem>>
    %c4_i32 = arith.constant 4 : i32
    %31 = arith.addi %18, %c4_i32 : i32
    %32 = arith.index_cast %31 : i32 to index
    %33 = memref.load %arg2[%32] : memref<160xf32, #tpu.memory_space<smem>>
    %34 = vector.broadcast %21 : f32 to vector<8x128xf32>
    %35 = arith.mulf %34, %10 : vector<8x128xf32>
    %36 = vector.broadcast %24 : f32 to vector<8x128xf32>
    %37 = arith.mulf %36, %12 : vector<8x128xf32>
    %38 = arith.addf %35, %37 : vector<8x128xf32>
    %39 = vector.broadcast %27 : f32 to vector<8x128xf32>
    %40 = arith.mulf %39, %11 : vector<8x128xf32>
    %41 = arith.addf %38, %40 : vector<8x128xf32>
    %42 = vector.broadcast %30 : f32 to vector<8x128xf32>
    %43 = arith.addf %0, %42 : vector<8x128xf32>
    %44 = vector.broadcast %33 : f32 to vector<8x128xf32>
    %45 = arith.addf %1, %44 : vector<8x128xf32>
    %cst_10 = arith.constant 0.000000e+00 : f32
    %46 = vector.broadcast %cst_10 : f32 to vector<8x128xf32>
    %47 = arith.cmpf oge, %43, %46 : vector<8x128xf32>
    %cst_11 = arith.constant 3.100000e+01 : f32
    %48 = vector.broadcast %cst_11 : f32 to vector<8x128xf32>
    %49 = arith.cmpf ole, %43, %48 : vector<8x128xf32>
    %50 = arith.andi %47, %49 : vector<8x128xi1>
    %cst_12 = arith.constant -1.000000e+00 : f32
    %51 = vector.broadcast %cst_12 : f32 to vector<8x128xf32>
    %52 = arith.cmpf oge, %43, %51 : vector<8x128xf32>
    %cst_13 = arith.constant 3.000000e+01 : f32
    %53 = vector.broadcast %cst_13 : f32 to vector<8x128xf32>
    %54 = arith.cmpf ole, %43, %53 : vector<8x128xf32>
    %55 = arith.andi %52, %54 : vector<8x128xi1>
    %cst_14 = arith.constant 0.000000e+00 : f32
    %56 = vector.broadcast %cst_14 : f32 to vector<8x128xf32>
    %57 = arith.cmpf oge, %45, %56 : vector<8x128xf32>
    %cst_15 = arith.constant 3.100000e+01 : f32
    %58 = vector.broadcast %cst_15 : f32 to vector<8x128xf32>
    %59 = arith.cmpf ole, %45, %58 : vector<8x128xf32>
    %60 = arith.andi %57, %59 : vector<8x128xi1>
    %cst_16 = arith.constant -1.000000e+00 : f32
    %61 = vector.broadcast %cst_16 : f32 to vector<8x128xf32>
    %62 = arith.cmpf oge, %45, %61 : vector<8x128xf32>
    %cst_17 = arith.constant 3.000000e+01 : f32
    %63 = vector.broadcast %cst_17 : f32 to vector<8x128xf32>
    %64 = arith.cmpf ole, %45, %63 : vector<8x128xf32>
    %65 = arith.andi %62, %64 : vector<8x128xi1>
    %c5_i32 = arith.constant 5 : i32
    %66 = arith.addi %18, %c5_i32 : i32
    %c0_i32_18 = arith.constant 0 : i32
    %67 = arith.addi %66, %c0_i32_18 : i32
    %c0_i32_19 = arith.constant 0 : i32
    %68 = arith.addi %67, %c0_i32_19 : i32
    %69 = arith.index_cast %68 : i32 to index
    %70 = memref.load %arg2[%69] : memref<160xf32, #tpu.memory_space<smem>>
    %c5_i32_20 = arith.constant 5 : i32
    %71 = arith.addi %18, %c5_i32_20 : i32
    %c0_i32_21 = arith.constant 0 : i32
    %72 = arith.addi %71, %c0_i32_21 : i32
    %c1_i32_22 = arith.constant 1 : i32
    %73 = arith.addi %72, %c1_i32_22 : i32
    %74 = arith.index_cast %73 : i32 to index
    %75 = memref.load %arg2[%74] : memref<160xf32, #tpu.memory_space<smem>>
    %c5_i32_23 = arith.constant 5 : i32
    %76 = arith.addi %18, %c5_i32_23 : i32
    %c0_i32_24 = arith.constant 0 : i32
    %77 = arith.addi %76, %c0_i32_24 : i32
    %c2_i32_25 = arith.constant 2 : i32
    %78 = arith.addi %77, %c2_i32_25 : i32
    %79 = arith.index_cast %78 : i32 to index
    %80 = memref.load %arg2[%79] : memref<160xf32, #tpu.memory_space<smem>>
    %81 = vector.broadcast %70 : f32 to vector<8x128xf32>
    %82 = arith.mulf %81, %5 : vector<8x128xf32>
    %83 = vector.broadcast %75 : f32 to vector<8x128xf32>
    %84 = arith.mulf %83, %9 : vector<8x128xf32>
    %85 = arith.addf %82, %84 : vector<8x128xf32>
    %86 = vector.broadcast %80 : f32 to vector<8x128xf32>
    %87 = arith.addf %85, %86 : vector<8x128xf32>
    %88 = arith.addf %41, %87 : vector<8x128xf32>
    %89 = arith.andi %50, %60 : vector<8x128xi1>
    %90 = vector.broadcast %cst_7 : f32 to vector<8x128xf32>
    %91 = arith.select %89, %88, %90 : vector<8x128xi1>, vector<8x128xf32>
    %92 = math.exp %91 : vector<8x128xf32>
    %c5_i32_26 = arith.constant 5 : i32
    %93 = arith.addi %18, %c5_i32_26 : i32
    %c3_i32_27 = arith.constant 3 : i32
    %94 = arith.addi %93, %c3_i32_27 : i32
    %c0_i32_28 = arith.constant 0 : i32
    %95 = arith.addi %94, %c0_i32_28 : i32
    %96 = arith.index_cast %95 : i32 to index
    %97 = memref.load %arg2[%96] : memref<160xf32, #tpu.memory_space<smem>>
    %c5_i32_29 = arith.constant 5 : i32
    %98 = arith.addi %18, %c5_i32_29 : i32
    %c3_i32_30 = arith.constant 3 : i32
    %99 = arith.addi %98, %c3_i32_30 : i32
    %c1_i32_31 = arith.constant 1 : i32
    %100 = arith.addi %99, %c1_i32_31 : i32
    %101 = arith.index_cast %100 : i32 to index
    %102 = memref.load %arg2[%101] : memref<160xf32, #tpu.memory_space<smem>>
    %c5_i32_32 = arith.constant 5 : i32
    %103 = arith.addi %18, %c5_i32_32 : i32
    %c3_i32_33 = arith.constant 3 : i32
    %104 = arith.addi %103, %c3_i32_33 : i32
    %c2_i32_34 = arith.constant 2 : i32
    %105 = arith.addi %104, %c2_i32_34 : i32
    %106 = arith.index_cast %105 : i32 to index
    %107 = memref.load %arg2[%106] : memref<160xf32, #tpu.memory_space<smem>>
    %108 = vector.broadcast %97 : f32 to vector<8x128xf32>
    %109 = arith.mulf %108, %5 : vector<8x128xf32>
    %110 = vector.broadcast %102 : f32 to vector<8x128xf32>
    %111 = arith.mulf %110, %9 : vector<8x128xf32>
    %112 = arith.addf %109, %111 : vector<8x128xf32>
    %113 = vector.broadcast %107 : f32 to vector<8x128xf32>
    %114 = arith.addf %112, %113 : vector<8x128xf32>
    %115 = arith.addf %41, %114 : vector<8x128xf32>
    %116 = arith.andi %50, %65 : vector<8x128xi1>
    %117 = vector.broadcast %cst_7 : f32 to vector<8x128xf32>
    %118 = arith.select %116, %115, %117 : vector<8x128xi1>, vector<8x128xf32>
    %119 = math.exp %118 : vector<8x128xf32>
    %120 = arith.addf %92, %119 : vector<8x128xf32>
    %c5_i32_35 = arith.constant 5 : i32
    %121 = arith.addi %18, %c5_i32_35 : i32
    %c6_i32 = arith.constant 6 : i32
    %122 = arith.addi %121, %c6_i32 : i32
    %c0_i32_36 = arith.constant 0 : i32
    %123 = arith.addi %122, %c0_i32_36 : i32
    %124 = arith.index_cast %123 : i32 to index
    %125 = memref.load %arg2[%124] : memref<160xf32, #tpu.memory_space<smem>>
    %c5_i32_37 = arith.constant 5 : i32
    %126 = arith.addi %18, %c5_i32_37 : i32
    %c6_i32_38 = arith.constant 6 : i32
    %127 = arith.addi %126, %c6_i32_38 : i32
    %c1_i32_39 = arith.constant 1 : i32
    %128 = arith.addi %127, %c1_i32_39 : i32
    %129 = arith.index_cast %128 : i32 to index
    %130 = memref.load %arg2[%129] : memref<160xf32, #tpu.memory_space<smem>>
    %c5_i32_40 = arith.constant 5 : i32
    %131 = arith.addi %18, %c5_i32_40 : i32
    %c6_i32_41 = arith.constant 6 : i32
    %132 = arith.addi %131, %c6_i32_41 : i32
    %c2_i32_42 = arith.constant 2 : i32
    %133 = arith.addi %132, %c2_i32_42 : i32
    %134 = arith.index_cast %133 : i32 to index
    %135 = memref.load %arg2[%134] : memref<160xf32, #tpu.memory_space<smem>>
    %136 = vector.broadcast %125 : f32 to vector<8x128xf32>
    %137 = arith.mulf %136, %5 : vector<8x128xf32>
    %138 = vector.broadcast %130 : f32 to vector<8x128xf32>
    %139 = arith.mulf %138, %9 : vector<8x128xf32>
    %140 = arith.addf %137, %139 : vector<8x128xf32>
    %141 = vector.broadcast %135 : f32 to vector<8x128xf32>
    %142 = arith.addf %140, %141 : vector<8x128xf32>
    %143 = arith.addf %41, %142 : vector<8x128xf32>
    %144 = arith.andi %55, %60 : vector<8x128xi1>
    %145 = vector.broadcast %cst_7 : f32 to vector<8x128xf32>
    %146 = arith.select %144, %143, %145 : vector<8x128xi1>, vector<8x128xf32>
    %147 = math.exp %146 : vector<8x128xf32>
    %148 = arith.addf %120, %147 : vector<8x128xf32>
    %c5_i32_43 = arith.constant 5 : i32
    %149 = arith.addi %18, %c5_i32_43 : i32
    %c9_i32 = arith.constant 9 : i32
    %150 = arith.addi %149, %c9_i32 : i32
    %c0_i32_44 = arith.constant 0 : i32
    %151 = arith.addi %150, %c0_i32_44 : i32
    %152 = arith.index_cast %151 : i32 to index
    %153 = memref.load %arg2[%152] : memref<160xf32, #tpu.memory_space<smem>>
    %c5_i32_45 = arith.constant 5 : i32
    %154 = arith.addi %18, %c5_i32_45 : i32
    %c9_i32_46 = arith.constant 9 : i32
    %155 = arith.addi %154, %c9_i32_46 : i32
    %c1_i32_47 = arith.constant 1 : i32
    %156 = arith.addi %155, %c1_i32_47 : i32
    %157 = arith.index_cast %156 : i32 to index
    %158 = memref.load %arg2[%157] : memref<160xf32, #tpu.memory_space<smem>>
    %c5_i32_48 = arith.constant 5 : i32
    %159 = arith.addi %18, %c5_i32_48 : i32
    %c9_i32_49 = arith.constant 9 : i32
    %160 = arith.addi %159, %c9_i32_49 : i32
    %c2_i32_50 = arith.constant 2 : i32
    %161 = arith.addi %160, %c2_i32_50 : i32
    %162 = arith.index_cast %161 : i32 to index
    %163 = memref.load %arg2[%162] : memref<160xf32, #tpu.memory_space<smem>>
    %164 = vector.broadcast %153 : f32 to vector<8x128xf32>
    %165 = arith.mulf %164, %5 : vector<8x128xf32>
    %166 = vector.broadcast %158 : f32 to vector<8x128xf32>
    %167 = arith.mulf %166, %9 : vector<8x128xf32>
    %168 = arith.addf %165, %167 : vector<8x128xf32>
    %169 = vector.broadcast %163 : f32 to vector<8x128xf32>
    %170 = arith.addf %168, %169 : vector<8x128xf32>
    %171 = arith.addf %41, %170 : vector<8x128xf32>
    %172 = arith.andi %55, %65 : vector<8x128xi1>
    %173 = vector.broadcast %cst_7 : f32 to vector<8x128xf32>
    %174 = arith.select %172, %171, %173 : vector<8x128xi1>, vector<8x128xf32>
    %175 = math.exp %174 : vector<8x128xf32>
    %176 = arith.addf %148, %175 : vector<8x128xf32>
    %c17_i32 = arith.constant 17 : i32
    %177 = arith.addi %18, %c17_i32 : i32
    %c0_i32_51 = arith.constant 0 : i32
    %178 = arith.addi %177, %c0_i32_51 : i32
    %179 = arith.index_cast %178 : i32 to index
    %180 = memref.load %arg2[%179] : memref<160xf32, #tpu.memory_space<smem>>
    %c0_52 = arith.constant 0 : index
    %c0_53 = arith.constant 0 : index
    %c0_54 = arith.constant 0 : index
    %181 = vector.load %arg5[%c0_52, %c0_53, %c0_54] : memref<3x8x128xf32, #tpu.memory_space<vmem>>, vector<1x8x128xf32>
    %182 = vector.shape_cast %181 : vector<1x8x128xf32> to vector<8x128xf32>
    %183 = vector.broadcast %180 : f32 to vector<8x128xf32>
    %184 = arith.mulf %183, %176 : vector<8x128xf32>
    %185 = arith.addf %182, %184 : vector<8x128xf32>
    %c0_55 = arith.constant 0 : index
    %c0_56 = arith.constant 0 : index
    %c0_57 = arith.constant 0 : index
    %186 = vector.load %arg5[%c0_55, %c0_56, %c0_57] : memref<3x8x128xf32, #tpu.memory_space<vmem>>, vector<1x8x128xf32>
    %187 = vector.shape_cast %186 : vector<1x8x128xf32> to vector<8x128xf32>
    %188 = vector.shape_cast %185 : vector<8x128xf32> to vector<1x8x128xf32>
    tpu.vector_store %arg5[%c0_55, %c0_56, %c0_57], %188 {strides = array<i32>} : memref<3x8x128xf32, #tpu.memory_space<vmem>>, vector<1x8x128xf32>,
    %c17_i32_58 = arith.constant 17 : i32
    %189 = arith.addi %18, %c17_i32_58 : i32
    %c1_i32_59 = arith.constant 1 : i32
    %190 = arith.addi %189, %c1_i32_59 : i32
    %191 = arith.index_cast %190 : i32 to index
    %192 = memref.load %arg2[%191] : memref<160xf32, #tpu.memory_space<smem>>
    %c1 = arith.constant 1 : index
    %c0_60 = arith.constant 0 : index
    %c0_61 = arith.constant 0 : index
    %193 = vector.load %arg5[%c1, %c0_60, %c0_61] : memref<3x8x128xf32, #tpu.memory_space<vmem>>, vector<1x8x128xf32>
    %194 = vector.shape_cast %193 : vector<1x8x128xf32> to vector<8x128xf32>
    %195 = vector.broadcast %192 : f32 to vector<8x128xf32>
    %196 = arith.mulf %195, %176 : vector<8x128xf32>
    %197 = arith.addf %194, %196 : vector<8x128xf32>
    %c1_62 = arith.constant 1 : index
    %c0_63 = arith.constant 0 : index
    %c0_64 = arith.constant 0 : index
    %198 = vector.load %arg5[%c1_62, %c0_63, %c0_64] : memref<3x8x128xf32, #tpu.memory_space<vmem>>, vector<1x8x128xf32>
    %199 = vector.shape_cast %198 : vector<1x8x128xf32> to vector<8x128xf32>
    %200 = vector.shape_cast %197 : vector<8x128xf32> to vector<1x8x128xf32>
    tpu.vector_store %arg5[%c1_62, %c0_63, %c0_64], %200 {strides = array<i32>} : memref<3x8x128xf32, #tpu.memory_space<vmem>>, vector<1x8x128xf32>,
    %c17_i32_65 = arith.constant 17 : i32
    %201 = arith.addi %18, %c17_i32_65 : i32
    %c2_i32_66 = arith.constant 2 : i32
    %202 = arith.addi %201, %c2_i32_66 : i32
    %203 = arith.index_cast %202 : i32 to index
    %204 = memref.load %arg2[%203] : memref<160xf32, #tpu.memory_space<smem>>
    %c2 = arith.constant 2 : index
    %c0_67 = arith.constant 0 : index
    %c0_68 = arith.constant 0 : index
    %205 = vector.load %arg5[%c2, %c0_67, %c0_68] : memref<3x8x128xf32, #tpu.memory_space<vmem>>, vector<1x8x128xf32>
    %206 = vector.shape_cast %205 : vector<1x8x128xf32> to vector<8x128xf32>
    %207 = vector.broadcast %204 : f32 to vector<8x128xf32>
    %208 = arith.mulf %207, %176 : vector<8x128xf32>
    %209 = arith.addf %206, %208 : vector<8x128xf32>
    %c2_69 = arith.constant 2 : index
    %c0_70 = arith.constant 0 : index
    %c0_71 = arith.constant 0 : index
    %210 = vector.load %arg5[%c2_69, %c0_70, %c0_71] : memref<3x8x128xf32, #tpu.memory_space<vmem>>, vector<1x8x128xf32>
    %211 = vector.shape_cast %210 : vector<1x8x128xf32> to vector<8x128xf32>
    %212 = vector.shape_cast %209 : vector<8x128xf32> to vector<1x8x128xf32>
    tpu.vector_store %arg5[%c2_69, %c0_70, %c0_71], %212 {strides = array<i32>} : memref<3x8x128xf32, #tpu.memory_space<vmem>>, vector<1x8x128xf32>,
    %c1_i32_72 = arith.constant 1 : i32
    %c8_i32_73 = arith.constant 8 : i32
    %213 = arith.muli %arg1, %c8_i32_73 : i32
    %214 = arith.addi %213, %c1_i32_72 : i32
    %c20_i32_74 = arith.constant 20 : i32
    %215 = arith.muli %214, %c20_i32_74 : i32
    %c0_i32_75 = arith.constant 0 : i32
    %216 = arith.addi %215, %c0_i32_75 : i32
    %217 = arith.index_cast %216 : i32 to index
    %218 = memref.load %arg2[%217] : memref<160xf32, #tpu.memory_space<smem>>
    %c1_i32_76 = arith.constant 1 : i32
    %219 = arith.addi %215, %c1_i32_76 : i32
    %220 = arith.index_cast %219 : i32 to index
    %221 = memref.load %arg2[%220] : memref<160xf32, #tpu.memory_space<smem>>
    %c2_i32_77 = arith.constant 2 : i32
    %222 = arith.addi %215, %c2_i32_77 : i32
    %223 = arith.index_cast %222 : i32 to index
    %224 = memref.load %arg2[%223] : memref<160xf32, #tpu.memory_space<smem>>
    %c3_i32_78 = arith.constant 3 : i32
    %225 = arith.addi %215, %c3_i32_78 : i32
    %226 = arith.index_cast %225 : i32 to index
    %227 = memref.load %arg2[%226] : memref<160xf32, #tpu.memory_space<smem>>
    %c4_i32_79 = arith.constant 4 : i32
    %228 = arith.addi %215, %c4_i32_79 : i32
    %229 = arith.index_cast %228 : i32 to index
    %230 = memref.load %arg2[%229] : memref<160xf32, #tpu.memory_space<smem>>
    %231 = vector.broadcast %218 : f32 to vector<8x128xf32>
    %232 = arith.mulf %231, %10 : vector<8x128xf32>
    %233 = vector.broadcast %221 : f32 to vector<8x128xf32>
    %234 = arith.mulf %233, %12 : vector<8x128xf32>
    %235 = arith.addf %232, %234 : vector<8x128xf32>
    %236 = vector.broadcast %224 : f32 to vector<8x128xf32>
    %237 = arith.mulf %236, %11 : vector<8x128xf32>
    %238 = arith.addf %235, %237 : vector<8x128xf32>
    %239 = vector.broadcast %227 : f32 to vector<8x128xf32>
    %240 = arith.addf %0, %239 : vector<8x128xf32>
    %241 = vector.broadcast %230 : f32 to vector<8x128xf32>
    %242 = arith.addf %1, %241 : vector<8x128xf32>
    %cst_80 = arith.constant 0.000000e+00 : f32
    %243 = vector.broadcast %cst_80 : f32 to vector<8x128xf32>
    %244 = arith.cmpf oge, %240, %243 : vector<8x128xf32>
    %cst_81 = arith.constant 3.100000e+01 : f32
    %245 = vector.broadcast %cst_81 : f32 to vector<8x128xf32>
    %246 = arith.cmpf ole, %240, %245 : vector<8x128xf32>
    %247 = arith.andi %244, %246 : vector<8x128xi1>
    %cst_82 = arith.constant -1.000000e+00 : f32
    %248 = vector.broadcast %cst_82 : f32 to vector<8x128xf32>
    %249 = arith.cmpf oge, %240, %248 : vector<8x128xf32>
    %cst_83 = arith.constant 3.000000e+01 : f32
    %250 = vector.broadcast %cst_83 : f32 to vector<8x128xf32>
    %251 = arith.cmpf ole, %240, %250 : vector<8x128xf32>
    %252 = arith.andi %249, %251 : vector<8x128xi1>
    %cst_84 = arith.constant 0.000000e+00 : f32
    %253 = vector.broadcast %cst_84 : f32 to vector<8x128xf32>
    %254 = arith.cmpf oge, %242, %253 : vector<8x128xf32>
    %cst_85 = arith.constant 3.100000e+01 : f32
    %255 = vector.broadcast %cst_85 : f32 to vector<8x128xf32>
    %256 = arith.cmpf ole, %242, %255 : vector<8x128xf32>
    %257 = arith.andi %254, %256 : vector<8x128xi1>
    %cst_86 = arith.constant -1.000000e+00 : f32
    %258 = vector.broadcast %cst_86 : f32 to vector<8x128xf32>
    %259 = arith.cmpf oge, %242, %258 : vector<8x128xf32>
    %cst_87 = arith.constant 3.000000e+01 : f32
    %260 = vector.broadcast %cst_87 : f32 to vector<8x128xf32>
    %261 = arith.cmpf ole, %242, %260 : vector<8x128xf32>
    %262 = arith.andi %259, %261 : vector<8x128xi1>
    %c5_i32_88 = arith.constant 5 : i32
    %263 = arith.addi %215, %c5_i32_88 : i32
    %c0_i32_89 = arith.constant 0 : i32
    %264 = arith.addi %263, %c0_i32_89 : i32
    %c0_i32_90 = arith.constant 0 : i32
    %265 = arith.addi %264, %c0_i32_90 : i32
    %266 = arith.index_cast %265 : i32 to index
    %267 = memref.load %arg2[%266] : memref<160xf32, #tpu.memory_space<smem>>
    %c5_i32_91 = arith.constant 5 : i32
    %268 = arith.addi %215, %c5_i32_91 : i32
    %c0_i32_92 = arith.constant 0 : i32
    %269 = arith.addi %268, %c0_i32_92 : i32
    %c1_i32_93 = arith.constant 1 : i32
    %270 = arith.addi %269, %c1_i32_93 : i32
    %271 = arith.index_cast %270 : i32 to index
    %272 = memref.load %arg2[%271] : memref<160xf32, #tpu.memory_space<smem>>
    %c5_i32_94 = arith.constant 5 : i32
    %273 = arith.addi %215, %c5_i32_94 : i32
    %c0_i32_95 = arith.constant 0 : i32
    %274 = arith.addi %273, %c0_i32_95 : i32
    %c2_i32_96 = arith.constant 2 : i32
    %275 = arith.addi %274, %c2_i32_96 : i32
    %276 = arith.index_cast %275 : i32 to index
    %277 = memref.load %arg2[%276] : memref<160xf32, #tpu.memory_space<smem>>
    %278 = vector.broadcast %267 : f32 to vector<8x128xf32>
    %279 = arith.mulf %278, %5 : vector<8x128xf32>
    %280 = vector.broadcast %272 : f32 to vector<8x128xf32>
    %281 = arith.mulf %280, %9 : vector<8x128xf32>
    %282 = arith.addf %279, %281 : vector<8x128xf32>
    %283 = vector.broadcast %277 : f32 to vector<8x128xf32>
    %284 = arith.addf %282, %283 : vector<8x128xf32>
    %285 = arith.addf %238, %284 : vector<8x128xf32>
    %286 = arith.andi %247, %257 : vector<8x128xi1>
    %287 = vector.broadcast %cst_7 : f32 to vector<8x128xf32>
    %288 = arith.select %286, %285, %287 : vector<8x128xi1>, vector<8x128xf32>
    %289 = math.exp %288 : vector<8x128xf32>
    %c5_i32_97 = arith.constant 5 : i32
    %290 = arith.addi %215, %c5_i32_97 : i32
    %c3_i32_98 = arith.constant 3 : i32
    %291 = arith.addi %290, %c3_i32_98 : i32
    %c0_i32_99 = arith.constant 0 : i32
    %292 = arith.addi %291, %c0_i32_99 : i32
    %293 = arith.index_cast %292 : i32 to index
    %294 = memref.load %arg2[%293] : memref<160xf32, #tpu.memory_space<smem>>
    %c5_i32_100 = arith.constant 5 : i32
    %295 = arith.addi %215, %c5_i32_100 : i32
    %c3_i32_101 = arith.constant 3 : i32
    %296 = arith.addi %295, %c3_i32_101 : i32
    %c1_i32_102 = arith.constant 1 : i32
    %297 = arith.addi %296, %c1_i32_102 : i32
    %298 = arith.index_cast %297 : i32 to index
    %299 = memref.load %arg2[%298] : memref<160xf32, #tpu.memory_space<smem>>
    %c5_i32_103 = arith.constant 5 : i32
    %300 = arith.addi %215, %c5_i32_103 : i32
    %c3_i32_104 = arith.constant 3 : i32
    %301 = arith.addi %300, %c3_i32_104 : i32
    %c2_i32_105 = arith.constant 2 : i32
    %302 = arith.addi %301, %c2_i32_105 : i32
    %303 = arith.index_cast %302 : i32 to index
    %304 = memref.load %arg2[%303] : memref<160xf32, #tpu.memory_space<smem>>
    %305 = vector.broadcast %294 : f32 to vector<8x128xf32>
    %306 = arith.mulf %305, %5 : vector<8x128xf32>
    %307 = vector.broadcast %299 : f32 to vector<8x128xf32>
    %308 = arith.mulf %307, %9 : vector<8x128xf32>
    %309 = arith.addf %306, %308 : vector<8x128xf32>
    %310 = vector.broadcast %304 : f32 to vector<8x128xf32>
    %311 = arith.addf %309, %310 : vector<8x128xf32>
    %312 = arith.addf %238, %311 : vector<8x128xf32>
    %313 = arith.andi %247, %262 : vector<8x128xi1>
    %314 = vector.broadcast %cst_7 : f32 to vector<8x128xf32>
    %315 = arith.select %313, %312, %314 : vector<8x128xi1>, vector<8x128xf32>
    %316 = math.exp %315 : vector<8x128xf32>
    %317 = arith.addf %289, %316 : vector<8x128xf32>
    %c5_i32_106 = arith.constant 5 : i32
    %318 = arith.addi %215, %c5_i32_106 : i32
    %c6_i32_107 = arith.constant 6 : i32
    %319 = arith.addi %318, %c6_i32_107 : i32
    %c0_i32_108 = arith.constant 0 : i32
    %320 = arith.addi %319, %c0_i32_108 : i32
    %321 = arith.index_cast %320 : i32 to index
    %322 = memref.load %arg2[%321] : memref<160xf32, #tpu.memory_space<smem>>
    %c5_i32_109 = arith.constant 5 : i32
    %323 = arith.addi %215, %c5_i32_109 : i32
    %c6_i32_110 = arith.constant 6 : i32
    %324 = arith.addi %323, %c6_i32_110 : i32
    %c1_i32_111 = arith.constant 1 : i32
    %325 = arith.addi %324, %c1_i32_111 : i32
    %326 = arith.index_cast %325 : i32 to index
    %327 = memref.load %arg2[%326] : memref<160xf32, #tpu.memory_space<smem>>
    %c5_i32_112 = arith.constant 5 : i32
    %328 = arith.addi %215, %c5_i32_112 : i32
    %c6_i32_113 = arith.constant 6 : i32
    %329 = arith.addi %328, %c6_i32_113 : i32
    %c2_i32_114 = arith.constant 2 : i32
    %330 = arith.addi %329, %c2_i32_114 : i32
    %331 = arith.index_cast %330 : i32 to index
    %332 = memref.load %arg2[%331] : memref<160xf32, #tpu.memory_space<smem>>
    %333 = vector.broadcast %322 : f32 to vector<8x128xf32>
    %334 = arith.mulf %333, %5 : vector<8x128xf32>
    %335 = vector.broadcast %327 : f32 to vector<8x128xf32>
    %336 = arith.mulf %335, %9 : vector<8x128xf32>
    %337 = arith.addf %334, %336 : vector<8x128xf32>
    %338 = vector.broadcast %332 : f32 to vector<8x128xf32>
    %339 = arith.addf %337, %338 : vector<8x128xf32>
    %340 = arith.addf %238, %339 : vector<8x128xf32>
    %341 = arith.andi %252, %257 : vector<8x128xi1>
    %342 = vector.broadcast %cst_7 : f32 to vector<8x128xf32>
    %343 = arith.select %341, %340, %342 : vector<8x128xi1>, vector<8x128xf32>
    %344 = math.exp %343 : vector<8x128xf32>
    %345 = arith.addf %317, %344 : vector<8x128xf32>
    %c5_i32_115 = arith.constant 5 : i32
    %346 = arith.addi %215, %c5_i32_115 : i32
    %c9_i32_116 = arith.constant 9 : i32
    %347 = arith.addi %346, %c9_i32_116 : i32
    %c0_i32_117 = arith.constant 0 : i32
    %348 = arith.addi %347, %c0_i32_117 : i32
    %349 = arith.index_cast %348 : i32 to index
    %350 = memref.load %arg2[%349] : memref<160xf32, #tpu.memory_space<smem>>
    %c5_i32_118 = arith.constant 5 : i32
    %351 = arith.addi %215, %c5_i32_118 : i32
    %c9_i32_119 = arith.constant 9 : i32
    %352 = arith.addi %351, %c9_i32_119 : i32
    %c1_i32_120 = arith.constant 1 : i32
    %353 = arith.addi %352, %c1_i32_120 : i32
    %354 = arith.index_cast %353 : i32 to index
    %355 = memref.load %arg2[%354] : memref<160xf32, #tpu.memory_space<smem>>
    %c5_i32_121 = arith.constant 5 : i32
    %356 = arith.addi %215, %c5_i32_121 : i32
    %c9_i32_122 = arith.constant 9 : i32
    %357 = arith.addi %356, %c9_i32_122 : i32
    %c2_i32_123 = arith.constant 2 : i32
    %358 = arith.addi %357, %c2_i32_123 : i32
    %359 = arith.index_cast %358 : i32 to index
    %360 = memref.load %arg2[%359] : memref<160xf32, #tpu.memory_space<smem>>
    %361 = vector.broadcast %350 : f32 to vector<8x128xf32>
    %362 = arith.mulf %361, %5 : vector<8x128xf32>
    %363 = vector.broadcast %355 : f32 to vector<8x128xf32>
    %364 = arith.mulf %363, %9 : vector<8x128xf32>
    %365 = arith.addf %362, %364 : vector<8x128xf32>
    %366 = vector.broadcast %360 : f32 to vector<8x128xf32>
    %367 = arith.addf %365, %366 : vector<8x128xf32>
    %368 = arith.addf %238, %367 : vector<8x128xf32>
    %369 = arith.andi %252, %262 : vector<8x128xi1>
    %370 = vector.broadcast %cst_7 : f32 to vector<8x128xf32>
    %371 = arith.select %369, %368, %370 : vector<8x128xi1>, vector<8x128xf32>
    %372 = math.exp %371 : vector<8x128xf32>
    %373 = arith.addf %345, %372 : vector<8x128xf32>
    %c17_i32_124 = arith.constant 17 : i32
    %374 = arith.addi %215, %c17_i32_124 : i32
    %c0_i32_125 = arith.constant 0 : i32
    %375 = arith.addi %374, %c0_i32_125 : i32
    %376 = arith.index_cast %375 : i32 to index
    %377 = memref.load %arg2[%376] : memref<160xf32, #tpu.memory_space<smem>>
    %c0_126 = arith.constant 0 : index
    %c0_127 = arith.constant 0 : index
    %c0_128 = arith.constant 0 : index
    %378 = vector.load %arg5[%c0_126, %c0_127, %c0_128] : memref<3x8x128xf32, #tpu.memory_space<vmem>>, vector<1x8x128xf32>
    %379 = vector.shape_cast %378 : vector<1x8x128xf32> to vector<8x128xf32>
    %380 = vector.broadcast %377 : f32 to vector<8x128xf32>
    %381 = arith.mulf %380, %373 : vector<8x128xf32>
    %382 = arith.addf %379, %381 : vector<8x128xf32>
    %c0_129 = arith.constant 0 : index
    %c0_130 = arith.constant 0 : index
    %c0_131 = arith.constant 0 : index
    %383 = vector.load %arg5[%c0_129, %c0_130, %c0_131] : memref<3x8x128xf32, #tpu.memory_space<vmem>>, vector<1x8x128xf32>
    %384 = vector.shape_cast %383 : vector<1x8x128xf32> to vector<8x128xf32>
    %385 = vector.shape_cast %382 : vector<8x128xf32> to vector<1x8x128xf32>
    tpu.vector_store %arg5[%c0_129, %c0_130, %c0_131], %385 {strides = array<i32>} : memref<3x8x128xf32, #tpu.memory_space<vmem>>, vector<1x8x128xf32>,
    %c17_i32_132 = arith.constant 17 : i32
    %386 = arith.addi %215, %c17_i32_132 : i32
    %c1_i32_133 = arith.constant 1 : i32
    %387 = arith.addi %386, %c1_i32_133 : i32
    %388 = arith.index_cast %387 : i32 to index
    %389 = memref.load %arg2[%388] : memref<160xf32, #tpu.memory_space<smem>>
    %c1_134 = arith.constant 1 : index
    %c0_135 = arith.constant 0 : index
    %c0_136 = arith.constant 0 : index
    %390 = vector.load %arg5[%c1_134, %c0_135, %c0_136] : memref<3x8x128xf32, #tpu.memory_space<vmem>>, vector<1x8x128xf32>
    %391 = vector.shape_cast %390 : vector<1x8x128xf32> to vector<8x128xf32>
    %392 = vector.broadcast %389 : f32 to vector<8x128xf32>
    %393 = arith.mulf %392, %373 : vector<8x128xf32>
    %394 = arith.addf %391, %393 : vector<8x128xf32>
    %c1_137 = arith.constant 1 : index
    %c0_138 = arith.constant 0 : index
    %c0_139 = arith.constant 0 : index
    %395 = vector.load %arg5[%c1_137, %c0_138, %c0_139] : memref<3x8x128xf32, #tpu.memory_space<vmem>>, vector<1x8x128xf32>
    %396 = vector.shape_cast %395 : vector<1x8x128xf32> to vector<8x128xf32>
    %397 = vector.shape_cast %394 : vector<8x128xf32> to vector<1x8x128xf32>
    tpu.vector_store %arg5[%c1_137, %c0_138, %c0_139], %397 {strides = array<i32>} : memref<3x8x128xf32, #tpu.memory_space<vmem>>, vector<1x8x128xf32>,
    %c17_i32_140 = arith.constant 17 : i32
    %398 = arith.addi %215, %c17_i32_140 : i32
    %c2_i32_141 = arith.constant 2 : i32
    %399 = arith.addi %398, %c2_i32_141 : i32
    %400 = arith.index_cast %399 : i32 to index
    %401 = memref.load %arg2[%400] : memref<160xf32, #tpu.memory_space<smem>>
    %c2_142 = arith.constant 2 : index
    %c0_143 = arith.constant 0 : index
    %c0_144 = arith.constant 0 : index
    %402 = vector.load %arg5[%c2_142, %c0_143, %c0_144] : memref<3x8x128xf32, #tpu.memory_space<vmem>>, vector<1x8x128xf32>
    %403 = vector.shape_cast %402 : vector<1x8x128xf32> to vector<8x128xf32>
    %404 = vector.broadcast %401 : f32 to vector<8x128xf32>
    %405 = arith.mulf %404, %373 : vector<8x128xf32>
    %406 = arith.addf %403, %405 : vector<8x128xf32>
    %c2_145 = arith.constant 2 : index
    %c0_146 = arith.constant 0 : index
    %c0_147 = arith.constant 0 : index
    %407 = vector.load %arg5[%c2_145, %c0_146, %c0_147] : memref<3x8x128xf32, #tpu.memory_space<vmem>>, vector<1x8x128xf32>
    %408 = vector.shape_cast %407 : vector<1x8x128xf32> to vector<8x128xf32>
    %409 = vector.shape_cast %406 : vector<8x128xf32> to vector<1x8x128xf32>
    tpu.vector_store %arg5[%c2_145, %c0_146, %c0_147], %409 {strides = array<i32>} : memref<3x8x128xf32, #tpu.memory_space<vmem>>, vector<1x8x128xf32>,
    %c2_i32_148 = arith.constant 2 : i32
    %c8_i32_149 = arith.constant 8 : i32
    %410 = arith.muli %arg1, %c8_i32_149 : i32
    %411 = arith.addi %410, %c2_i32_148 : i32
    %c20_i32_150 = arith.constant 20 : i32
    %412 = arith.muli %411, %c20_i32_150 : i32
    %c0_i32_151 = arith.constant 0 : i32
    %413 = arith.addi %412, %c0_i32_151 : i32
    %414 = arith.index_cast %413 : i32 to index
    %415 = memref.load %arg2[%414] : memref<160xf32, #tpu.memory_space<smem>>
    %c1_i32_152 = arith.constant 1 : i32
    %416 = arith.addi %412, %c1_i32_152 : i32
    %417 = arith.index_cast %416 : i32 to index
    %418 = memref.load %arg2[%417] : memref<160xf32, #tpu.memory_space<smem>>
    %c2_i32_153 = arith.constant 2 : i32
    %419 = arith.addi %412, %c2_i32_153 : i32
    %420 = arith.index_cast %419 : i32 to index
    %421 = memref.load %arg2[%420] : memref<160xf32, #tpu.memory_space<smem>>
    %c3_i32_154 = arith.constant 3 : i32
    %422 = arith.addi %412, %c3_i32_154 : i32
    %423 = arith.index_cast %422 : i32 to index
    %424 = memref.load %arg2[%423] : memref<160xf32, #tpu.memory_space<smem>>
    %c4_i32_155 = arith.constant 4 : i32
    %425 = arith.addi %412, %c4_i32_155 : i32
    %426 = arith.index_cast %425 : i32 to index
    %427 = memref.load %arg2[%426] : memref<160xf32, #tpu.memory_space<smem>>
    %428 = vector.broadcast %415 : f32 to vector<8x128xf32>
    %429 = arith.mulf %428, %10 : vector<8x128xf32>
    %430 = vector.broadcast %418 : f32 to vector<8x128xf32>
    %431 = arith.mulf %430, %12 : vector<8x128xf32>
    %432 = arith.addf %429, %431 : vector<8x128xf32>
    %433 = vector.broadcast %421 : f32 to vector<8x128xf32>
    %434 = arith.mulf %433, %11 : vector<8x128xf32>
    %435 = arith.addf %432, %434 : vector<8x128xf32>
    %436 = vector.broadcast %424 : f32 to vector<8x128xf32>
    %437 = arith.addf %0, %436 : vector<8x128xf32>
    %438 = vector.broadcast %427 : f32 to vector<8x128xf32>
    %439 = arith.addf %1, %438 : vector<8x128xf32>
    %cst_156 = arith.constant 0.000000e+00 : f32
    %440 = vector.broadcast %cst_156 : f32 to vector<8x128xf32>
    %441 = arith.cmpf oge, %437, %440 : vector<8x128xf32>
    %cst_157 = arith.constant 3.100000e+01 : f32
    %442 = vector.broadcast %cst_157 : f32 to vector<8x128xf32>
    %443 = arith.cmpf ole, %437, %442 : vector<8x128xf32>
    %444 = arith.andi %441, %443 : vector<8x128xi1>
    %cst_158 = arith.constant -1.000000e+00 : f32
    %445 = vector.broadcast %cst_158 : f32 to vector<8x128xf32>
    %446 = arith.cmpf oge, %437, %445 : vector<8x128xf32>
    %cst_159 = arith.constant 3.000000e+01 : f32
    %447 = vector.broadcast %cst_159 : f32 to vector<8x128xf32>
    %448 = arith.cmpf ole, %437, %447 : vector<8x128xf32>
    %449 = arith.andi %446, %448 : vector<8x128xi1>
    %cst_160 = arith.constant 0.000000e+00 : f32
    %450 = vector.broadcast %cst_160 : f32 to vector<8x128xf32>
    %451 = arith.cmpf oge, %439, %450 : vector<8x128xf32>
    %cst_161 = arith.constant 3.100000e+01 : f32
    %452 = vector.broadcast %cst_161 : f32 to vector<8x128xf32>
    %453 = arith.cmpf ole, %439, %452 : vector<8x128xf32>
    %454 = arith.andi %451, %453 : vector<8x128xi1>
    %cst_162 = arith.constant -1.000000e+00 : f32
    %455 = vector.broadcast %cst_162 : f32 to vector<8x128xf32>
    %456 = arith.cmpf oge, %439, %455 : vector<8x128xf32>
    %cst_163 = arith.constant 3.000000e+01 : f32
    %457 = vector.broadcast %cst_163 : f32 to vector<8x128xf32>
    %458 = arith.cmpf ole, %439, %457 : vector<8x128xf32>
    %459 = arith.andi %456, %458 : vector<8x128xi1>
    %c5_i32_164 = arith.constant 5 : i32
    %460 = arith.addi %412, %c5_i32_164 : i32
    %c0_i32_165 = arith.constant 0 : i32
    %461 = arith.addi %460, %c0_i32_165 : i32
    %c0_i32_166 = arith.constant 0 : i32
    %462 = arith.addi %461, %c0_i32_166 : i32
    %463 = arith.index_cast %462 : i32 to index
    %464 = memref.load %arg2[%463] : memref<160xf32, #tpu.memory_space<smem>>
    %c5_i32_167 = arith.constant 5 : i32
    %465 = arith.addi %412, %c5_i32_167 : i32
    %c0_i32_168 = arith.constant 0 : i32
    %466 = arith.addi %465, %c0_i32_168 : i32
    %c1_i32_169 = arith.constant 1 : i32
    %467 = arith.addi %466, %c1_i32_169 : i32
    %468 = arith.index_cast %467 : i32 to index
    %469 = memref.load %arg2[%468] : memref<160xf32, #tpu.memory_space<smem>>
    %c5_i32_170 = arith.constant 5 : i32
    %470 = arith.addi %412, %c5_i32_170 : i32
    %c0_i32_171 = arith.constant 0 : i32
    %471 = arith.addi %470, %c0_i32_171 : i32
    %c2_i32_172 = arith.constant 2 : i32
    %472 = arith.addi %471, %c2_i32_172 : i32
    %473 = arith.index_cast %472 : i32 to index
    %474 = memref.load %arg2[%473] : memref<160xf32, #tpu.memory_space<smem>>
    %475 = vector.broadcast %464 : f32 to vector<8x128xf32>
    %476 = arith.mulf %475, %5 : vector<8x128xf32>
    %477 = vector.broadcast %469 : f32 to vector<8x128xf32>
    %478 = arith.mulf %477, %9 : vector<8x128xf32>
    %479 = arith.addf %476, %478 : vector<8x128xf32>
    %480 = vector.broadcast %474 : f32 to vector<8x128xf32>
    %481 = arith.addf %479, %480 : vector<8x128xf32>
    %482 = arith.addf %435, %481 : vector<8x128xf32>
    %483 = arith.andi %444, %454 : vector<8x128xi1>
    %484 = vector.broadcast %cst_7 : f32 to vector<8x128xf32>
    %485 = arith.select %483, %482, %484 : vector<8x128xi1>, vector<8x128xf32>
    %486 = math.exp %485 : vector<8x128xf32>
    %c5_i32_173 = arith.constant 5 : i32
    %487 = arith.addi %412, %c5_i32_173 : i32
    %c3_i32_174 = arith.constant 3 : i32
    %488 = arith.addi %487, %c3_i32_174 : i32
    %c0_i32_175 = arith.constant 0 : i32
    %489 = arith.addi %488, %c0_i32_175 : i32
    %490 = arith.index_cast %489 : i32 to index
    %491 = memref.load %arg2[%490] : memref<160xf32, #tpu.memory_space<smem>>
    %c5_i32_176 = arith.constant 5 : i32
    %492 = arith.addi %412, %c5_i32_176 : i32
    %c3_i32_177 = arith.constant 3 : i32
    %493 = arith.addi %492, %c3_i32_177 : i32
    %c1_i32_178 = arith.constant 1 : i32
    %494 = arith.addi %493, %c1_i32_178 : i32
    %495 = arith.index_cast %494 : i32 to index
    %496 = memref.load %arg2[%495] : memref<160xf32, #tpu.memory_space<smem>>
    %c5_i32_179 = arith.constant 5 : i32
    %497 = arith.addi %412, %c5_i32_179 : i32
    %c3_i32_180 = arith.constant 3 : i32
    %498 = arith.addi %497, %c3_i32_180 : i32
    %c2_i32_181 = arith.constant 2 : i32
    %499 = arith.addi %498, %c2_i32_181 : i32
    %500 = arith.index_cast %499 : i32 to index
    %501 = memref.load %arg2[%500] : memref<160xf32, #tpu.memory_space<smem>>
    %502 = vector.broadcast %491 : f32 to vector<8x128xf32>
    %503 = arith.mulf %502, %5 : vector<8x128xf32>
    %504 = vector.broadcast %496 : f32 to vector<8x128xf32>
    %505 = arith.mulf %504, %9 : vector<8x128xf32>
    %506 = arith.addf %503, %505 : vector<8x128xf32>
    %507 = vector.broadcast %501 : f32 to vector<8x128xf32>
    %508 = arith.addf %506, %507 : vector<8x128xf32>
    %509 = arith.addf %435, %508 : vector<8x128xf32>
    %510 = arith.andi %444, %459 : vector<8x128xi1>
    %511 = vector.broadcast %cst_7 : f32 to vector<8x128xf32>
    %512 = arith.select %510, %509, %511 : vector<8x128xi1>, vector<8x128xf32>
    %513 = math.exp %512 : vector<8x128xf32>
    %514 = arith.addf %486, %513 : vector<8x128xf32>
    %c5_i32_182 = arith.constant 5 : i32
    %515 = arith.addi %412, %c5_i32_182 : i32
    %c6_i32_183 = arith.constant 6 : i32
    %516 = arith.addi %515, %c6_i32_183 : i32
    %c0_i32_184 = arith.constant 0 : i32
    %517 = arith.addi %516, %c0_i32_184 : i32
    %518 = arith.index_cast %517 : i32 to index
    %519 = memref.load %arg2[%518] : memref<160xf32, #tpu.memory_space<smem>>
    %c5_i32_185 = arith.constant 5 : i32
    %520 = arith.addi %412, %c5_i32_185 : i32
    %c6_i32_186 = arith.constant 6 : i32
    %521 = arith.addi %520, %c6_i32_186 : i32
    %c1_i32_187 = arith.constant 1 : i32
    %522 = arith.addi %521, %c1_i32_187 : i32
    %523 = arith.index_cast %522 : i32 to index
    %524 = memref.load %arg2[%523] : memref<160xf32, #tpu.memory_space<smem>>
    %c5_i32_188 = arith.constant 5 : i32
    %525 = arith.addi %412, %c5_i32_188 : i32
    %c6_i32_189 = arith.constant 6 : i32
    %526 = arith.addi %525, %c6_i32_189 : i32
    %c2_i32_190 = arith.constant 2 : i32
    %527 = arith.addi %526, %c2_i32_190 : i32
    %528 = arith.index_cast %527 : i32 to index
    %529 = memref.load %arg2[%528] : memref<160xf32, #tpu.memory_space<smem>>
    %530 = vector.broadcast %519 : f32 to vector<8x128xf32>
    %531 = arith.mulf %530, %5 : vector<8x128xf32>
    %532 = vector.broadcast %524 : f32 to vector<8x128xf32>
    %533 = arith.mulf %532, %9 : vector<8x128xf32>
    %534 = arith.addf %531, %533 : vector<8x128xf32>
    %535 = vector.broadcast %529 : f32 to vector<8x128xf32>
    %536 = arith.addf %534, %535 : vector<8x128xf32>
    %537 = arith.addf %435, %536 : vector<8x128xf32>
    %538 = arith.andi %449, %454 : vector<8x128xi1>
    %539 = vector.broadcast %cst_7 : f32 to vector<8x128xf32>
    %540 = arith.select %538, %537, %539 : vector<8x128xi1>, vector<8x128xf32>
    %541 = math.exp %540 : vector<8x128xf32>
    %542 = arith.addf %514, %541 : vector<8x128xf32>
    %c5_i32_191 = arith.constant 5 : i32
    %543 = arith.addi %412, %c5_i32_191 : i32
    %c9_i32_192 = arith.constant 9 : i32
    %544 = arith.addi %543, %c9_i32_192 : i32
    %c0_i32_193 = arith.constant 0 : i32
    %545 = arith.addi %544, %c0_i32_193 : i32
    %546 = arith.index_cast %545 : i32 to index
    %547 = memref.load %arg2[%546] : memref<160xf32, #tpu.memory_space<smem>>
    %c5_i32_194 = arith.constant 5 : i32
    %548 = arith.addi %412, %c5_i32_194 : i32
    %c9_i32_195 = arith.constant 9 : i32
    %549 = arith.addi %548, %c9_i32_195 : i32
    %c1_i32_196 = arith.constant 1 : i32
    %550 = arith.addi %549, %c1_i32_196 : i32
    %551 = arith.index_cast %550 : i32 to index
    %552 = memref.load %arg2[%551] : memref<160xf32, #tpu.memory_space<smem>>
    %c5_i32_197 = arith.constant 5 : i32
    %553 = arith.addi %412, %c5_i32_197 : i32
    %c9_i32_198 = arith.constant 9 : i32
    %554 = arith.addi %553, %c9_i32_198 : i32
    %c2_i32_199 = arith.constant 2 : i32
    %555 = arith.addi %554, %c2_i32_199 : i32
    %556 = arith.index_cast %555 : i32 to index
    %557 = memref.load %arg2[%556] : memref<160xf32, #tpu.memory_space<smem>>
    %558 = vector.broadcast %547 : f32 to vector<8x128xf32>
    %559 = arith.mulf %558, %5 : vector<8x128xf32>
    %560 = vector.broadcast %552 : f32 to vector<8x128xf32>
    %561 = arith.mulf %560, %9 : vector<8x128xf32>
    %562 = arith.addf %559, %561 : vector<8x128xf32>
    %563 = vector.broadcast %557 : f32 to vector<8x128xf32>
    %564 = arith.addf %562, %563 : vector<8x128xf32>
    %565 = arith.addf %435, %564 : vector<8x128xf32>
    %566 = arith.andi %449, %459 : vector<8x128xi1>
    %567 = vector.broadcast %cst_7 : f32 to vector<8x128xf32>
    %568 = arith.select %566, %565, %567 : vector<8x128xi1>, vector<8x128xf32>
    %569 = math.exp %568 : vector<8x128xf32>
    %570 = arith.addf %542, %569 : vector<8x128xf32>
    %c17_i32_200 = arith.constant 17 : i32
    %571 = arith.addi %412, %c17_i32_200 : i32
    %c0_i32_201 = arith.constant 0 : i32
    %572 = arith.addi %571, %c0_i32_201 : i32
    %573 = arith.index_cast %572 : i32 to index
    %574 = memref.load %arg2[%573] : memref<160xf32, #tpu.memory_space<smem>>
    %c0_202 = arith.constant 0 : index
    %c0_203 = arith.constant 0 : index
    %c0_204 = arith.constant 0 : index
    %575 = vector.load %arg5[%c0_202, %c0_203, %c0_204] : memref<3x8x128xf32, #tpu.memory_space<vmem>>, vector<1x8x128xf32>
    %576 = vector.shape_cast %575 : vector<1x8x128xf32> to vector<8x128xf32>
    %577 = vector.broadcast %574 : f32 to vector<8x128xf32>
    %578 = arith.mulf %577, %570 : vector<8x128xf32>
    %579 = arith.addf %576, %578 : vector<8x128xf32>
    %c0_205 = arith.constant 0 : index
    %c0_206 = arith.constant 0 : index
    %c0_207 = arith.constant 0 : index
    %580 = vector.load %arg5[%c0_205, %c0_206, %c0_207] : memref<3x8x128xf32, #tpu.memory_space<vmem>>, vector<1x8x128xf32>
    %581 = vector.shape_cast %580 : vector<1x8x128xf32> to vector<8x128xf32>
    %582 = vector.shape_cast %579 : vector<8x128xf32> to vector<1x8x128xf32>
    tpu.vector_store %arg5[%c0_205, %c0_206, %c0_207], %582 {strides = array<i32>} : memref<3x8x128xf32, #tpu.memory_space<vmem>>, vector<1x8x128xf32>,
    %c17_i32_208 = arith.constant 17 : i32
    %583 = arith.addi %412, %c17_i32_208 : i32
    %c1_i32_209 = arith.constant 1 : i32
    %584 = arith.addi %583, %c1_i32_209 : i32
    %585 = arith.index_cast %584 : i32 to index
    %586 = memref.load %arg2[%585] : memref<160xf32, #tpu.memory_space<smem>>
    %c1_210 = arith.constant 1 : index
    %c0_211 = arith.constant 0 : index
    %c0_212 = arith.constant 0 : index
    %587 = vector.load %arg5[%c1_210, %c0_211, %c0_212] : memref<3x8x128xf32, #tpu.memory_space<vmem>>, vector<1x8x128xf32>
    %588 = vector.shape_cast %587 : vector<1x8x128xf32> to vector<8x128xf32>
    %589 = vector.broadcast %586 : f32 to vector<8x128xf32>
    %590 = arith.mulf %589, %570 : vector<8x128xf32>
    %591 = arith.addf %588, %590 : vector<8x128xf32>
    %c1_213 = arith.constant 1 : index
    %c0_214 = arith.constant 0 : index
    %c0_215 = arith.constant 0 : index
    %592 = vector.load %arg5[%c1_213, %c0_214, %c0_215] : memref<3x8x128xf32, #tpu.memory_space<vmem>>, vector<1x8x128xf32>
    %593 = vector.shape_cast %592 : vector<1x8x128xf32> to vector<8x128xf32>
    %594 = vector.shape_cast %591 : vector<8x128xf32> to vector<1x8x128xf32>
    tpu.vector_store %arg5[%c1_213, %c0_214, %c0_215], %594 {strides = array<i32>} : memref<3x8x128xf32, #tpu.memory_space<vmem>>, vector<1x8x128xf32>,
    %c17_i32_216 = arith.constant 17 : i32
    %595 = arith.addi %412, %c17_i32_216 : i32
    %c2_i32_217 = arith.constant 2 : i32
    %596 = arith.addi %595, %c2_i32_217 : i32
    %597 = arith.index_cast %596 : i32 to index
    %598 = memref.load %arg2[%597] : memref<160xf32, #tpu.memory_space<smem>>
    %c2_218 = arith.constant 2 : index
    %c0_219 = arith.constant 0 : index
    %c0_220 = arith.constant 0 : index
    %599 = vector.load %arg5[%c2_218, %c0_219, %c0_220] : memref<3x8x128xf32, #tpu.memory_space<vmem>>, vector<1x8x128xf32>
    %600 = vector.shape_cast %599 : vector<1x8x128xf32> to vector<8x128xf32>
    %601 = vector.broadcast %598 : f32 to vector<8x128xf32>
    %602 = arith.mulf %601, %570 : vector<8x128xf32>
    %603 = arith.addf %600, %602 : vector<8x128xf32>
    %c2_221 = arith.constant 2 : index
    %c0_222 = arith.constant 0 : index
    %c0_223 = arith.constant 0 : index
    %604 = vector.load %arg5[%c2_221, %c0_222, %c0_223] : memref<3x8x128xf32, #tpu.memory_space<vmem>>, vector<1x8x128xf32>
    %605 = vector.shape_cast %604 : vector<1x8x128xf32> to vector<8x128xf32>
    %606 = vector.shape_cast %603 : vector<8x128xf32> to vector<1x8x128xf32>
    tpu.vector_store %arg5[%c2_221, %c0_222, %c0_223], %606 {strides = array<i32>} : memref<3x8x128xf32, #tpu.memory_space<vmem>>, vector<1x8x128xf32>,
    %c3_i32_224 = arith.constant 3 : i32
    %c8_i32_225 = arith.constant 8 : i32
    %607 = arith.muli %arg1, %c8_i32_225 : i32
    %608 = arith.addi %607, %c3_i32_224 : i32
    %c20_i32_226 = arith.constant 20 : i32
    %609 = arith.muli %608, %c20_i32_226 : i32
    %c0_i32_227 = arith.constant 0 : i32
    %610 = arith.addi %609, %c0_i32_227 : i32
    %611 = arith.index_cast %610 : i32 to index
    %612 = memref.load %arg2[%611] : memref<160xf32, #tpu.memory_space<smem>>
    %c1_i32_228 = arith.constant 1 : i32
    %613 = arith.addi %609, %c1_i32_228 : i32
    %614 = arith.index_cast %613 : i32 to index
    %615 = memref.load %arg2[%614] : memref<160xf32, #tpu.memory_space<smem>>
    %c2_i32_229 = arith.constant 2 : i32
    %616 = arith.addi %609, %c2_i32_229 : i32
    %617 = arith.index_cast %616 : i32 to index
    %618 = memref.load %arg2[%617] : memref<160xf32, #tpu.memory_space<smem>>
    %c3_i32_230 = arith.constant 3 : i32
    %619 = arith.addi %609, %c3_i32_230 : i32
    %620 = arith.index_cast %619 : i32 to index
    %621 = memref.load %arg2[%620] : memref<160xf32, #tpu.memory_space<smem>>
    %c4_i32_231 = arith.constant 4 : i32
    %622 = arith.addi %609, %c4_i32_231 : i32
    %623 = arith.index_cast %622 : i32 to index
    %624 = memref.load %arg2[%623] : memref<160xf32, #tpu.memory_space<smem>>
    %625 = vector.broadcast %612 : f32 to vector<8x128xf32>
    %626 = arith.mulf %625, %10 : vector<8x128xf32>
    %627 = vector.broadcast %615 : f32 to vector<8x128xf32>
    %628 = arith.mulf %627, %12 : vector<8x128xf32>
    %629 = arith.addf %626, %628 : vector<8x128xf32>
    %630 = vector.broadcast %618 : f32 to vector<8x128xf32>
    %631 = arith.mulf %630, %11 : vector<8x128xf32>
    %632 = arith.addf %629, %631 : vector<8x128xf32>
    %633 = vector.broadcast %621 : f32 to vector<8x128xf32>
    %634 = arith.addf %0, %633 : vector<8x128xf32>
    %635 = vector.broadcast %624 : f32 to vector<8x128xf32>
    %636 = arith.addf %1, %635 : vector<8x128xf32>
    %cst_232 = arith.constant 0.000000e+00 : f32
    %637 = vector.broadcast %cst_232 : f32 to vector<8x128xf32>
    %638 = arith.cmpf oge, %634, %637 : vector<8x128xf32>
    %cst_233 = arith.constant 3.100000e+01 : f32
    %639 = vector.broadcast %cst_233 : f32 to vector<8x128xf32>
    %640 = arith.cmpf ole, %634, %639 : vector<8x128xf32>
    %641 = arith.andi %638, %640 : vector<8x128xi1>
    %cst_234 = arith.constant -1.000000e+00 : f32
    %642 = vector.broadcast %cst_234 : f32 to vector<8x128xf32>
    %643 = arith.cmpf oge, %634, %642 : vector<8x128xf32>
    %cst_235 = arith.constant 3.000000e+01 : f32
    %644 = vector.broadcast %cst_235 : f32 to vector<8x128xf32>
    %645 = arith.cmpf ole, %634, %644 : vector<8x128xf32>
    %646 = arith.andi %643, %645 : vector<8x128xi1>
    %cst_236 = arith.constant 0.000000e+00 : f32
    %647 = vector.broadcast %cst_236 : f32 to vector<8x128xf32>
    %648 = arith.cmpf oge, %636, %647 : vector<8x128xf32>
    %cst_237 = arith.constant 3.100000e+01 : f32
    %649 = vector.broadcast %cst_237 : f32 to vector<8x128xf32>
    %650 = arith.cmpf ole, %636, %649 : vector<8x128xf32>
    %651 = arith.andi %648, %650 : vector<8x128xi1>
    %cst_238 = arith.constant -1.000000e+00 : f32
    %652 = vector.broadcast %cst_238 : f32 to vector<8x128xf32>
    %653 = arith.cmpf oge, %636, %652 : vector<8x128xf32>
    %cst_239 = arith.constant 3.000000e+01 : f32
    %654 = vector.broadcast %cst_239 : f32 to vector<8x128xf32>
    %655 = arith.cmpf ole, %636, %654 : vector<8x128xf32>
    %656 = arith.andi %653, %655 : vector<8x128xi1>
    %c5_i32_240 = arith.constant 5 : i32
    %657 = arith.addi %609, %c5_i32_240 : i32
    %c0_i32_241 = arith.constant 0 : i32
    %658 = arith.addi %657, %c0_i32_241 : i32
    %c0_i32_242 = arith.constant 0 : i32
    %659 = arith.addi %658, %c0_i32_242 : i32
    %660 = arith.index_cast %659 : i32 to index
    %661 = memref.load %arg2[%660] : memref<160xf32, #tpu.memory_space<smem>>
    %c5_i32_243 = arith.constant 5 : i32
    %662 = arith.addi %609, %c5_i32_243 : i32
    %c0_i32_244 = arith.constant 0 : i32
    %663 = arith.addi %662, %c0_i32_244 : i32
    %c1_i32_245 = arith.constant 1 : i32
    %664 = arith.addi %663, %c1_i32_245 : i32
    %665 = arith.index_cast %664 : i32 to index
    %666 = memref.load %arg2[%665] : memref<160xf32, #tpu.memory_space<smem>>
    %c5_i32_246 = arith.constant 5 : i32
    %667 = arith.addi %609, %c5_i32_246 : i32
    %c0_i32_247 = arith.constant 0 : i32
    %668 = arith.addi %667, %c0_i32_247 : i32
    %c2_i32_248 = arith.constant 2 : i32
    %669 = arith.addi %668, %c2_i32_248 : i32
    %670 = arith.index_cast %669 : i32 to index
    %671 = memref.load %arg2[%670] : memref<160xf32, #tpu.memory_space<smem>>
    %672 = vector.broadcast %661 : f32 to vector<8x128xf32>
    %673 = arith.mulf %672, %5 : vector<8x128xf32>
    %674 = vector.broadcast %666 : f32 to vector<8x128xf32>
    %675 = arith.mulf %674, %9 : vector<8x128xf32>
    %676 = arith.addf %673, %675 : vector<8x128xf32>
    %677 = vector.broadcast %671 : f32 to vector<8x128xf32>
    %678 = arith.addf %676, %677 : vector<8x128xf32>
    %679 = arith.addf %632, %678 : vector<8x128xf32>
    %680 = arith.andi %641, %651 : vector<8x128xi1>
    %681 = vector.broadcast %cst_7 : f32 to vector<8x128xf32>
    %682 = arith.select %680, %679, %681 : vector<8x128xi1>, vector<8x128xf32>
    %683 = math.exp %682 : vector<8x128xf32>
    %c5_i32_249 = arith.constant 5 : i32
    %684 = arith.addi %609, %c5_i32_249 : i32
    %c3_i32_250 = arith.constant 3 : i32
    %685 = arith.addi %684, %c3_i32_250 : i32
    %c0_i32_251 = arith.constant 0 : i32
    %686 = arith.addi %685, %c0_i32_251 : i32
    %687 = arith.index_cast %686 : i32 to index
    %688 = memref.load %arg2[%687] : memref<160xf32, #tpu.memory_space<smem>>
    %c5_i32_252 = arith.constant 5 : i32
    %689 = arith.addi %609, %c5_i32_252 : i32
    %c3_i32_253 = arith.constant 3 : i32
    %690 = arith.addi %689, %c3_i32_253 : i32
    %c1_i32_254 = arith.constant 1 : i32
    %691 = arith.addi %690, %c1_i32_254 : i32
    %692 = arith.index_cast %691 : i32 to index
    %693 = memref.load %arg2[%692] : memref<160xf32, #tpu.memory_space<smem>>
    %c5_i32_255 = arith.constant 5 : i32
    %694 = arith.addi %609, %c5_i32_255 : i32
    %c3_i32_256 = arith.constant 3 : i32
    %695 = arith.addi %694, %c3_i32_256 : i32
    %c2_i32_257 = arith.constant 2 : i32
    %696 = arith.addi %695, %c2_i32_257 : i32
    %697 = arith.index_cast %696 : i32 to index
    %698 = memref.load %arg2[%697] : memref<160xf32, #tpu.memory_space<smem>>
    %699 = vector.broadcast %688 : f32 to vector<8x128xf32>
    %700 = arith.mulf %699, %5 : vector<8x128xf32>
    %701 = vector.broadcast %693 : f32 to vector<8x128xf32>
    %702 = arith.mulf %701, %9 : vector<8x128xf32>
    %703 = arith.addf %700, %702 : vector<8x128xf32>
    %704 = vector.broadcast %698 : f32 to vector<8x128xf32>
    %705 = arith.addf %703, %704 : vector<8x128xf32>
    %706 = arith.addf %632, %705 : vector<8x128xf32>
    %707 = arith.andi %641, %656 : vector<8x128xi1>
    %708 = vector.broadcast %cst_7 : f32 to vector<8x128xf32>
    %709 = arith.select %707, %706, %708 : vector<8x128xi1>, vector<8x128xf32>
    %710 = math.exp %709 : vector<8x128xf32>
    %711 = arith.addf %683, %710 : vector<8x128xf32>
    %c5_i32_258 = arith.constant 5 : i32
    %712 = arith.addi %609, %c5_i32_258 : i32
    %c6_i32_259 = arith.constant 6 : i32
    %713 = arith.addi %712, %c6_i32_259 : i32
    %c0_i32_260 = arith.constant 0 : i32
    %714 = arith.addi %713, %c0_i32_260 : i32
    %715 = arith.index_cast %714 : i32 to index
    %716 = memref.load %arg2[%715] : memref<160xf32, #tpu.memory_space<smem>>
    %c5_i32_261 = arith.constant 5 : i32
    %717 = arith.addi %609, %c5_i32_261 : i32
    %c6_i32_262 = arith.constant 6 : i32
    %718 = arith.addi %717, %c6_i32_262 : i32
    %c1_i32_263 = arith.constant 1 : i32
    %719 = arith.addi %718, %c1_i32_263 : i32
    %720 = arith.index_cast %719 : i32 to index
    %721 = memref.load %arg2[%720] : memref<160xf32, #tpu.memory_space<smem>>
    %c5_i32_264 = arith.constant 5 : i32
    %722 = arith.addi %609, %c5_i32_264 : i32
    %c6_i32_265 = arith.constant 6 : i32
    %723 = arith.addi %722, %c6_i32_265 : i32
    %c2_i32_266 = arith.constant 2 : i32
    %724 = arith.addi %723, %c2_i32_266 : i32
    %725 = arith.index_cast %724 : i32 to index
    %726 = memref.load %arg2[%725] : memref<160xf32, #tpu.memory_space<smem>>
    %727 = vector.broadcast %716 : f32 to vector<8x128xf32>
    %728 = arith.mulf %727, %5 : vector<8x128xf32>
    %729 = vector.broadcast %721 : f32 to vector<8x128xf32>
    %730 = arith.mulf %729, %9 : vector<8x128xf32>
    %731 = arith.addf %728, %730 : vector<8x128xf32>
    %732 = vector.broadcast %726 : f32 to vector<8x128xf32>
    %733 = arith.addf %731, %732 : vector<8x128xf32>
    %734 = arith.addf %632, %733 : vector<8x128xf32>
    %735 = arith.andi %646, %651 : vector<8x128xi1>
    %736 = vector.broadcast %cst_7 : f32 to vector<8x128xf32>
    %737 = arith.select %735, %734, %736 : vector<8x128xi1>, vector<8x128xf32>
    %738 = math.exp %737 : vector<8x128xf32>
    %739 = arith.addf %711, %738 : vector<8x128xf32>
    %c5_i32_267 = arith.constant 5 : i32
    %740 = arith.addi %609, %c5_i32_267 : i32
    %c9_i32_268 = arith.constant 9 : i32
    %741 = arith.addi %740, %c9_i32_268 : i32
    %c0_i32_269 = arith.constant 0 : i32
    %742 = arith.addi %741, %c0_i32_269 : i32
    %743 = arith.index_cast %742 : i32 to index
    %744 = memref.load %arg2[%743] : memref<160xf32, #tpu.memory_space<smem>>
    %c5_i32_270 = arith.constant 5 : i32
    %745 = arith.addi %609, %c5_i32_270 : i32
    %c9_i32_271 = arith.constant 9 : i32
    %746 = arith.addi %745, %c9_i32_271 : i32
    %c1_i32_272 = arith.constant 1 : i32
    %747 = arith.addi %746, %c1_i32_272 : i32
    %748 = arith.index_cast %747 : i32 to index
    %749 = memref.load %arg2[%748] : memref<160xf32, #tpu.memory_space<smem>>
    %c5_i32_273 = arith.constant 5 : i32
    %750 = arith.addi %609, %c5_i32_273 : i32
    %c9_i32_274 = arith.constant 9 : i32
    %751 = arith.addi %750, %c9_i32_274 : i32
    %c2_i32_275 = arith.constant 2 : i32
    %752 = arith.addi %751, %c2_i32_275 : i32
    %753 = arith.index_cast %752 : i32 to index
    %754 = memref.load %arg2[%753] : memref<160xf32, #tpu.memory_space<smem>>
    %755 = vector.broadcast %744 : f32 to vector<8x128xf32>
    %756 = arith.mulf %755, %5 : vector<8x128xf32>
    %757 = vector.broadcast %749 : f32 to vector<8x128xf32>
    %758 = arith.mulf %757, %9 : vector<8x128xf32>
    %759 = arith.addf %756, %758 : vector<8x128xf32>
    %760 = vector.broadcast %754 : f32 to vector<8x128xf32>
    %761 = arith.addf %759, %760 : vector<8x128xf32>
    %762 = arith.addf %632, %761 : vector<8x128xf32>
    %763 = arith.andi %646, %656 : vector<8x128xi1>
    %764 = vector.broadcast %cst_7 : f32 to vector<8x128xf32>
    %765 = arith.select %763, %762, %764 : vector<8x128xi1>, vector<8x128xf32>
    %766 = math.exp %765 : vector<8x128xf32>
    %767 = arith.addf %739, %766 : vector<8x128xf32>
    %c17_i32_276 = arith.constant 17 : i32
    %768 = arith.addi %609, %c17_i32_276 : i32
    %c0_i32_277 = arith.constant 0 : i32
    %769 = arith.addi %768, %c0_i32_277 : i32
    %770 = arith.index_cast %769 : i32 to index
    %771 = memref.load %arg2[%770] : memref<160xf32, #tpu.memory_space<smem>>
    %c0_278 = arith.constant 0 : index
    %c0_279 = arith.constant 0 : index
    %c0_280 = arith.constant 0 : index
    %772 = vector.load %arg5[%c0_278, %c0_279, %c0_280] : memref<3x8x128xf32, #tpu.memory_space<vmem>>, vector<1x8x128xf32>
    %773 = vector.shape_cast %772 : vector<1x8x128xf32> to vector<8x128xf32>
    %774 = vector.broadcast %771 : f32 to vector<8x128xf32>
    %775 = arith.mulf %774, %767 : vector<8x128xf32>
    %776 = arith.addf %773, %775 : vector<8x128xf32>
    %c0_281 = arith.constant 0 : index
    %c0_282 = arith.constant 0 : index
    %c0_283 = arith.constant 0 : index
    %777 = vector.load %arg5[%c0_281, %c0_282, %c0_283] : memref<3x8x128xf32, #tpu.memory_space<vmem>>, vector<1x8x128xf32>
    %778 = vector.shape_cast %777 : vector<1x8x128xf32> to vector<8x128xf32>
    %779 = vector.shape_cast %776 : vector<8x128xf32> to vector<1x8x128xf32>
    tpu.vector_store %arg5[%c0_281, %c0_282, %c0_283], %779 {strides = array<i32>} : memref<3x8x128xf32, #tpu.memory_space<vmem>>, vector<1x8x128xf32>,
    %c17_i32_284 = arith.constant 17 : i32
    %780 = arith.addi %609, %c17_i32_284 : i32
    %c1_i32_285 = arith.constant 1 : i32
    %781 = arith.addi %780, %c1_i32_285 : i32
    %782 = arith.index_cast %781 : i32 to index
    %783 = memref.load %arg2[%782] : memref<160xf32, #tpu.memory_space<smem>>
    %c1_286 = arith.constant 1 : index
    %c0_287 = arith.constant 0 : index
    %c0_288 = arith.constant 0 : index
    %784 = vector.load %arg5[%c1_286, %c0_287, %c0_288] : memref<3x8x128xf32, #tpu.memory_space<vmem>>, vector<1x8x128xf32>
    %785 = vector.shape_cast %784 : vector<1x8x128xf32> to vector<8x128xf32>
    %786 = vector.broadcast %783 : f32 to vector<8x128xf32>
    %787 = arith.mulf %786, %767 : vector<8x128xf32>
    %788 = arith.addf %785, %787 : vector<8x128xf32>
    %c1_289 = arith.constant 1 : index
    %c0_290 = arith.constant 0 : index
    %c0_291 = arith.constant 0 : index
    %789 = vector.load %arg5[%c1_289, %c0_290, %c0_291] : memref<3x8x128xf32, #tpu.memory_space<vmem>>, vector<1x8x128xf32>
    %790 = vector.shape_cast %789 : vector<1x8x128xf32> to vector<8x128xf32>
    %791 = vector.shape_cast %788 : vector<8x128xf32> to vector<1x8x128xf32>
    tpu.vector_store %arg5[%c1_289, %c0_290, %c0_291], %791 {strides = array<i32>} : memref<3x8x128xf32, #tpu.memory_space<vmem>>, vector<1x8x128xf32>,
    %c17_i32_292 = arith.constant 17 : i32
    %792 = arith.addi %609, %c17_i32_292 : i32
    %c2_i32_293 = arith.constant 2 : i32
    %793 = arith.addi %792, %c2_i32_293 : i32
    %794 = arith.index_cast %793 : i32 to index
    %795 = memref.load %arg2[%794] : memref<160xf32, #tpu.memory_space<smem>>
    %c2_294 = arith.constant 2 : index
    %c0_295 = arith.constant 0 : index
    %c0_296 = arith.constant 0 : index
    %796 = vector.load %arg5[%c2_294, %c0_295, %c0_296] : memref<3x8x128xf32, #tpu.memory_space<vmem>>, vector<1x8x128xf32>
    %797 = vector.shape_cast %796 : vector<1x8x128xf32> to vector<8x128xf32>
    %798 = vector.broadcast %795 : f32 to vector<8x128xf32>
    %799 = arith.mulf %798, %767 : vector<8x128xf32>
    %800 = arith.addf %797, %799 : vector<8x128xf32>
    %c2_297 = arith.constant 2 : index
    %c0_298 = arith.constant 0 : index
    %c0_299 = arith.constant 0 : index
    %801 = vector.load %arg5[%c2_297, %c0_298, %c0_299] : memref<3x8x128xf32, #tpu.memory_space<vmem>>, vector<1x8x128xf32>
    %802 = vector.shape_cast %801 : vector<1x8x128xf32> to vector<8x128xf32>
    %803 = vector.shape_cast %800 : vector<8x128xf32> to vector<1x8x128xf32>
    tpu.vector_store %arg5[%c2_297, %c0_298, %c0_299], %803 {strides = array<i32>} : memref<3x8x128xf32, #tpu.memory_space<vmem>>, vector<1x8x128xf32>,
    %c4_i32_300 = arith.constant 4 : i32
    %c8_i32_301 = arith.constant 8 : i32
    %804 = arith.muli %arg1, %c8_i32_301 : i32
    %805 = arith.addi %804, %c4_i32_300 : i32
    %c20_i32_302 = arith.constant 20 : i32
    %806 = arith.muli %805, %c20_i32_302 : i32
    %c0_i32_303 = arith.constant 0 : i32
    %807 = arith.addi %806, %c0_i32_303 : i32
    %808 = arith.index_cast %807 : i32 to index
    %809 = memref.load %arg2[%808] : memref<160xf32, #tpu.memory_space<smem>>
    %c1_i32_304 = arith.constant 1 : i32
    %810 = arith.addi %806, %c1_i32_304 : i32
    %811 = arith.index_cast %810 : i32 to index
    %812 = memref.load %arg2[%811] : memref<160xf32, #tpu.memory_space<smem>>
    %c2_i32_305 = arith.constant 2 : i32
    %813 = arith.addi %806, %c2_i32_305 : i32
    %814 = arith.index_cast %813 : i32 to index
    %815 = memref.load %arg2[%814] : memref<160xf32, #tpu.memory_space<smem>>
    %c3_i32_306 = arith.constant 3 : i32
    %816 = arith.addi %806, %c3_i32_306 : i32
    %817 = arith.index_cast %816 : i32 to index
    %818 = memref.load %arg2[%817] : memref<160xf32, #tpu.memory_space<smem>>
    %c4_i32_307 = arith.constant 4 : i32
    %819 = arith.addi %806, %c4_i32_307 : i32
    %820 = arith.index_cast %819 : i32 to index
    %821 = memref.load %arg2[%820] : memref<160xf32, #tpu.memory_space<smem>>
    %822 = vector.broadcast %809 : f32 to vector<8x128xf32>
    %823 = arith.mulf %822, %10 : vector<8x128xf32>
    %824 = vector.broadcast %812 : f32 to vector<8x128xf32>
    %825 = arith.mulf %824, %12 : vector<8x128xf32>
    %826 = arith.addf %823, %825 : vector<8x128xf32>
    %827 = vector.broadcast %815 : f32 to vector<8x128xf32>
    %828 = arith.mulf %827, %11 : vector<8x128xf32>
    %829 = arith.addf %826, %828 : vector<8x128xf32>
    %830 = vector.broadcast %818 : f32 to vector<8x128xf32>
    %831 = arith.addf %0, %830 : vector<8x128xf32>
    %832 = vector.broadcast %821 : f32 to vector<8x128xf32>
    %833 = arith.addf %1, %832 : vector<8x128xf32>
    %cst_308 = arith.constant 0.000000e+00 : f32
    %834 = vector.broadcast %cst_308 : f32 to vector<8x128xf32>
    %835 = arith.cmpf oge, %831, %834 : vector<8x128xf32>
    %cst_309 = arith.constant 3.100000e+01 : f32
    %836 = vector.broadcast %cst_309 : f32 to vector<8x128xf32>
    %837 = arith.cmpf ole, %831, %836 : vector<8x128xf32>
    %838 = arith.andi %835, %837 : vector<8x128xi1>
    %cst_310 = arith.constant -1.000000e+00 : f32
    %839 = vector.broadcast %cst_310 : f32 to vector<8x128xf32>
    %840 = arith.cmpf oge, %831, %839 : vector<8x128xf32>
    %cst_311 = arith.constant 3.000000e+01 : f32
    %841 = vector.broadcast %cst_311 : f32 to vector<8x128xf32>
    %842 = arith.cmpf ole, %831, %841 : vector<8x128xf32>
    %843 = arith.andi %840, %842 : vector<8x128xi1>
    %cst_312 = arith.constant 0.000000e+00 : f32
    %844 = vector.broadcast %cst_312 : f32 to vector<8x128xf32>
    %845 = arith.cmpf oge, %833, %844 : vector<8x128xf32>
    %cst_313 = arith.constant 3.100000e+01 : f32
    %846 = vector.broadcast %cst_313 : f32 to vector<8x128xf32>
    %847 = arith.cmpf ole, %833, %846 : vector<8x128xf32>
    %848 = arith.andi %845, %847 : vector<8x128xi1>
    %cst_314 = arith.constant -1.000000e+00 : f32
    %849 = vector.broadcast %cst_314 : f32 to vector<8x128xf32>
    %850 = arith.cmpf oge, %833, %849 : vector<8x128xf32>
    %cst_315 = arith.constant 3.000000e+01 : f32
    %851 = vector.broadcast %cst_315 : f32 to vector<8x128xf32>
    %852 = arith.cmpf ole, %833, %851 : vector<8x128xf32>
    %853 = arith.andi %850, %852 : vector<8x128xi1>
    %c5_i32_316 = arith.constant 5 : i32
    %854 = arith.addi %806, %c5_i32_316 : i32
    %c0_i32_317 = arith.constant 0 : i32
    %855 = arith.addi %854, %c0_i32_317 : i32
    %c0_i32_318 = arith.constant 0 : i32
    %856 = arith.addi %855, %c0_i32_318 : i32
    %857 = arith.index_cast %856 : i32 to index
    %858 = memref.load %arg2[%857] : memref<160xf32, #tpu.memory_space<smem>>
    %c5_i32_319 = arith.constant 5 : i32
    %859 = arith.addi %806, %c5_i32_319 : i32
    %c0_i32_320 = arith.constant 0 : i32
    %860 = arith.addi %859, %c0_i32_320 : i32
    %c1_i32_321 = arith.constant 1 : i32
    %861 = arith.addi %860, %c1_i32_321 : i32
    %862 = arith.index_cast %861 : i32 to index
    %863 = memref.load %arg2[%862] : memref<160xf32, #tpu.memory_space<smem>>
    %c5_i32_322 = arith.constant 5 : i32
    %864 = arith.addi %806, %c5_i32_322 : i32
    %c0_i32_323 = arith.constant 0 : i32
    %865 = arith.addi %864, %c0_i32_323 : i32
    %c2_i32_324 = arith.constant 2 : i32
    %866 = arith.addi %865, %c2_i32_324 : i32
    %867 = arith.index_cast %866 : i32 to index
    %868 = memref.load %arg2[%867] : memref<160xf32, #tpu.memory_space<smem>>
    %869 = vector.broadcast %858 : f32 to vector<8x128xf32>
    %870 = arith.mulf %869, %5 : vector<8x128xf32>
    %871 = vector.broadcast %863 : f32 to vector<8x128xf32>
    %872 = arith.mulf %871, %9 : vector<8x128xf32>
    %873 = arith.addf %870, %872 : vector<8x128xf32>
    %874 = vector.broadcast %868 : f32 to vector<8x128xf32>
    %875 = arith.addf %873, %874 : vector<8x128xf32>
    %876 = arith.addf %829, %875 : vector<8x128xf32>
    %877 = arith.andi %838, %848 : vector<8x128xi1>
    %878 = vector.broadcast %cst_7 : f32 to vector<8x128xf32>
    %879 = arith.select %877, %876, %878 : vector<8x128xi1>, vector<8x128xf32>
    %880 = math.exp %879 : vector<8x128xf32>
    %c5_i32_325 = arith.constant 5 : i32
    %881 = arith.addi %806, %c5_i32_325 : i32
    %c3_i32_326 = arith.constant 3 : i32
    %882 = arith.addi %881, %c3_i32_326 : i32
    %c0_i32_327 = arith.constant 0 : i32
    %883 = arith.addi %882, %c0_i32_327 : i32
    %884 = arith.index_cast %883 : i32 to index
    %885 = memref.load %arg2[%884] : memref<160xf32, #tpu.memory_space<smem>>
    %c5_i32_328 = arith.constant 5 : i32
    %886 = arith.addi %806, %c5_i32_328 : i32
    %c3_i32_329 = arith.constant 3 : i32
    %887 = arith.addi %886, %c3_i32_329 : i32
    %c1_i32_330 = arith.constant 1 : i32
    %888 = arith.addi %887, %c1_i32_330 : i32
    %889 = arith.index_cast %888 : i32 to index
    %890 = memref.load %arg2[%889] : memref<160xf32, #tpu.memory_space<smem>>
    %c5_i32_331 = arith.constant 5 : i32
    %891 = arith.addi %806, %c5_i32_331 : i32
    %c3_i32_332 = arith.constant 3 : i32
    %892 = arith.addi %891, %c3_i32_332 : i32
    %c2_i32_333 = arith.constant 2 : i32
    %893 = arith.addi %892, %c2_i32_333 : i32
    %894 = arith.index_cast %893 : i32 to index
    %895 = memref.load %arg2[%894] : memref<160xf32, #tpu.memory_space<smem>>
    %896 = vector.broadcast %885 : f32 to vector<8x128xf32>
    %897 = arith.mulf %896, %5 : vector<8x128xf32>
    %898 = vector.broadcast %890 : f32 to vector<8x128xf32>
    %899 = arith.mulf %898, %9 : vector<8x128xf32>
    %900 = arith.addf %897, %899 : vector<8x128xf32>
    %901 = vector.broadcast %895 : f32 to vector<8x128xf32>
    %902 = arith.addf %900, %901 : vector<8x128xf32>
    %903 = arith.addf %829, %902 : vector<8x128xf32>
    %904 = arith.andi %838, %853 : vector<8x128xi1>
    %905 = vector.broadcast %cst_7 : f32 to vector<8x128xf32>
    %906 = arith.select %904, %903, %905 : vector<8x128xi1>, vector<8x128xf32>
    %907 = math.exp %906 : vector<8x128xf32>
    %908 = arith.addf %880, %907 : vector<8x128xf32>
    %c5_i32_334 = arith.constant 5 : i32
    %909 = arith.addi %806, %c5_i32_334 : i32
    %c6_i32_335 = arith.constant 6 : i32
    %910 = arith.addi %909, %c6_i32_335 : i32
    %c0_i32_336 = arith.constant 0 : i32
    %911 = arith.addi %910, %c0_i32_336 : i32
    %912 = arith.index_cast %911 : i32 to index
    %913 = memref.load %arg2[%912] : memref<160xf32, #tpu.memory_space<smem>>
    %c5_i32_337 = arith.constant 5 : i32
    %914 = arith.addi %806, %c5_i32_337 : i32
    %c6_i32_338 = arith.constant 6 : i32
    %915 = arith.addi %914, %c6_i32_338 : i32
    %c1_i32_339 = arith.constant 1 : i32
    %916 = arith.addi %915, %c1_i32_339 : i32
    %917 = arith.index_cast %916 : i32 to index
    %918 = memref.load %arg2[%917] : memref<160xf32, #tpu.memory_space<smem>>
    %c5_i32_340 = arith.constant 5 : i32
    %919 = arith.addi %806, %c5_i32_340 : i32
    %c6_i32_341 = arith.constant 6 : i32
    %920 = arith.addi %919, %c6_i32_341 : i32
    %c2_i32_342 = arith.constant 2 : i32
    %921 = arith.addi %920, %c2_i32_342 : i32
    %922 = arith.index_cast %921 : i32 to index
    %923 = memref.load %arg2[%922] : memref<160xf32, #tpu.memory_space<smem>>
    %924 = vector.broadcast %913 : f32 to vector<8x128xf32>
    %925 = arith.mulf %924, %5 : vector<8x128xf32>
    %926 = vector.broadcast %918 : f32 to vector<8x128xf32>
    %927 = arith.mulf %926, %9 : vector<8x128xf32>
    %928 = arith.addf %925, %927 : vector<8x128xf32>
    %929 = vector.broadcast %923 : f32 to vector<8x128xf32>
    %930 = arith.addf %928, %929 : vector<8x128xf32>
    %931 = arith.addf %829, %930 : vector<8x128xf32>
    %932 = arith.andi %843, %848 : vector<8x128xi1>
    %933 = vector.broadcast %cst_7 : f32 to vector<8x128xf32>
    %934 = arith.select %932, %931, %933 : vector<8x128xi1>, vector<8x128xf32>
    %935 = math.exp %934 : vector<8x128xf32>
    %936 = arith.addf %908, %935 : vector<8x128xf32>
    %c5_i32_343 = arith.constant 5 : i32
    %937 = arith.addi %806, %c5_i32_343 : i32
    %c9_i32_344 = arith.constant 9 : i32
    %938 = arith.addi %937, %c9_i32_344 : i32
    %c0_i32_345 = arith.constant 0 : i32
    %939 = arith.addi %938, %c0_i32_345 : i32
    %940 = arith.index_cast %939 : i32 to index
    %941 = memref.load %arg2[%940] : memref<160xf32, #tpu.memory_space<smem>>
    %c5_i32_346 = arith.constant 5 : i32
    %942 = arith.addi %806, %c5_i32_346 : i32
    %c9_i32_347 = arith.constant 9 : i32
    %943 = arith.addi %942, %c9_i32_347 : i32
    %c1_i32_348 = arith.constant 1 : i32
    %944 = arith.addi %943, %c1_i32_348 : i32
    %945 = arith.index_cast %944 : i32 to index
    %946 = memref.load %arg2[%945] : memref<160xf32, #tpu.memory_space<smem>>
    %c5_i32_349 = arith.constant 5 : i32
    %947 = arith.addi %806, %c5_i32_349 : i32
    %c9_i32_350 = arith.constant 9 : i32
    %948 = arith.addi %947, %c9_i32_350 : i32
    %c2_i32_351 = arith.constant 2 : i32
    %949 = arith.addi %948, %c2_i32_351 : i32
    %950 = arith.index_cast %949 : i32 to index
    %951 = memref.load %arg2[%950] : memref<160xf32, #tpu.memory_space<smem>>
    %952 = vector.broadcast %941 : f32 to vector<8x128xf32>
    %953 = arith.mulf %952, %5 : vector<8x128xf32>
    %954 = vector.broadcast %946 : f32 to vector<8x128xf32>
    %955 = arith.mulf %954, %9 : vector<8x128xf32>
    %956 = arith.addf %953, %955 : vector<8x128xf32>
    %957 = vector.broadcast %951 : f32 to vector<8x128xf32>
    %958 = arith.addf %956, %957 : vector<8x128xf32>
    %959 = arith.addf %829, %958 : vector<8x128xf32>
    %960 = arith.andi %843, %853 : vector<8x128xi1>
    %961 = vector.broadcast %cst_7 : f32 to vector<8x128xf32>
    %962 = arith.select %960, %959, %961 : vector<8x128xi1>, vector<8x128xf32>
    %963 = math.exp %962 : vector<8x128xf32>
    %964 = arith.addf %936, %963 : vector<8x128xf32>
    %c17_i32_352 = arith.constant 17 : i32
    %965 = arith.addi %806, %c17_i32_352 : i32
    %c0_i32_353 = arith.constant 0 : i32
    %966 = arith.addi %965, %c0_i32_353 : i32
    %967 = arith.index_cast %966 : i32 to index
    %968 = memref.load %arg2[%967] : memref<160xf32, #tpu.memory_space<smem>>
    %c0_354 = arith.constant 0 : index
    %c0_355 = arith.constant 0 : index
    %c0_356 = arith.constant 0 : index
    %969 = vector.load %arg5[%c0_354, %c0_355, %c0_356] : memref<3x8x128xf32, #tpu.memory_space<vmem>>, vector<1x8x128xf32>
    %970 = vector.shape_cast %969 : vector<1x8x128xf32> to vector<8x128xf32>
    %971 = vector.broadcast %968 : f32 to vector<8x128xf32>
    %972 = arith.mulf %971, %964 : vector<8x128xf32>
    %973 = arith.addf %970, %972 : vector<8x128xf32>
    %c0_357 = arith.constant 0 : index
    %c0_358 = arith.constant 0 : index
    %c0_359 = arith.constant 0 : index
    %974 = vector.load %arg5[%c0_357, %c0_358, %c0_359] : memref<3x8x128xf32, #tpu.memory_space<vmem>>, vector<1x8x128xf32>
    %975 = vector.shape_cast %974 : vector<1x8x128xf32> to vector<8x128xf32>
    %976 = vector.shape_cast %973 : vector<8x128xf32> to vector<1x8x128xf32>
    tpu.vector_store %arg5[%c0_357, %c0_358, %c0_359], %976 {strides = array<i32>} : memref<3x8x128xf32, #tpu.memory_space<vmem>>, vector<1x8x128xf32>,
    %c17_i32_360 = arith.constant 17 : i32
    %977 = arith.addi %806, %c17_i32_360 : i32
    %c1_i32_361 = arith.constant 1 : i32
    %978 = arith.addi %977, %c1_i32_361 : i32
    %979 = arith.index_cast %978 : i32 to index
    %980 = memref.load %arg2[%979] : memref<160xf32, #tpu.memory_space<smem>>
    %c1_362 = arith.constant 1 : index
    %c0_363 = arith.constant 0 : index
    %c0_364 = arith.constant 0 : index
    %981 = vector.load %arg5[%c1_362, %c0_363, %c0_364] : memref<3x8x128xf32, #tpu.memory_space<vmem>>, vector<1x8x128xf32>
    %982 = vector.shape_cast %981 : vector<1x8x128xf32> to vector<8x128xf32>
    %983 = vector.broadcast %980 : f32 to vector<8x128xf32>
    %984 = arith.mulf %983, %964 : vector<8x128xf32>
    %985 = arith.addf %982, %984 : vector<8x128xf32>
    %c1_365 = arith.constant 1 : index
    %c0_366 = arith.constant 0 : index
    %c0_367 = arith.constant 0 : index
    %986 = vector.load %arg5[%c1_365, %c0_366, %c0_367] : memref<3x8x128xf32, #tpu.memory_space<vmem>>, vector<1x8x128xf32>
    %987 = vector.shape_cast %986 : vector<1x8x128xf32> to vector<8x128xf32>
    %988 = vector.shape_cast %985 : vector<8x128xf32> to vector<1x8x128xf32>
    tpu.vector_store %arg5[%c1_365, %c0_366, %c0_367], %988 {strides = array<i32>} : memref<3x8x128xf32, #tpu.memory_space<vmem>>, vector<1x8x128xf32>,
    %c17_i32_368 = arith.constant 17 : i32
    %989 = arith.addi %806, %c17_i32_368 : i32
    %c2_i32_369 = arith.constant 2 : i32
    %990 = arith.addi %989, %c2_i32_369 : i32
    %991 = arith.index_cast %990 : i32 to index
    %992 = memref.load %arg2[%991] : memref<160xf32, #tpu.memory_space<smem>>
    %c2_370 = arith.constant 2 : index
    %c0_371 = arith.constant 0 : index
    %c0_372 = arith.constant 0 : index
    %993 = vector.load %arg5[%c2_370, %c0_371, %c0_372] : memref<3x8x128xf32, #tpu.memory_space<vmem>>, vector<1x8x128xf32>
    %994 = vector.shape_cast %993 : vector<1x8x128xf32> to vector<8x128xf32>
    %995 = vector.broadcast %992 : f32 to vector<8x128xf32>
    %996 = arith.mulf %995, %964 : vector<8x128xf32>
    %997 = arith.addf %994, %996 : vector<8x128xf32>
    %c2_373 = arith.constant 2 : index
    %c0_374 = arith.constant 0 : index
    %c0_375 = arith.constant 0 : index
    %998 = vector.load %arg5[%c2_373, %c0_374, %c0_375] : memref<3x8x128xf32, #tpu.memory_space<vmem>>, vector<1x8x128xf32>
    %999 = vector.shape_cast %998 : vector<1x8x128xf32> to vector<8x128xf32>
    %1000 = vector.shape_cast %997 : vector<8x128xf32> to vector<1x8x128xf32>
    tpu.vector_store %arg5[%c2_373, %c0_374, %c0_375], %1000 {strides = array<i32>} : memref<3x8x128xf32, #tpu.memory_space<vmem>>, vector<1x8x128xf32>,
    %c5_i32_376 = arith.constant 5 : i32
    %c8_i32_377 = arith.constant 8 : i32
    %1001 = arith.muli %arg1, %c8_i32_377 : i32
    %1002 = arith.addi %1001, %c5_i32_376 : i32
    %c20_i32_378 = arith.constant 20 : i32
    %1003 = arith.muli %1002, %c20_i32_378 : i32
    %c0_i32_379 = arith.constant 0 : i32
    %1004 = arith.addi %1003, %c0_i32_379 : i32
    %1005 = arith.index_cast %1004 : i32 to index
    %1006 = memref.load %arg2[%1005] : memref<160xf32, #tpu.memory_space<smem>>
    %c1_i32_380 = arith.constant 1 : i32
    %1007 = arith.addi %1003, %c1_i32_380 : i32
    %1008 = arith.index_cast %1007 : i32 to index
    %1009 = memref.load %arg2[%1008] : memref<160xf32, #tpu.memory_space<smem>>
    %c2_i32_381 = arith.constant 2 : i32
    %1010 = arith.addi %1003, %c2_i32_381 : i32
    %1011 = arith.index_cast %1010 : i32 to index
    %1012 = memref.load %arg2[%1011] : memref<160xf32, #tpu.memory_space<smem>>
    %c3_i32_382 = arith.constant 3 : i32
    %1013 = arith.addi %1003, %c3_i32_382 : i32
    %1014 = arith.index_cast %1013 : i32 to index
    %1015 = memref.load %arg2[%1014] : memref<160xf32, #tpu.memory_space<smem>>
    %c4_i32_383 = arith.constant 4 : i32
    %1016 = arith.addi %1003, %c4_i32_383 : i32
    %1017 = arith.index_cast %1016 : i32 to index
    %1018 = memref.load %arg2[%1017] : memref<160xf32, #tpu.memory_space<smem>>
    %1019 = vector.broadcast %1006 : f32 to vector<8x128xf32>
    %1020 = arith.mulf %1019, %10 : vector<8x128xf32>
    %1021 = vector.broadcast %1009 : f32 to vector<8x128xf32>
    %1022 = arith.mulf %1021, %12 : vector<8x128xf32>
    %1023 = arith.addf %1020, %1022 : vector<8x128xf32>
    %1024 = vector.broadcast %1012 : f32 to vector<8x128xf32>
    %1025 = arith.mulf %1024, %11 : vector<8x128xf32>
    %1026 = arith.addf %1023, %1025 : vector<8x128xf32>
    %1027 = vector.broadcast %1015 : f32 to vector<8x128xf32>
    %1028 = arith.addf %0, %1027 : vector<8x128xf32>
    %1029 = vector.broadcast %1018 : f32 to vector<8x128xf32>
    %1030 = arith.addf %1, %1029 : vector<8x128xf32>
    %cst_384 = arith.constant 0.000000e+00 : f32
    %1031 = vector.broadcast %cst_384 : f32 to vector<8x128xf32>
    %1032 = arith.cmpf oge, %1028, %1031 : vector<8x128xf32>
    %cst_385 = arith.constant 3.100000e+01 : f32
    %1033 = vector.broadcast %cst_385 : f32 to vector<8x128xf32>
    %1034 = arith.cmpf ole, %1028, %1033 : vector<8x128xf32>
    %1035 = arith.andi %1032, %1034 : vector<8x128xi1>
    %cst_386 = arith.constant -1.000000e+00 : f32
    %1036 = vector.broadcast %cst_386 : f32 to vector<8x128xf32>
    %1037 = arith.cmpf oge, %1028, %1036 : vector<8x128xf32>
    %cst_387 = arith.constant 3.000000e+01 : f32
    %1038 = vector.broadcast %cst_387 : f32 to vector<8x128xf32>
    %1039 = arith.cmpf ole, %1028, %1038 : vector<8x128xf32>
    %1040 = arith.andi %1037, %1039 : vector<8x128xi1>
    %cst_388 = arith.constant 0.000000e+00 : f32
    %1041 = vector.broadcast %cst_388 : f32 to vector<8x128xf32>
    %1042 = arith.cmpf oge, %1030, %1041 : vector<8x128xf32>
    %cst_389 = arith.constant 3.100000e+01 : f32
    %1043 = vector.broadcast %cst_389 : f32 to vector<8x128xf32>
    %1044 = arith.cmpf ole, %1030, %1043 : vector<8x128xf32>
    %1045 = arith.andi %1042, %1044 : vector<8x128xi1>
    %cst_390 = arith.constant -1.000000e+00 : f32
    %1046 = vector.broadcast %cst_390 : f32 to vector<8x128xf32>
    %1047 = arith.cmpf oge, %1030, %1046 : vector<8x128xf32>
    %cst_391 = arith.constant 3.000000e+01 : f32
    %1048 = vector.broadcast %cst_391 : f32 to vector<8x128xf32>
    %1049 = arith.cmpf ole, %1030, %1048 : vector<8x128xf32>
    %1050 = arith.andi %1047, %1049 : vector<8x128xi1>
    %c5_i32_392 = arith.constant 5 : i32
    %1051 = arith.addi %1003, %c5_i32_392 : i32
    %c0_i32_393 = arith.constant 0 : i32
    %1052 = arith.addi %1051, %c0_i32_393 : i32
    %c0_i32_394 = arith.constant 0 : i32
    %1053 = arith.addi %1052, %c0_i32_394 : i32
    %1054 = arith.index_cast %1053 : i32 to index
    %1055 = memref.load %arg2[%1054] : memref<160xf32, #tpu.memory_space<smem>>
    %c5_i32_395 = arith.constant 5 : i32
    %1056 = arith.addi %1003, %c5_i32_395 : i32
    %c0_i32_396 = arith.constant 0 : i32
    %1057 = arith.addi %1056, %c0_i32_396 : i32
    %c1_i32_397 = arith.constant 1 : i32
    %1058 = arith.addi %1057, %c1_i32_397 : i32
    %1059 = arith.index_cast %1058 : i32 to index
    %1060 = memref.load %arg2[%1059] : memref<160xf32, #tpu.memory_space<smem>>
    %c5_i32_398 = arith.constant 5 : i32
    %1061 = arith.addi %1003, %c5_i32_398 : i32
    %c0_i32_399 = arith.constant 0 : i32
    %1062 = arith.addi %1061, %c0_i32_399 : i32
    %c2_i32_400 = arith.constant 2 : i32
    %1063 = arith.addi %1062, %c2_i32_400 : i32
    %1064 = arith.index_cast %1063 : i32 to index
    %1065 = memref.load %arg2[%1064] : memref<160xf32, #tpu.memory_space<smem>>
    %1066 = vector.broadcast %1055 : f32 to vector<8x128xf32>
    %1067 = arith.mulf %1066, %5 : vector<8x128xf32>
    %1068 = vector.broadcast %1060 : f32 to vector<8x128xf32>
    %1069 = arith.mulf %1068, %9 : vector<8x128xf32>
    %1070 = arith.addf %1067, %1069 : vector<8x128xf32>
    %1071 = vector.broadcast %1065 : f32 to vector<8x128xf32>
    %1072 = arith.addf %1070, %1071 : vector<8x128xf32>
    %1073 = arith.addf %1026, %1072 : vector<8x128xf32>
    %1074 = arith.andi %1035, %1045 : vector<8x128xi1>
    %1075 = vector.broadcast %cst_7 : f32 to vector<8x128xf32>
    %1076 = arith.select %1074, %1073, %1075 : vector<8x128xi1>, vector<8x128xf32>
    %1077 = math.exp %1076 : vector<8x128xf32>
    %c5_i32_401 = arith.constant 5 : i32
    %1078 = arith.addi %1003, %c5_i32_401 : i32
    %c3_i32_402 = arith.constant 3 : i32
    %1079 = arith.addi %1078, %c3_i32_402 : i32
    %c0_i32_403 = arith.constant 0 : i32
    %1080 = arith.addi %1079, %c0_i32_403 : i32
    %1081 = arith.index_cast %1080 : i32 to index
    %1082 = memref.load %arg2[%1081] : memref<160xf32, #tpu.memory_space<smem>>
    %c5_i32_404 = arith.constant 5 : i32
    %1083 = arith.addi %1003, %c5_i32_404 : i32
    %c3_i32_405 = arith.constant 3 : i32
    %1084 = arith.addi %1083, %c3_i32_405 : i32
    %c1_i32_406 = arith.constant 1 : i32
    %1085 = arith.addi %1084, %c1_i32_406 : i32
    %1086 = arith.index_cast %1085 : i32 to index
    %1087 = memref.load %arg2[%1086] : memref<160xf32, #tpu.memory_space<smem>>
    %c5_i32_407 = arith.constant 5 : i32
    %1088 = arith.addi %1003, %c5_i32_407 : i32
    %c3_i32_408 = arith.constant 3 : i32
    %1089 = arith.addi %1088, %c3_i32_408 : i32
    %c2_i32_409 = arith.constant 2 : i32
    %1090 = arith.addi %1089, %c2_i32_409 : i32
    %1091 = arith.index_cast %1090 : i32 to index
    %1092 = memref.load %arg2[%1091] : memref<160xf32, #tpu.memory_space<smem>>
    %1093 = vector.broadcast %1082 : f32 to vector<8x128xf32>
    %1094 = arith.mulf %1093, %5 : vector<8x128xf32>
    %1095 = vector.broadcast %1087 : f32 to vector<8x128xf32>
    %1096 = arith.mulf %1095, %9 : vector<8x128xf32>
    %1097 = arith.addf %1094, %1096 : vector<8x128xf32>
    %1098 = vector.broadcast %1092 : f32 to vector<8x128xf32>
    %1099 = arith.addf %1097, %1098 : vector<8x128xf32>
    %1100 = arith.addf %1026, %1099 : vector<8x128xf32>
    %1101 = arith.andi %1035, %1050 : vector<8x128xi1>
    %1102 = vector.broadcast %cst_7 : f32 to vector<8x128xf32>
    %1103 = arith.select %1101, %1100, %1102 : vector<8x128xi1>, vector<8x128xf32>
    %1104 = math.exp %1103 : vector<8x128xf32>
    %1105 = arith.addf %1077, %1104 : vector<8x128xf32>
    %c5_i32_410 = arith.constant 5 : i32
    %1106 = arith.addi %1003, %c5_i32_410 : i32
    %c6_i32_411 = arith.constant 6 : i32
    %1107 = arith.addi %1106, %c6_i32_411 : i32
    %c0_i32_412 = arith.constant 0 : i32
    %1108 = arith.addi %1107, %c0_i32_412 : i32
    %1109 = arith.index_cast %1108 : i32 to index
    %1110 = memref.load %arg2[%1109] : memref<160xf32, #tpu.memory_space<smem>>
    %c5_i32_413 = arith.constant 5 : i32
    %1111 = arith.addi %1003, %c5_i32_413 : i32
    %c6_i32_414 = arith.constant 6 : i32
    %1112 = arith.addi %1111, %c6_i32_414 : i32
    %c1_i32_415 = arith.constant 1 : i32
    %1113 = arith.addi %1112, %c1_i32_415 : i32
    %1114 = arith.index_cast %1113 : i32 to index
    %1115 = memref.load %arg2[%1114] : memref<160xf32, #tpu.memory_space<smem>>
    %c5_i32_416 = arith.constant 5 : i32
    %1116 = arith.addi %1003, %c5_i32_416 : i32
    %c6_i32_417 = arith.constant 6 : i32
    %1117 = arith.addi %1116, %c6_i32_417 : i32
    %c2_i32_418 = arith.constant 2 : i32
    %1118 = arith.addi %1117, %c2_i32_418 : i32
    %1119 = arith.index_cast %1118 : i32 to index
    %1120 = memref.load %arg2[%1119] : memref<160xf32, #tpu.memory_space<smem>>
    %1121 = vector.broadcast %1110 : f32 to vector<8x128xf32>
    %1122 = arith.mulf %1121, %5 : vector<8x128xf32>
    %1123 = vector.broadcast %1115 : f32 to vector<8x128xf32>
    %1124 = arith.mulf %1123, %9 : vector<8x128xf32>
    %1125 = arith.addf %1122, %1124 : vector<8x128xf32>
    %1126 = vector.broadcast %1120 : f32 to vector<8x128xf32>
    %1127 = arith.addf %1125, %1126 : vector<8x128xf32>
    %1128 = arith.addf %1026, %1127 : vector<8x128xf32>
    %1129 = arith.andi %1040, %1045 : vector<8x128xi1>
    %1130 = vector.broadcast %cst_7 : f32 to vector<8x128xf32>
    %1131 = arith.select %1129, %1128, %1130 : vector<8x128xi1>, vector<8x128xf32>
    %1132 = math.exp %1131 : vector<8x128xf32>
    %1133 = arith.addf %1105, %1132 : vector<8x128xf32>
    %c5_i32_419 = arith.constant 5 : i32
    %1134 = arith.addi %1003, %c5_i32_419 : i32
    %c9_i32_420 = arith.constant 9 : i32
    %1135 = arith.addi %1134, %c9_i32_420 : i32
    %c0_i32_421 = arith.constant 0 : i32
    %1136 = arith.addi %1135, %c0_i32_421 : i32
    %1137 = arith.index_cast %1136 : i32 to index
    %1138 = memref.load %arg2[%1137] : memref<160xf32, #tpu.memory_space<smem>>
    %c5_i32_422 = arith.constant 5 : i32
    %1139 = arith.addi %1003, %c5_i32_422 : i32
    %c9_i32_423 = arith.constant 9 : i32
    %1140 = arith.addi %1139, %c9_i32_423 : i32
    %c1_i32_424 = arith.constant 1 : i32
    %1141 = arith.addi %1140, %c1_i32_424 : i32
    %1142 = arith.index_cast %1141 : i32 to index
    %1143 = memref.load %arg2[%1142] : memref<160xf32, #tpu.memory_space<smem>>
    %c5_i32_425 = arith.constant 5 : i32
    %1144 = arith.addi %1003, %c5_i32_425 : i32
    %c9_i32_426 = arith.constant 9 : i32
    %1145 = arith.addi %1144, %c9_i32_426 : i32
    %c2_i32_427 = arith.constant 2 : i32
    %1146 = arith.addi %1145, %c2_i32_427 : i32
    %1147 = arith.index_cast %1146 : i32 to index
    %1148 = memref.load %arg2[%1147] : memref<160xf32, #tpu.memory_space<smem>>
    %1149 = vector.broadcast %1138 : f32 to vector<8x128xf32>
    %1150 = arith.mulf %1149, %5 : vector<8x128xf32>
    %1151 = vector.broadcast %1143 : f32 to vector<8x128xf32>
    %1152 = arith.mulf %1151, %9 : vector<8x128xf32>
    %1153 = arith.addf %1150, %1152 : vector<8x128xf32>
    %1154 = vector.broadcast %1148 : f32 to vector<8x128xf32>
    %1155 = arith.addf %1153, %1154 : vector<8x128xf32>
    %1156 = arith.addf %1026, %1155 : vector<8x128xf32>
    %1157 = arith.andi %1040, %1050 : vector<8x128xi1>
    %1158 = vector.broadcast %cst_7 : f32 to vector<8x128xf32>
    %1159 = arith.select %1157, %1156, %1158 : vector<8x128xi1>, vector<8x128xf32>
    %1160 = math.exp %1159 : vector<8x128xf32>
    %1161 = arith.addf %1133, %1160 : vector<8x128xf32>
    %c17_i32_428 = arith.constant 17 : i32
    %1162 = arith.addi %1003, %c17_i32_428 : i32
    %c0_i32_429 = arith.constant 0 : i32
    %1163 = arith.addi %1162, %c0_i32_429 : i32
    %1164 = arith.index_cast %1163 : i32 to index
    %1165 = memref.load %arg2[%1164] : memref<160xf32, #tpu.memory_space<smem>>
    %c0_430 = arith.constant 0 : index
    %c0_431 = arith.constant 0 : index
    %c0_432 = arith.constant 0 : index
    %1166 = vector.load %arg5[%c0_430, %c0_431, %c0_432] : memref<3x8x128xf32, #tpu.memory_space<vmem>>, vector<1x8x128xf32>
    %1167 = vector.shape_cast %1166 : vector<1x8x128xf32> to vector<8x128xf32>
    %1168 = vector.broadcast %1165 : f32 to vector<8x128xf32>
    %1169 = arith.mulf %1168, %1161 : vector<8x128xf32>
    %1170 = arith.addf %1167, %1169 : vector<8x128xf32>
    %c0_433 = arith.constant 0 : index
    %c0_434 = arith.constant 0 : index
    %c0_435 = arith.constant 0 : index
    %1171 = vector.load %arg5[%c0_433, %c0_434, %c0_435] : memref<3x8x128xf32, #tpu.memory_space<vmem>>, vector<1x8x128xf32>
    %1172 = vector.shape_cast %1171 : vector<1x8x128xf32> to vector<8x128xf32>
    %1173 = vector.shape_cast %1170 : vector<8x128xf32> to vector<1x8x128xf32>
    tpu.vector_store %arg5[%c0_433, %c0_434, %c0_435], %1173 {strides = array<i32>} : memref<3x8x128xf32, #tpu.memory_space<vmem>>, vector<1x8x128xf32>,
    %c17_i32_436 = arith.constant 17 : i32
    %1174 = arith.addi %1003, %c17_i32_436 : i32
    %c1_i32_437 = arith.constant 1 : i32
    %1175 = arith.addi %1174, %c1_i32_437 : i32
    %1176 = arith.index_cast %1175 : i32 to index
    %1177 = memref.load %arg2[%1176] : memref<160xf32, #tpu.memory_space<smem>>
    %c1_438 = arith.constant 1 : index
    %c0_439 = arith.constant 0 : index
    %c0_440 = arith.constant 0 : index
    %1178 = vector.load %arg5[%c1_438, %c0_439, %c0_440] : memref<3x8x128xf32, #tpu.memory_space<vmem>>, vector<1x8x128xf32>
    %1179 = vector.shape_cast %1178 : vector<1x8x128xf32> to vector<8x128xf32>
    %1180 = vector.broadcast %1177 : f32 to vector<8x128xf32>
    %1181 = arith.mulf %1180, %1161 : vector<8x128xf32>
    %1182 = arith.addf %1179, %1181 : vector<8x128xf32>
    %c1_441 = arith.constant 1 : index
    %c0_442 = arith.constant 0 : index
    %c0_443 = arith.constant 0 : index
    %1183 = vector.load %arg5[%c1_441, %c0_442, %c0_443] : memref<3x8x128xf32, #tpu.memory_space<vmem>>, vector<1x8x128xf32>
    %1184 = vector.shape_cast %1183 : vector<1x8x128xf32> to vector<8x128xf32>
    %1185 = vector.shape_cast %1182 : vector<8x128xf32> to vector<1x8x128xf32>
    tpu.vector_store %arg5[%c1_441, %c0_442, %c0_443], %1185 {strides = array<i32>} : memref<3x8x128xf32, #tpu.memory_space<vmem>>, vector<1x8x128xf32>,
    %c17_i32_444 = arith.constant 17 : i32
    %1186 = arith.addi %1003, %c17_i32_444 : i32
    %c2_i32_445 = arith.constant 2 : i32
    %1187 = arith.addi %1186, %c2_i32_445 : i32
    %1188 = arith.index_cast %1187 : i32 to index
    %1189 = memref.load %arg2[%1188] : memref<160xf32, #tpu.memory_space<smem>>
    %c2_446 = arith.constant 2 : index
    %c0_447 = arith.constant 0 : index
    %c0_448 = arith.constant 0 : index
    %1190 = vector.load %arg5[%c2_446, %c0_447, %c0_448] : memref<3x8x128xf32, #tpu.memory_space<vmem>>, vector<1x8x128xf32>
    %1191 = vector.shape_cast %1190 : vector<1x8x128xf32> to vector<8x128xf32>
    %1192 = vector.broadcast %1189 : f32 to vector<8x128xf32>
    %1193 = arith.mulf %1192, %1161 : vector<8x128xf32>
    %1194 = arith.addf %1191, %1193 : vector<8x128xf32>
    %c2_449 = arith.constant 2 : index
    %c0_450 = arith.constant 0 : index
    %c0_451 = arith.constant 0 : index
    %1195 = vector.load %arg5[%c2_449, %c0_450, %c0_451] : memref<3x8x128xf32, #tpu.memory_space<vmem>>, vector<1x8x128xf32>
    %1196 = vector.shape_cast %1195 : vector<1x8x128xf32> to vector<8x128xf32>
    %1197 = vector.shape_cast %1194 : vector<8x128xf32> to vector<1x8x128xf32>
    tpu.vector_store %arg5[%c2_449, %c0_450, %c0_451], %1197 {strides = array<i32>} : memref<3x8x128xf32, #tpu.memory_space<vmem>>, vector<1x8x128xf32>,
    %c6_i32_452 = arith.constant 6 : i32
    %c8_i32_453 = arith.constant 8 : i32
    %1198 = arith.muli %arg1, %c8_i32_453 : i32
    %1199 = arith.addi %1198, %c6_i32_452 : i32
    %c20_i32_454 = arith.constant 20 : i32
    %1200 = arith.muli %1199, %c20_i32_454 : i32
    %c0_i32_455 = arith.constant 0 : i32
    %1201 = arith.addi %1200, %c0_i32_455 : i32
    %1202 = arith.index_cast %1201 : i32 to index
    %1203 = memref.load %arg2[%1202] : memref<160xf32, #tpu.memory_space<smem>>
    %c1_i32_456 = arith.constant 1 : i32
    %1204 = arith.addi %1200, %c1_i32_456 : i32
    %1205 = arith.index_cast %1204 : i32 to index
    %1206 = memref.load %arg2[%1205] : memref<160xf32, #tpu.memory_space<smem>>
    %c2_i32_457 = arith.constant 2 : i32
    %1207 = arith.addi %1200, %c2_i32_457 : i32
    %1208 = arith.index_cast %1207 : i32 to index
    %1209 = memref.load %arg2[%1208] : memref<160xf32, #tpu.memory_space<smem>>
    %c3_i32_458 = arith.constant 3 : i32
    %1210 = arith.addi %1200, %c3_i32_458 : i32
    %1211 = arith.index_cast %1210 : i32 to index
    %1212 = memref.load %arg2[%1211] : memref<160xf32, #tpu.memory_space<smem>>
    %c4_i32_459 = arith.constant 4 : i32
    %1213 = arith.addi %1200, %c4_i32_459 : i32
    %1214 = arith.index_cast %1213 : i32 to index
    %1215 = memref.load %arg2[%1214] : memref<160xf32, #tpu.memory_space<smem>>
    %1216 = vector.broadcast %1203 : f32 to vector<8x128xf32>
    %1217 = arith.mulf %1216, %10 : vector<8x128xf32>
    %1218 = vector.broadcast %1206 : f32 to vector<8x128xf32>
    %1219 = arith.mulf %1218, %12 : vector<8x128xf32>
    %1220 = arith.addf %1217, %1219 : vector<8x128xf32>
    %1221 = vector.broadcast %1209 : f32 to vector<8x128xf32>
    %1222 = arith.mulf %1221, %11 : vector<8x128xf32>
    %1223 = arith.addf %1220, %1222 : vector<8x128xf32>
    %1224 = vector.broadcast %1212 : f32 to vector<8x128xf32>
    %1225 = arith.addf %0, %1224 : vector<8x128xf32>
    %1226 = vector.broadcast %1215 : f32 to vector<8x128xf32>
    %1227 = arith.addf %1, %1226 : vector<8x128xf32>
    %cst_460 = arith.constant 0.000000e+00 : f32
    %1228 = vector.broadcast %cst_460 : f32 to vector<8x128xf32>
    %1229 = arith.cmpf oge, %1225, %1228 : vector<8x128xf32>
    %cst_461 = arith.constant 3.100000e+01 : f32
    %1230 = vector.broadcast %cst_461 : f32 to vector<8x128xf32>
    %1231 = arith.cmpf ole, %1225, %1230 : vector<8x128xf32>
    %1232 = arith.andi %1229, %1231 : vector<8x128xi1>
    %cst_462 = arith.constant -1.000000e+00 : f32
    %1233 = vector.broadcast %cst_462 : f32 to vector<8x128xf32>
    %1234 = arith.cmpf oge, %1225, %1233 : vector<8x128xf32>
    %cst_463 = arith.constant 3.000000e+01 : f32
    %1235 = vector.broadcast %cst_463 : f32 to vector<8x128xf32>
    %1236 = arith.cmpf ole, %1225, %1235 : vector<8x128xf32>
    %1237 = arith.andi %1234, %1236 : vector<8x128xi1>
    %cst_464 = arith.constant 0.000000e+00 : f32
    %1238 = vector.broadcast %cst_464 : f32 to vector<8x128xf32>
    %1239 = arith.cmpf oge, %1227, %1238 : vector<8x128xf32>
    %cst_465 = arith.constant 3.100000e+01 : f32
    %1240 = vector.broadcast %cst_465 : f32 to vector<8x128xf32>
    %1241 = arith.cmpf ole, %1227, %1240 : vector<8x128xf32>
    %1242 = arith.andi %1239, %1241 : vector<8x128xi1>
    %cst_466 = arith.constant -1.000000e+00 : f32
    %1243 = vector.broadcast %cst_466 : f32 to vector<8x128xf32>
    %1244 = arith.cmpf oge, %1227, %1243 : vector<8x128xf32>
    %cst_467 = arith.constant 3.000000e+01 : f32
    %1245 = vector.broadcast %cst_467 : f32 to vector<8x128xf32>
    %1246 = arith.cmpf ole, %1227, %1245 : vector<8x128xf32>
    %1247 = arith.andi %1244, %1246 : vector<8x128xi1>
    %c5_i32_468 = arith.constant 5 : i32
    %1248 = arith.addi %1200, %c5_i32_468 : i32
    %c0_i32_469 = arith.constant 0 : i32
    %1249 = arith.addi %1248, %c0_i32_469 : i32
    %c0_i32_470 = arith.constant 0 : i32
    %1250 = arith.addi %1249, %c0_i32_470 : i32
    %1251 = arith.index_cast %1250 : i32 to index
    %1252 = memref.load %arg2[%1251] : memref<160xf32, #tpu.memory_space<smem>>
    %c5_i32_471 = arith.constant 5 : i32
    %1253 = arith.addi %1200, %c5_i32_471 : i32
    %c0_i32_472 = arith.constant 0 : i32
    %1254 = arith.addi %1253, %c0_i32_472 : i32
    %c1_i32_473 = arith.constant 1 : i32
    %1255 = arith.addi %1254, %c1_i32_473 : i32
    %1256 = arith.index_cast %1255 : i32 to index
    %1257 = memref.load %arg2[%1256] : memref<160xf32, #tpu.memory_space<smem>>
    %c5_i32_474 = arith.constant 5 : i32
    %1258 = arith.addi %1200, %c5_i32_474 : i32
    %c0_i32_475 = arith.constant 0 : i32
    %1259 = arith.addi %1258, %c0_i32_475 : i32
    %c2_i32_476 = arith.constant 2 : i32
    %1260 = arith.addi %1259, %c2_i32_476 : i32
    %1261 = arith.index_cast %1260 : i32 to index
    %1262 = memref.load %arg2[%1261] : memref<160xf32, #tpu.memory_space<smem>>
    %1263 = vector.broadcast %1252 : f32 to vector<8x128xf32>
    %1264 = arith.mulf %1263, %5 : vector<8x128xf32>
    %1265 = vector.broadcast %1257 : f32 to vector<8x128xf32>
    %1266 = arith.mulf %1265, %9 : vector<8x128xf32>
    %1267 = arith.addf %1264, %1266 : vector<8x128xf32>
    %1268 = vector.broadcast %1262 : f32 to vector<8x128xf32>
    %1269 = arith.addf %1267, %1268 : vector<8x128xf32>
    %1270 = arith.addf %1223, %1269 : vector<8x128xf32>
    %1271 = arith.andi %1232, %1242 : vector<8x128xi1>
    %1272 = vector.broadcast %cst_7 : f32 to vector<8x128xf32>
    %1273 = arith.select %1271, %1270, %1272 : vector<8x128xi1>, vector<8x128xf32>
    %1274 = math.exp %1273 : vector<8x128xf32>
    %c5_i32_477 = arith.constant 5 : i32
    %1275 = arith.addi %1200, %c5_i32_477 : i32
    %c3_i32_478 = arith.constant 3 : i32
    %1276 = arith.addi %1275, %c3_i32_478 : i32
    %c0_i32_479 = arith.constant 0 : i32
    %1277 = arith.addi %1276, %c0_i32_479 : i32
    %1278 = arith.index_cast %1277 : i32 to index
    %1279 = memref.load %arg2[%1278] : memref<160xf32, #tpu.memory_space<smem>>
    %c5_i32_480 = arith.constant 5 : i32
    %1280 = arith.addi %1200, %c5_i32_480 : i32
    %c3_i32_481 = arith.constant 3 : i32
    %1281 = arith.addi %1280, %c3_i32_481 : i32
    %c1_i32_482 = arith.constant 1 : i32
    %1282 = arith.addi %1281, %c1_i32_482 : i32
    %1283 = arith.index_cast %1282 : i32 to index
    %1284 = memref.load %arg2[%1283] : memref<160xf32, #tpu.memory_space<smem>>
    %c5_i32_483 = arith.constant 5 : i32
    %1285 = arith.addi %1200, %c5_i32_483 : i32
    %c3_i32_484 = arith.constant 3 : i32
    %1286 = arith.addi %1285, %c3_i32_484 : i32
    %c2_i32_485 = arith.constant 2 : i32
    %1287 = arith.addi %1286, %c2_i32_485 : i32
    %1288 = arith.index_cast %1287 : i32 to index
    %1289 = memref.load %arg2[%1288] : memref<160xf32, #tpu.memory_space<smem>>
    %1290 = vector.broadcast %1279 : f32 to vector<8x128xf32>
    %1291 = arith.mulf %1290, %5 : vector<8x128xf32>
    %1292 = vector.broadcast %1284 : f32 to vector<8x128xf32>
    %1293 = arith.mulf %1292, %9 : vector<8x128xf32>
    %1294 = arith.addf %1291, %1293 : vector<8x128xf32>
    %1295 = vector.broadcast %1289 : f32 to vector<8x128xf32>
    %1296 = arith.addf %1294, %1295 : vector<8x128xf32>
    %1297 = arith.addf %1223, %1296 : vector<8x128xf32>
    %1298 = arith.andi %1232, %1247 : vector<8x128xi1>
    %1299 = vector.broadcast %cst_7 : f32 to vector<8x128xf32>
    %1300 = arith.select %1298, %1297, %1299 : vector<8x128xi1>, vector<8x128xf32>
    %1301 = math.exp %1300 : vector<8x128xf32>
    %1302 = arith.addf %1274, %1301 : vector<8x128xf32>
    %c5_i32_486 = arith.constant 5 : i32
    %1303 = arith.addi %1200, %c5_i32_486 : i32
    %c6_i32_487 = arith.constant 6 : i32
    %1304 = arith.addi %1303, %c6_i32_487 : i32
    %c0_i32_488 = arith.constant 0 : i32
    %1305 = arith.addi %1304, %c0_i32_488 : i32
    %1306 = arith.index_cast %1305 : i32 to index
    %1307 = memref.load %arg2[%1306] : memref<160xf32, #tpu.memory_space<smem>>
    %c5_i32_489 = arith.constant 5 : i32
    %1308 = arith.addi %1200, %c5_i32_489 : i32
    %c6_i32_490 = arith.constant 6 : i32
    %1309 = arith.addi %1308, %c6_i32_490 : i32
    %c1_i32_491 = arith.constant 1 : i32
    %1310 = arith.addi %1309, %c1_i32_491 : i32
    %1311 = arith.index_cast %1310 : i32 to index
    %1312 = memref.load %arg2[%1311] : memref<160xf32, #tpu.memory_space<smem>>
    %c5_i32_492 = arith.constant 5 : i32
    %1313 = arith.addi %1200, %c5_i32_492 : i32
    %c6_i32_493 = arith.constant 6 : i32
    %1314 = arith.addi %1313, %c6_i32_493 : i32
    %c2_i32_494 = arith.constant 2 : i32
    %1315 = arith.addi %1314, %c2_i32_494 : i32
    %1316 = arith.index_cast %1315 : i32 to index
    %1317 = memref.load %arg2[%1316] : memref<160xf32, #tpu.memory_space<smem>>
    %1318 = vector.broadcast %1307 : f32 to vector<8x128xf32>
    %1319 = arith.mulf %1318, %5 : vector<8x128xf32>
    %1320 = vector.broadcast %1312 : f32 to vector<8x128xf32>
    %1321 = arith.mulf %1320, %9 : vector<8x128xf32>
    %1322 = arith.addf %1319, %1321 : vector<8x128xf32>
    %1323 = vector.broadcast %1317 : f32 to vector<8x128xf32>
    %1324 = arith.addf %1322, %1323 : vector<8x128xf32>
    %1325 = arith.addf %1223, %1324 : vector<8x128xf32>
    %1326 = arith.andi %1237, %1242 : vector<8x128xi1>
    %1327 = vector.broadcast %cst_7 : f32 to vector<8x128xf32>
    %1328 = arith.select %1326, %1325, %1327 : vector<8x128xi1>, vector<8x128xf32>
    %1329 = math.exp %1328 : vector<8x128xf32>
    %1330 = arith.addf %1302, %1329 : vector<8x128xf32>
    %c5_i32_495 = arith.constant 5 : i32
    %1331 = arith.addi %1200, %c5_i32_495 : i32
    %c9_i32_496 = arith.constant 9 : i32
    %1332 = arith.addi %1331, %c9_i32_496 : i32
    %c0_i32_497 = arith.constant 0 : i32
    %1333 = arith.addi %1332, %c0_i32_497 : i32
    %1334 = arith.index_cast %1333 : i32 to index
    %1335 = memref.load %arg2[%1334] : memref<160xf32, #tpu.memory_space<smem>>
    %c5_i32_498 = arith.constant 5 : i32
    %1336 = arith.addi %1200, %c5_i32_498 : i32
    %c9_i32_499 = arith.constant 9 : i32
    %1337 = arith.addi %1336, %c9_i32_499 : i32
    %c1_i32_500 = arith.constant 1 : i32
    %1338 = arith.addi %1337, %c1_i32_500 : i32
    %1339 = arith.index_cast %1338 : i32 to index
    %1340 = memref.load %arg2[%1339] : memref<160xf32, #tpu.memory_space<smem>>
    %c5_i32_501 = arith.constant 5 : i32
    %1341 = arith.addi %1200, %c5_i32_501 : i32
    %c9_i32_502 = arith.constant 9 : i32
    %1342 = arith.addi %1341, %c9_i32_502 : i32
    %c2_i32_503 = arith.constant 2 : i32
    %1343 = arith.addi %1342, %c2_i32_503 : i32
    %1344 = arith.index_cast %1343 : i32 to index
    %1345 = memref.load %arg2[%1344] : memref<160xf32, #tpu.memory_space<smem>>
    %1346 = vector.broadcast %1335 : f32 to vector<8x128xf32>
    %1347 = arith.mulf %1346, %5 : vector<8x128xf32>
    %1348 = vector.broadcast %1340 : f32 to vector<8x128xf32>
    %1349 = arith.mulf %1348, %9 : vector<8x128xf32>
    %1350 = arith.addf %1347, %1349 : vector<8x128xf32>
    %1351 = vector.broadcast %1345 : f32 to vector<8x128xf32>
    %1352 = arith.addf %1350, %1351 : vector<8x128xf32>
    %1353 = arith.addf %1223, %1352 : vector<8x128xf32>
    %1354 = arith.andi %1237, %1247 : vector<8x128xi1>
    %1355 = vector.broadcast %cst_7 : f32 to vector<8x128xf32>
    %1356 = arith.select %1354, %1353, %1355 : vector<8x128xi1>, vector<8x128xf32>
    %1357 = math.exp %1356 : vector<8x128xf32>
    %1358 = arith.addf %1330, %1357 : vector<8x128xf32>
    %c17_i32_504 = arith.constant 17 : i32
    %1359 = arith.addi %1200, %c17_i32_504 : i32
    %c0_i32_505 = arith.constant 0 : i32
    %1360 = arith.addi %1359, %c0_i32_505 : i32
    %1361 = arith.index_cast %1360 : i32 to index
    %1362 = memref.load %arg2[%1361] : memref<160xf32, #tpu.memory_space<smem>>
    %c0_506 = arith.constant 0 : index
    %c0_507 = arith.constant 0 : index
    %c0_508 = arith.constant 0 : index
    %1363 = vector.load %arg5[%c0_506, %c0_507, %c0_508] : memref<3x8x128xf32, #tpu.memory_space<vmem>>, vector<1x8x128xf32>
    %1364 = vector.shape_cast %1363 : vector<1x8x128xf32> to vector<8x128xf32>
    %1365 = vector.broadcast %1362 : f32 to vector<8x128xf32>
    %1366 = arith.mulf %1365, %1358 : vector<8x128xf32>
    %1367 = arith.addf %1364, %1366 : vector<8x128xf32>
    %c0_509 = arith.constant 0 : index
    %c0_510 = arith.constant 0 : index
    %c0_511 = arith.constant 0 : index
    %1368 = vector.load %arg5[%c0_509, %c0_510, %c0_511] : memref<3x8x128xf32, #tpu.memory_space<vmem>>, vector<1x8x128xf32>
    %1369 = vector.shape_cast %1368 : vector<1x8x128xf32> to vector<8x128xf32>
    %1370 = vector.shape_cast %1367 : vector<8x128xf32> to vector<1x8x128xf32>
    tpu.vector_store %arg5[%c0_509, %c0_510, %c0_511], %1370 {strides = array<i32>} : memref<3x8x128xf32, #tpu.memory_space<vmem>>, vector<1x8x128xf32>,
    %c17_i32_512 = arith.constant 17 : i32
    %1371 = arith.addi %1200, %c17_i32_512 : i32
    %c1_i32_513 = arith.constant 1 : i32
    %1372 = arith.addi %1371, %c1_i32_513 : i32
    %1373 = arith.index_cast %1372 : i32 to index
    %1374 = memref.load %arg2[%1373] : memref<160xf32, #tpu.memory_space<smem>>
    %c1_514 = arith.constant 1 : index
    %c0_515 = arith.constant 0 : index
    %c0_516 = arith.constant 0 : index
    %1375 = vector.load %arg5[%c1_514, %c0_515, %c0_516] : memref<3x8x128xf32, #tpu.memory_space<vmem>>, vector<1x8x128xf32>
    %1376 = vector.shape_cast %1375 : vector<1x8x128xf32> to vector<8x128xf32>
    %1377 = vector.broadcast %1374 : f32 to vector<8x128xf32>
    %1378 = arith.mulf %1377, %1358 : vector<8x128xf32>
    %1379 = arith.addf %1376, %1378 : vector<8x128xf32>
    %c1_517 = arith.constant 1 : index
    %c0_518 = arith.constant 0 : index
    %c0_519 = arith.constant 0 : index
    %1380 = vector.load %arg5[%c1_517, %c0_518, %c0_519] : memref<3x8x128xf32, #tpu.memory_space<vmem>>, vector<1x8x128xf32>
    %1381 = vector.shape_cast %1380 : vector<1x8x128xf32> to vector<8x128xf32>
    %1382 = vector.shape_cast %1379 : vector<8x128xf32> to vector<1x8x128xf32>
    tpu.vector_store %arg5[%c1_517, %c0_518, %c0_519], %1382 {strides = array<i32>} : memref<3x8x128xf32, #tpu.memory_space<vmem>>, vector<1x8x128xf32>,
    %c17_i32_520 = arith.constant 17 : i32
    %1383 = arith.addi %1200, %c17_i32_520 : i32
    %c2_i32_521 = arith.constant 2 : i32
    %1384 = arith.addi %1383, %c2_i32_521 : i32
    %1385 = arith.index_cast %1384 : i32 to index
    %1386 = memref.load %arg2[%1385] : memref<160xf32, #tpu.memory_space<smem>>
    %c2_522 = arith.constant 2 : index
    %c0_523 = arith.constant 0 : index
    %c0_524 = arith.constant 0 : index
    %1387 = vector.load %arg5[%c2_522, %c0_523, %c0_524] : memref<3x8x128xf32, #tpu.memory_space<vmem>>, vector<1x8x128xf32>
    %1388 = vector.shape_cast %1387 : vector<1x8x128xf32> to vector<8x128xf32>
    %1389 = vector.broadcast %1386 : f32 to vector<8x128xf32>
    %1390 = arith.mulf %1389, %1358 : vector<8x128xf32>
    %1391 = arith.addf %1388, %1390 : vector<8x128xf32>
    %c2_525 = arith.constant 2 : index
    %c0_526 = arith.constant 0 : index
    %c0_527 = arith.constant 0 : index
    %1392 = vector.load %arg5[%c2_525, %c0_526, %c0_527] : memref<3x8x128xf32, #tpu.memory_space<vmem>>, vector<1x8x128xf32>
    %1393 = vector.shape_cast %1392 : vector<1x8x128xf32> to vector<8x128xf32>
    %1394 = vector.shape_cast %1391 : vector<8x128xf32> to vector<1x8x128xf32>
    tpu.vector_store %arg5[%c2_525, %c0_526, %c0_527], %1394 {strides = array<i32>} : memref<3x8x128xf32, #tpu.memory_space<vmem>>, vector<1x8x128xf32>,
    %c7_i32 = arith.constant 7 : i32
    %c8_i32_528 = arith.constant 8 : i32
    %1395 = arith.muli %arg1, %c8_i32_528 : i32
    %1396 = arith.addi %1395, %c7_i32 : i32
    %c20_i32_529 = arith.constant 20 : i32
    %1397 = arith.muli %1396, %c20_i32_529 : i32
    %c0_i32_530 = arith.constant 0 : i32
    %1398 = arith.addi %1397, %c0_i32_530 : i32
    %1399 = arith.index_cast %1398 : i32 to index
    %1400 = memref.load %arg2[%1399] : memref<160xf32, #tpu.memory_space<smem>>
    %c1_i32_531 = arith.constant 1 : i32
    %1401 = arith.addi %1397, %c1_i32_531 : i32
    %1402 = arith.index_cast %1401 : i32 to index
    %1403 = memref.load %arg2[%1402] : memref<160xf32, #tpu.memory_space<smem>>
    %c2_i32_532 = arith.constant 2 : i32
    %1404 = arith.addi %1397, %c2_i32_532 : i32
    %1405 = arith.index_cast %1404 : i32 to index
    %1406 = memref.load %arg2[%1405] : memref<160xf32, #tpu.memory_space<smem>>
    %c3_i32_533 = arith.constant 3 : i32
    %1407 = arith.addi %1397, %c3_i32_533 : i32
    %1408 = arith.index_cast %1407 : i32 to index
    %1409 = memref.load %arg2[%1408] : memref<160xf32, #tpu.memory_space<smem>>
    %c4_i32_534 = arith.constant 4 : i32
    %1410 = arith.addi %1397, %c4_i32_534 : i32
    %1411 = arith.index_cast %1410 : i32 to index
    %1412 = memref.load %arg2[%1411] : memref<160xf32, #tpu.memory_space<smem>>
    %1413 = vector.broadcast %1400 : f32 to vector<8x128xf32>
    %1414 = arith.mulf %1413, %10 : vector<8x128xf32>
    %1415 = vector.broadcast %1403 : f32 to vector<8x128xf32>
    %1416 = arith.mulf %1415, %12 : vector<8x128xf32>
    %1417 = arith.addf %1414, %1416 : vector<8x128xf32>
    %1418 = vector.broadcast %1406 : f32 to vector<8x128xf32>
    %1419 = arith.mulf %1418, %11 : vector<8x128xf32>
    %1420 = arith.addf %1417, %1419 : vector<8x128xf32>
    %1421 = vector.broadcast %1409 : f32 to vector<8x128xf32>
    %1422 = arith.addf %0, %1421 : vector<8x128xf32>
    %1423 = vector.broadcast %1412 : f32 to vector<8x128xf32>
    %1424 = arith.addf %1, %1423 : vector<8x128xf32>
    %cst_535 = arith.constant 0.000000e+00 : f32
    %1425 = vector.broadcast %cst_535 : f32 to vector<8x128xf32>
    %1426 = arith.cmpf oge, %1422, %1425 : vector<8x128xf32>
    %cst_536 = arith.constant 3.100000e+01 : f32
    %1427 = vector.broadcast %cst_536 : f32 to vector<8x128xf32>
    %1428 = arith.cmpf ole, %1422, %1427 : vector<8x128xf32>
    %1429 = arith.andi %1426, %1428 : vector<8x128xi1>
    %cst_537 = arith.constant -1.000000e+00 : f32
    %1430 = vector.broadcast %cst_537 : f32 to vector<8x128xf32>
    %1431 = arith.cmpf oge, %1422, %1430 : vector<8x128xf32>
    %cst_538 = arith.constant 3.000000e+01 : f32
    %1432 = vector.broadcast %cst_538 : f32 to vector<8x128xf32>
    %1433 = arith.cmpf ole, %1422, %1432 : vector<8x128xf32>
    %1434 = arith.andi %1431, %1433 : vector<8x128xi1>
    %cst_539 = arith.constant 0.000000e+00 : f32
    %1435 = vector.broadcast %cst_539 : f32 to vector<8x128xf32>
    %1436 = arith.cmpf oge, %1424, %1435 : vector<8x128xf32>
    %cst_540 = arith.constant 3.100000e+01 : f32
    %1437 = vector.broadcast %cst_540 : f32 to vector<8x128xf32>
    %1438 = arith.cmpf ole, %1424, %1437 : vector<8x128xf32>
    %1439 = arith.andi %1436, %1438 : vector<8x128xi1>
    %cst_541 = arith.constant -1.000000e+00 : f32
    %1440 = vector.broadcast %cst_541 : f32 to vector<8x128xf32>
    %1441 = arith.cmpf oge, %1424, %1440 : vector<8x128xf32>
    %cst_542 = arith.constant 3.000000e+01 : f32
    %1442 = vector.broadcast %cst_542 : f32 to vector<8x128xf32>
    %1443 = arith.cmpf ole, %1424, %1442 : vector<8x128xf32>
    %1444 = arith.andi %1441, %1443 : vector<8x128xi1>
    %c5_i32_543 = arith.constant 5 : i32
    %1445 = arith.addi %1397, %c5_i32_543 : i32
    %c0_i32_544 = arith.constant 0 : i32
    %1446 = arith.addi %1445, %c0_i32_544 : i32
    %c0_i32_545 = arith.constant 0 : i32
    %1447 = arith.addi %1446, %c0_i32_545 : i32
    %1448 = arith.index_cast %1447 : i32 to index
    %1449 = memref.load %arg2[%1448] : memref<160xf32, #tpu.memory_space<smem>>
    %c5_i32_546 = arith.constant 5 : i32
    %1450 = arith.addi %1397, %c5_i32_546 : i32
    %c0_i32_547 = arith.constant 0 : i32
    %1451 = arith.addi %1450, %c0_i32_547 : i32
    %c1_i32_548 = arith.constant 1 : i32
    %1452 = arith.addi %1451, %c1_i32_548 : i32
    %1453 = arith.index_cast %1452 : i32 to index
    %1454 = memref.load %arg2[%1453] : memref<160xf32, #tpu.memory_space<smem>>
    %c5_i32_549 = arith.constant 5 : i32
    %1455 = arith.addi %1397, %c5_i32_549 : i32
    %c0_i32_550 = arith.constant 0 : i32
    %1456 = arith.addi %1455, %c0_i32_550 : i32
    %c2_i32_551 = arith.constant 2 : i32
    %1457 = arith.addi %1456, %c2_i32_551 : i32
    %1458 = arith.index_cast %1457 : i32 to index
    %1459 = memref.load %arg2[%1458] : memref<160xf32, #tpu.memory_space<smem>>
    %1460 = vector.broadcast %1449 : f32 to vector<8x128xf32>
    %1461 = arith.mulf %1460, %5 : vector<8x128xf32>
    %1462 = vector.broadcast %1454 : f32 to vector<8x128xf32>
    %1463 = arith.mulf %1462, %9 : vector<8x128xf32>
    %1464 = arith.addf %1461, %1463 : vector<8x128xf32>
    %1465 = vector.broadcast %1459 : f32 to vector<8x128xf32>
    %1466 = arith.addf %1464, %1465 : vector<8x128xf32>
    %1467 = arith.addf %1420, %1466 : vector<8x128xf32>
    %1468 = arith.andi %1429, %1439 : vector<8x128xi1>
    %1469 = vector.broadcast %cst_7 : f32 to vector<8x128xf32>
    %1470 = arith.select %1468, %1467, %1469 : vector<8x128xi1>, vector<8x128xf32>
    %1471 = math.exp %1470 : vector<8x128xf32>
    %c5_i32_552 = arith.constant 5 : i32
    %1472 = arith.addi %1397, %c5_i32_552 : i32
    %c3_i32_553 = arith.constant 3 : i32
    %1473 = arith.addi %1472, %c3_i32_553 : i32
    %c0_i32_554 = arith.constant 0 : i32
    %1474 = arith.addi %1473, %c0_i32_554 : i32
    %1475 = arith.index_cast %1474 : i32 to index
    %1476 = memref.load %arg2[%1475] : memref<160xf32, #tpu.memory_space<smem>>
    %c5_i32_555 = arith.constant 5 : i32
    %1477 = arith.addi %1397, %c5_i32_555 : i32
    %c3_i32_556 = arith.constant 3 : i32
    %1478 = arith.addi %1477, %c3_i32_556 : i32
    %c1_i32_557 = arith.constant 1 : i32
    %1479 = arith.addi %1478, %c1_i32_557 : i32
    %1480 = arith.index_cast %1479 : i32 to index
    %1481 = memref.load %arg2[%1480] : memref<160xf32, #tpu.memory_space<smem>>
    %c5_i32_558 = arith.constant 5 : i32
    %1482 = arith.addi %1397, %c5_i32_558 : i32
    %c3_i32_559 = arith.constant 3 : i32
    %1483 = arith.addi %1482, %c3_i32_559 : i32
    %c2_i32_560 = arith.constant 2 : i32
    %1484 = arith.addi %1483, %c2_i32_560 : i32
    %1485 = arith.index_cast %1484 : i32 to index
    %1486 = memref.load %arg2[%1485] : memref<160xf32, #tpu.memory_space<smem>>
    %1487 = vector.broadcast %1476 : f32 to vector<8x128xf32>
    %1488 = arith.mulf %1487, %5 : vector<8x128xf32>
    %1489 = vector.broadcast %1481 : f32 to vector<8x128xf32>
    %1490 = arith.mulf %1489, %9 : vector<8x128xf32>
    %1491 = arith.addf %1488, %1490 : vector<8x128xf32>
    %1492 = vector.broadcast %1486 : f32 to vector<8x128xf32>
    %1493 = arith.addf %1491, %1492 : vector<8x128xf32>
    %1494 = arith.addf %1420, %1493 : vector<8x128xf32>
    %1495 = arith.andi %1429, %1444 : vector<8x128xi1>
    %1496 = vector.broadcast %cst_7 : f32 to vector<8x128xf32>
    %1497 = arith.select %1495, %1494, %1496 : vector<8x128xi1>, vector<8x128xf32>
    %1498 = math.exp %1497 : vector<8x128xf32>
    %1499 = arith.addf %1471, %1498 : vector<8x128xf32>
    %c5_i32_561 = arith.constant 5 : i32
    %1500 = arith.addi %1397, %c5_i32_561 : i32
    %c6_i32_562 = arith.constant 6 : i32
    %1501 = arith.addi %1500, %c6_i32_562 : i32
    %c0_i32_563 = arith.constant 0 : i32
    %1502 = arith.addi %1501, %c0_i32_563 : i32
    %1503 = arith.index_cast %1502 : i32 to index
    %1504 = memref.load %arg2[%1503] : memref<160xf32, #tpu.memory_space<smem>>
    %c5_i32_564 = arith.constant 5 : i32
    %1505 = arith.addi %1397, %c5_i32_564 : i32
    %c6_i32_565 = arith.constant 6 : i32
    %1506 = arith.addi %1505, %c6_i32_565 : i32
    %c1_i32_566 = arith.constant 1 : i32
    %1507 = arith.addi %1506, %c1_i32_566 : i32
    %1508 = arith.index_cast %1507 : i32 to index
    %1509 = memref.load %arg2[%1508] : memref<160xf32, #tpu.memory_space<smem>>
    %c5_i32_567 = arith.constant 5 : i32
    %1510 = arith.addi %1397, %c5_i32_567 : i32
    %c6_i32_568 = arith.constant 6 : i32
    %1511 = arith.addi %1510, %c6_i32_568 : i32
    %c2_i32_569 = arith.constant 2 : i32
    %1512 = arith.addi %1511, %c2_i32_569 : i32
    %1513 = arith.index_cast %1512 : i32 to index
    %1514 = memref.load %arg2[%1513] : memref<160xf32, #tpu.memory_space<smem>>
    %1515 = vector.broadcast %1504 : f32 to vector<8x128xf32>
    %1516 = arith.mulf %1515, %5 : vector<8x128xf32>
    %1517 = vector.broadcast %1509 : f32 to vector<8x128xf32>
    %1518 = arith.mulf %1517, %9 : vector<8x128xf32>
    %1519 = arith.addf %1516, %1518 : vector<8x128xf32>
    %1520 = vector.broadcast %1514 : f32 to vector<8x128xf32>
    %1521 = arith.addf %1519, %1520 : vector<8x128xf32>
    %1522 = arith.addf %1420, %1521 : vector<8x128xf32>
    %1523 = arith.andi %1434, %1439 : vector<8x128xi1>
    %1524 = vector.broadcast %cst_7 : f32 to vector<8x128xf32>
    %1525 = arith.select %1523, %1522, %1524 : vector<8x128xi1>, vector<8x128xf32>
    %1526 = math.exp %1525 : vector<8x128xf32>
    %1527 = arith.addf %1499, %1526 : vector<8x128xf32>
    %c5_i32_570 = arith.constant 5 : i32
    %1528 = arith.addi %1397, %c5_i32_570 : i32
    %c9_i32_571 = arith.constant 9 : i32
    %1529 = arith.addi %1528, %c9_i32_571 : i32
    %c0_i32_572 = arith.constant 0 : i32
    %1530 = arith.addi %1529, %c0_i32_572 : i32
    %1531 = arith.index_cast %1530 : i32 to index
    %1532 = memref.load %arg2[%1531] : memref<160xf32, #tpu.memory_space<smem>>
    %c5_i32_573 = arith.constant 5 : i32
    %1533 = arith.addi %1397, %c5_i32_573 : i32
    %c9_i32_574 = arith.constant 9 : i32
    %1534 = arith.addi %1533, %c9_i32_574 : i32
    %c1_i32_575 = arith.constant 1 : i32
    %1535 = arith.addi %1534, %c1_i32_575 : i32
    %1536 = arith.index_cast %1535 : i32 to index
    %1537 = memref.load %arg2[%1536] : memref<160xf32, #tpu.memory_space<smem>>
    %c5_i32_576 = arith.constant 5 : i32
    %1538 = arith.addi %1397, %c5_i32_576 : i32
    %c9_i32_577 = arith.constant 9 : i32
    %1539 = arith.addi %1538, %c9_i32_577 : i32
    %c2_i32_578 = arith.constant 2 : i32
    %1540 = arith.addi %1539, %c2_i32_578 : i32
    %1541 = arith.index_cast %1540 : i32 to index
    %1542 = memref.load %arg2[%1541] : memref<160xf32, #tpu.memory_space<smem>>
    %1543 = vector.broadcast %1532 : f32 to vector<8x128xf32>
    %1544 = arith.mulf %1543, %5 : vector<8x128xf32>
    %1545 = vector.broadcast %1537 : f32 to vector<8x128xf32>
    %1546 = arith.mulf %1545, %9 : vector<8x128xf32>
    %1547 = arith.addf %1544, %1546 : vector<8x128xf32>
    %1548 = vector.broadcast %1542 : f32 to vector<8x128xf32>
    %1549 = arith.addf %1547, %1548 : vector<8x128xf32>
    %1550 = arith.addf %1420, %1549 : vector<8x128xf32>
    %1551 = arith.andi %1434, %1444 : vector<8x128xi1>
    %1552 = vector.broadcast %cst_7 : f32 to vector<8x128xf32>
    %1553 = arith.select %1551, %1550, %1552 : vector<8x128xi1>, vector<8x128xf32>
    %1554 = math.exp %1553 : vector<8x128xf32>
    %1555 = arith.addf %1527, %1554 : vector<8x128xf32>
    %c17_i32_579 = arith.constant 17 : i32
    %1556 = arith.addi %1397, %c17_i32_579 : i32
    %c0_i32_580 = arith.constant 0 : i32
    %1557 = arith.addi %1556, %c0_i32_580 : i32
    %1558 = arith.index_cast %1557 : i32 to index
    %1559 = memref.load %arg2[%1558] : memref<160xf32, #tpu.memory_space<smem>>
    %c0_581 = arith.constant 0 : index
    %c0_582 = arith.constant 0 : index
    %c0_583 = arith.constant 0 : index
    %1560 = vector.load %arg5[%c0_581, %c0_582, %c0_583] : memref<3x8x128xf32, #tpu.memory_space<vmem>>, vector<1x8x128xf32>
    %1561 = vector.shape_cast %1560 : vector<1x8x128xf32> to vector<8x128xf32>
    %1562 = vector.broadcast %1559 : f32 to vector<8x128xf32>
    %1563 = arith.mulf %1562, %1555 : vector<8x128xf32>
    %1564 = arith.addf %1561, %1563 : vector<8x128xf32>
    %c0_584 = arith.constant 0 : index
    %c0_585 = arith.constant 0 : index
    %c0_586 = arith.constant 0 : index
    %1565 = vector.load %arg5[%c0_584, %c0_585, %c0_586] : memref<3x8x128xf32, #tpu.memory_space<vmem>>, vector<1x8x128xf32>
    %1566 = vector.shape_cast %1565 : vector<1x8x128xf32> to vector<8x128xf32>
    %1567 = vector.shape_cast %1564 : vector<8x128xf32> to vector<1x8x128xf32>
    tpu.vector_store %arg5[%c0_584, %c0_585, %c0_586], %1567 {strides = array<i32>} : memref<3x8x128xf32, #tpu.memory_space<vmem>>, vector<1x8x128xf32>,
    %c17_i32_587 = arith.constant 17 : i32
    %1568 = arith.addi %1397, %c17_i32_587 : i32
    %c1_i32_588 = arith.constant 1 : i32
    %1569 = arith.addi %1568, %c1_i32_588 : i32
    %1570 = arith.index_cast %1569 : i32 to index
    %1571 = memref.load %arg2[%1570] : memref<160xf32, #tpu.memory_space<smem>>
    %c1_589 = arith.constant 1 : index
    %c0_590 = arith.constant 0 : index
    %c0_591 = arith.constant 0 : index
    %1572 = vector.load %arg5[%c1_589, %c0_590, %c0_591] : memref<3x8x128xf32, #tpu.memory_space<vmem>>, vector<1x8x128xf32>
    %1573 = vector.shape_cast %1572 : vector<1x8x128xf32> to vector<8x128xf32>
    %1574 = vector.broadcast %1571 : f32 to vector<8x128xf32>
    %1575 = arith.mulf %1574, %1555 : vector<8x128xf32>
    %1576 = arith.addf %1573, %1575 : vector<8x128xf32>
    %c1_592 = arith.constant 1 : index
    %c0_593 = arith.constant 0 : index
    %c0_594 = arith.constant 0 : index
    %1577 = vector.load %arg5[%c1_592, %c0_593, %c0_594] : memref<3x8x128xf32, #tpu.memory_space<vmem>>, vector<1x8x128xf32>
    %1578 = vector.shape_cast %1577 : vector<1x8x128xf32> to vector<8x128xf32>
    %1579 = vector.shape_cast %1576 : vector<8x128xf32> to vector<1x8x128xf32>
    tpu.vector_store %arg5[%c1_592, %c0_593, %c0_594], %1579 {strides = array<i32>} : memref<3x8x128xf32, #tpu.memory_space<vmem>>, vector<1x8x128xf32>,
    %c17_i32_595 = arith.constant 17 : i32
    %1580 = arith.addi %1397, %c17_i32_595 : i32
    %c2_i32_596 = arith.constant 2 : i32
    %1581 = arith.addi %1580, %c2_i32_596 : i32
    %1582 = arith.index_cast %1581 : i32 to index
    %1583 = memref.load %arg2[%1582] : memref<160xf32, #tpu.memory_space<smem>>
    %c2_597 = arith.constant 2 : index
    %c0_598 = arith.constant 0 : index
    %c0_599 = arith.constant 0 : index
    %1584 = vector.load %arg5[%c2_597, %c0_598, %c0_599] : memref<3x8x128xf32, #tpu.memory_space<vmem>>, vector<1x8x128xf32>
    %1585 = vector.shape_cast %1584 : vector<1x8x128xf32> to vector<8x128xf32>
    %1586 = vector.broadcast %1583 : f32 to vector<8x128xf32>
    %1587 = arith.mulf %1586, %1555 : vector<8x128xf32>
    %1588 = arith.addf %1585, %1587 : vector<8x128xf32>
    %c2_600 = arith.constant 2 : index
    %c0_601 = arith.constant 0 : index
    %c0_602 = arith.constant 0 : index
    %1589 = vector.load %arg5[%c2_600, %c0_601, %c0_602] : memref<3x8x128xf32, #tpu.memory_space<vmem>>, vector<1x8x128xf32>
    %1590 = vector.shape_cast %1589 : vector<1x8x128xf32> to vector<8x128xf32>
    %1591 = vector.shape_cast %1588 : vector<8x128xf32> to vector<1x8x128xf32>
    tpu.vector_store %arg5[%c2_600, %c0_601, %c0_602], %1591 {strides = array<i32>} : memref<3x8x128xf32, #tpu.memory_space<vmem>>, vector<1x8x128xf32>,
    %c8_i32_603 = arith.constant 8 : i32
    %c0_i32_604 = arith.constant 0 : i32
    %1592 = arith.cmpi eq, %arg1, %c0_i32_604 : i32
    %1593 = arith.extui %1592 : i1 to i32
    %c0_i32_605 = arith.constant 0 : i32
    %1594 = arith.cmpi ne, %1593, %c0_i32_605 : i32
    scf.if %1594 {
      %c0_606 = arith.constant 0 : index
      %c0_607 = arith.constant 0 : index
      %c0_608 = arith.constant 0 : index
      %1595 = vector.load %arg5[%c0_606, %c0_607, %c0_608] : memref<3x8x128xf32, #tpu.memory_space<vmem>>, vector<3x8x128xf32>
      %cst_609 = arith.constant 0.000000e+00 : f32
      %cst_610 = arith.constant 1.000000e+00 : f32
      %1596 = vector.broadcast %cst_609 : f32 to vector<3x8x128xf32>
      %1597 = arith.maximumf %1596, %1595 : vector<3x8x128xf32>
      %1598 = vector.broadcast %cst_610 : f32 to vector<3x8x128xf32>
      %1599 = arith.minimumf %1598, %1597 : vector<3x8x128xf32>
      %c0_611 = arith.constant 0 : index
      %c0_612 = arith.constant 0 : index
      %c0_613 = arith.constant 0 : index
      %1600 = vector.load %arg5[%c0_611, %c0_612, %c0_613] : memref<3x8x128xf32, #tpu.memory_space<vmem>>, vector<3x8x128xf32>
      tpu.vector_store %arg5[%c0_611, %c0_612, %c0_613], %1599 {strides = array<i32>} : memref<3x8x128xf32, #tpu.memory_space<vmem>>, vector<3x8x128xf32>,
    } else {
    }
    return
  }
  func.func @transform_0(%arg0: i32, %arg1: i32) -> i32 {
    %c0_i32 = arith.constant 0 : i32
    %c0_i32_0 = arith.constant 0 : i32
    return %c0_i32 : i32
  }
  func.func @transform_1(%arg0: i32, %arg1: i32) -> (i32, i32) {
    %c0_i32 = arith.constant 0 : i32
    %c0_i32_0 = arith.constant 0 : i32
    return %arg0, %c0_i32 : i32, i32
  }
  func.func @transform_2(%arg0: i32, %arg1: i32) -> (i32, i32) {
    %c0_i32 = arith.constant 0 : i32
    %c0_i32_0 = arith.constant 0 : i32
    return %arg0, %c0_i32 : i32, i32
  }
  func.func @transform_3(%arg0: i32, %arg1: i32) -> (i32, i32, i32) {
    %c0_i32 = arith.constant 0 : i32
    %c0_i32_0 = arith.constant 0 : i32
    %c0_i32_1 = arith.constant 0 : i32
    return %c0_i32, %arg0, %c0_i32_0 : i32, i32, i32
  }
}

</mosaic_0001>

<llo_original>
// kernel: tpu_custom_call.1
$region0: #{tpu_custom_call.1}
  #allocation0 [shape = 'u32[]', space=smem, size = 0x4, offset = 0x4, fixed_abs, tag = 'smem constant byte address 0x4 - core index']
  #allocation1 [shape = 'u32[144,128]{1,0:T(1,128)}', space=vmem, size = 0x12000, scoped, tag = 'internal scratch']
  %s0 = inlined_call_operand.hbm [shape: f32[160], index: 0, kind: input, shape index: {}]
  %s1 = inlined_call_operand.hbm [shape: f32[8,128], index: 1, kind: input, shape index: {}]
  %s2 = inlined_call_operand.hbm [shape: f32[8,128], index: 2, kind: input, shape index: {}]
  %s3 = inlined_call_operand.hbm [shape: f32[3,8,128], index: 3, kind: output, shape index: {}]
  %s4 = sld [smem:[#allocation0]]
  $region42: #{tpu_custom_call.1} parent=0
    _
  %s6 = ssub.s32 1, %s4
  %s7 = scalar_select 0, %s6, %s4
  $region1: #{tpu_custom_call.1} parent=0
    #allocation2 [shape = 'u8[1024]{0}', space=smem, size = 0x400, scoped, tag = 'input window, operand 0, single buffered']
    #allocation3 [shape = 's32[1]{0}', space=sflag, size = 0x4, scoped, tag = 'scoped memory for tpu_custom_call.1']
    #allocation4 [shape = 's32[1]{0}', space=sflag, size = 0x4, scoped, tag = 'scoped memory for tpu_custom_call.1']
    #allocation5 [shape = 's32[1]{0}', space=sflag, size = 0x4, scoped, tag = 'scoped memory for tpu_custom_call.1']
    #allocation6 [shape = 'u8[4096]{0}', space=vmem, size = 0x1000, scoped, tag = 'input window, operand 1, single buffered']
    #allocation7 [shape = 'u8[4096]{0}', space=vmem, size = 0x1000, scoped, tag = 'input window, operand 2, single buffered']
    #allocation8 [shape = 's32[1]{0}', space=sflag, size = 0x4, scoped, tag = 'scoped memory for tpu_custom_call.1']
    #allocation9 [shape = 'u8[12288]{0}', space=vmem, size = 0x3000, scoped, tag = 'output window, operand 0, single buffered']
    %8 = vsyncpa [#allocation5], 0
    %9 = vsyncpa [#allocation3], 0
    %10 = vsyncpa [#allocation8], 0
    %11 = vsyncpa [#allocation4], 0
    // Predicated region
    $region2: #{tpu_custom_call.1} parent=1 // pred_check
      _
    $region3: #{tpu_custom_call.1} parent=1 // pred_check_branch
      %13 = sbr.rel (0) target = $region5
    $region4: #{tpu_custom_call.1} parent=1 // pred_region
      %s15 = ssub.s32 32, 32
      %16 = vsyncadd [#allocation5], %s15
      %19 = dma.hbm_to_smem %s0, 32, [#allocation2], [#allocation5]
    $region5: #{tpu_custom_call.1} parent=1 // pred_fallthru
      _
    // Predicated region
    $region6: #{tpu_custom_call.1} parent=1 // pred_check
      _
    $region7: #{tpu_custom_call.1} parent=1 // pred_check_branch
      %21 = sbr.rel (0) target = $region9
    $region8: #{tpu_custom_call.1} parent=1 // pred_region
      %s23 = ssub.s32 128, 128
      %24 = vsyncadd [#allocation3], %s23
      %s26 = sshll.u32 [#allocation6], 4
      %s27 = int_to_ptr.vmem [resolvable:$true] %s26
      %29 = dma.hbm_to_vmem [thread:$0]  %s1, 128, %s27, [#allocation3]
    $region9: #{tpu_custom_call.1} parent=1 // pred_fallthru
      _
    // Predicated region
    $region10: #{tpu_custom_call.1} parent=1 // pred_check
      _
    $region11: #{tpu_custom_call.1} parent=1 // pred_check_branch
      %31 = sbr.rel (0) target = $region13
    $region12: #{tpu_custom_call.1} parent=1 // pred_region
      %s33 = ssub.s32 128, 128
      %34 = vsyncadd [#allocation8], %s33
      %s36 = sshll.u32 [#allocation7], 4
      %s37 = int_to_ptr.vmem [resolvable:$true] %s36
      %39 = dma.hbm_to_vmem [thread:$0]  %s2, 128, %s37, [#allocation8]
    $region13: #{tpu_custom_call.1} parent=1 // pred_fallthru
      _
    // Predicated region
    $region14: #{tpu_custom_call.1} parent=1 // pred_check
      _
    $region15: #{tpu_custom_call.1} parent=1 // pred_check_branch
      %41 = sbr.rel (0) target = $region17
    $region16: #{tpu_custom_call.1} parent=1 // pred_region
      %42 = dma.done [#allocation5], 32
    $region17: #{tpu_custom_call.1} parent=1 // pred_fallthru
      _
    // Predicated region
    $region18: #{tpu_custom_call.1} parent=1 // pred_check
      _
    $region19: #{tpu_custom_call.1} parent=1 // pred_check_branch
      %44 = sbr.rel (0) target = $region21
    $region20: #{tpu_custom_call.1} parent=1 // pred_region
      %45 = dma.done [#allocation3], 128
    $region21: #{tpu_custom_call.1} parent=1 // pred_fallthru
      _
    // Predicated region
    $region22: #{tpu_custom_call.1} parent=1 // pred_check
      _
    $region23: #{tpu_custom_call.1} parent=1 // pred_check_branch
      %47 = sbr.rel (0) target = $region25
    $region24: #{tpu_custom_call.1} parent=1 // pred_region
      %48 = dma.done [#allocation8], 128
    $region25: #{tpu_custom_call.1} parent=1 // pred_fallthru
      _
    %49 = sfence
    %v50 = vld [vmem:[#allocation6] sm:$0xff]
    %v51 = vld [vmem:[#allocation7] sm:$0xff]
    %v52 = vmul.f32 %v50, 0.32258064
    %v53 = vadd.f32 %v52, -5.0
    %v54 = vmul.f32 %v51, 0.32258064
    %v55 = vadd.f32 %v54, -5.0
    %v56 = vmul.f32 %v53, %v53
    %v57 = vmul.f32 %v55, %v55
    %v58 = vmul.f32 %v53, %v55
    %p59 = scmp.eq.s32.totalorder 0, 0
    // Predicated region
    $region26: #{tpu_custom_call.1} parent=1 // pred_check
      %p60 = pneg %p59
    $region27: #{tpu_custom_call.1} parent=1 // pred_check_branch
      %62 = sbr.rel (%p60) target = $region29
    $region28: #{tpu_custom_call.1} parent=1 // pred_region
      %63 = vst [vmem:[#allocation9] sm:$0xff] 0.0
      %64 = vst [vmem:[#allocation9 + $0x8] sm:$0xff] 0.0
      %65 = vst [vmem:[#allocation9 + $0x10] sm:$0xff] 0.0
    $region29: #{tpu_custom_call.1} parent=1 // pred_fallthru
      _
    %s66 = smul.u32 0, 160
    %s67 = sld [smem:[#allocation2 + %s66]]
    %s68 = sadd.s32 %s66, 1
    %s69 = sld [smem:[#allocation2 + %s68]]
    %s70 = sadd.s32 %s66, 2
    %s71 = sld [smem:[#allocation2 + %s70]]
    %s72 = sadd.s32 %s66, 3
    %s73 = sld [smem:[#allocation2 + %s72]]
    %s74 = sadd.s32 %s66, 4
    %s75 = sld [smem:[#allocation2 + %s74]]
    %v76 = vstv %s67
    %v77 = vmul.f32 %v76, %v56
    %v78 = vstv %s69
    %v79 = vmul.f32 %v78, %v58
    %v80 = vadd.f32 %v77, %v79
    %v81 = vstv %s71
    %v82 = vmul.f32 %v81, %v57
    %v83 = vadd.f32 %v80, %v82
    %v84 = vstv %s73
    %v85 = vadd.f32 %v50, %v84
    %v86 = vstv %s75
    %v87 = vadd.f32 %v51, %v86
    %vm88 = vcmp.ge.f32.partialorder %v85, 0.0
    %vm89 = vcmp.le.f32.partialorder %v85, 31.0
    %vm90 = vmand %vm88, %vm89
    %vm91 = vcmp.ge.f32.partialorder %v85, -1.0
    %vm92 = vcmp.le.f32.partialorder %v85, 30.0
    %vm93 = vmand %vm91, %vm92
    %vm94 = vcmp.ge.f32.partialorder %v87, 0.0
    %vm95 = vcmp.le.f32.partialorder %v87, 31.0
    %vm96 = vmand %vm94, %vm95
    %vm97 = vcmp.ge.f32.partialorder %v87, -1.0
    %vm98 = vcmp.le.f32.partialorder %v87, 30.0
    %vm99 = vmand %vm97, %vm98
    %s100 = sadd.s32 %s66, 5
    %s101 = sld [smem:[#allocation2 + %s100]]
    %s102 = sadd.s32 %s66, 6
    %s103 = sld [smem:[#allocation2 + %s102]]
    %s104 = sadd.s32 %s66, 7
    %s105 = sld [smem:[#allocation2 + %s104]]
    %v106 = vstv %s101
    %v107 = vmul.f32 %v106, %v53
    %v108 = vstv %s103
    %v109 = vmul.f32 %v108, %v55
    %v110 = vadd.f32 %v107, %v109
    %v111 = vstv %s105
    %v112 = vadd.f32 %v110, %v111
    %v113 = vadd.f32 %v83, %v112
    %vm114 = vmand %vm90, %vm96
    %v115 = vsel %vm114, %v113, -1e+30
    %v116 = vmul.f32 %v115, 1.442695
    %v117 = vpow.pop %v116
    %s118 = sadd.s32 %s66, 8
    %s119 = sld [smem:[#allocation2 + %s118]]
    %s120 = sadd.s32 %s66, 9
    %s121 = sld [smem:[#allocation2 + %s120]]
    %s122 = sadd.s32 %s66, 10
    %s123 = sld [smem:[#allocation2 + %s122]]
    %v124 = vstv %s119
    %v125 = vmul.f32 %v124, %v53
    %v126 = vstv %s121
    %v127 = vmul.f32 %v126, %v55
    %v128 = vadd.f32 %v125, %v127
    %v129 = vstv %s123
    %v130 = vadd.f32 %v128, %v129
    %v131 = vadd.f32 %v83, %v130
    %vm132 = vmand %vm90, %vm99
    %v133 = vsel %vm132, %v131, -1e+30
    %v134 = vmul.f32 %v133, 1.442695
    %v135 = vpow.pop %v134
    %v136 = vadd.f32 %v117, %v135
    %s137 = sadd.s32 %s66, 11
    %s138 = sld [smem:[#allocation2 + %s137]]
    %s139 = sadd.s32 %s66, 12
    %s140 = sld [smem:[#allocation2 + %s139]]
    %s141 = sadd.s32 %s66, 13
    %s142 = sld [smem:[#allocation2 + %s141]]
    %v143 = vstv %s138
    %v144 = vmul.f32 %v143, %v53
    %v145 = vstv %s140
    %v146 = vmul.f32 %v145, %v55
    %v147 = vadd.f32 %v144, %v146
    %v148 = vstv %s142
    %v149 = vadd.f32 %v147, %v148
    %v150 = vadd.f32 %v83, %v149
    %vm151 = vmand %vm93, %vm96
    %v152 = vsel %vm151, %v150, -1e+30
    %v153 = vmul.f32 %v152, 1.442695
    %v154 = vpow.pop %v153
    %v155 = vadd.f32 %v136, %v154
    %s156 = sadd.s32 %s66, 14
    %s157 = sld [smem:[#allocation2 + %s156]]
    %s158 = sadd.s32 %s66, 15
    %s159 = sld [smem:[#allocation2 + %s158]]
    %s160 = sadd.s32 %s66, 16
    %s161 = sld [smem:[#allocation2 + %s160]]
    %v162 = vstv %s157
    %v163 = vmul.f32 %v162, %v53
    %v164 = vstv %s159
    %v165 = vmul.f32 %v164, %v55
    %v166 = vadd.f32 %v163, %v165
    %v167 = vstv %s161
    %v168 = vadd.f32 %v166, %v167
    %v169 = vadd.f32 %v83, %v168
    %vm170 = vmand %vm93, %vm99
    %v171 = vsel %vm170, %v169, -1e+30
    %v172 = vmul.f32 %v171, 1.442695
    %v173 = vpow.pop %v172
    %v174 = vadd.f32 %v155, %v173
    %s175 = sadd.s32 %s66, 17
    %s176 = sld [smem:[#allocation2 + %s175]]
    %v177 = vld [vmem:[#allocation9] sm:$0xff]
    %v178 = vstv %s176
    %v179 = vmul.f32 %v178, %v174
    %v180 = vadd.f32 %v177, %v179
    %181 = vst [vmem:[#allocation9] sm:$0xff] %v180
    %s182 = sadd.s32 %s66, 18
    %s183 = sld [smem:[#allocation2 + %s182]]
    %s184 = scalar_lea.vmem [#allocation9], 8
    %v185 = vld [vmem:[%s184] sm:$0xff]
    %v186 = vstv %s183
    %v187 = vmul.f32 %v186, %v174
    %v188 = vadd.f32 %v185, %v187
    %189 = vst [vmem:[%s184] sm:$0xff] %v188
    %s190 = sadd.s32 %s66, 19
    %s191 = sld [smem:[#allocation2 + %s190]]
    %s192 = scalar_lea.vmem [#allocation9], 16
    %v193 = vld [vmem:[%s192] sm:$0xff]
    %v194 = vstv %s191
    %v195 = vmul.f32 %v194, %v174
    %v196 = vadd.f32 %v193, %v195
    %197 = vst [vmem:[%s192] sm:$0xff] %v196
    %s198 = smul.u32 0, 8
    %s199 = sadd.s32 %s198, 1
    %s200 = smul.u32 %s199, 20
    %s201 = sld [smem:[#allocation2 + %s200]]
    %s202 = sadd.s32 %s200, 1
    %s203 = sld [smem:[#allocation2 + %s202]]
    %s204 = sadd.s32 %s200, 2
    %s205 = sld [smem:[#allocation2 + %s204]]
    %s206 = sadd.s32 %s200, 3
    %s207 = sld [smem:[#allocation2 + %s206]]
    %s208 = sadd.s32 %s200, 4
    %s209 = sld [smem:[#allocation2 + %s208]]
    %v210 = vstv %s201
    %v211 = vmul.f32 %v210, %v56
    %v212 = vstv %s203
    %v213 = vmul.f32 %v212, %v58
    %v214 = vadd.f32 %v211, %v213
    %v215 = vstv %s205
    %v216 = vmul.f32 %v215, %v57
    %v217 = vadd.f32 %v214, %v216
    %v218 = vstv %s207
    %v219 = vadd.f32 %v50, %v218
    %v220 = vstv %s209
    %v221 = vadd.f32 %v51, %v220
    %vm222 = vcmp.ge.f32.partialorder %v219, 0.0
    %vm223 = vcmp.le.f32.partialorder %v219, 31.0
    %vm224 = vmand %vm222, %vm223
    %vm225 = vcmp.ge.f32.partialorder %v219, -1.0
    %vm226 = vcmp.le.f32.partialorder %v219, 30.0
    %vm227 = vmand %vm225, %vm226
    %vm228 = vcmp.ge.f32.partialorder %v221, 0.0
    %vm229 = vcmp.le.f32.partialorder %v221, 31.0
    %vm230 = vmand %vm228, %vm229
    %vm231 = vcmp.ge.f32.partialorder %v221, -1.0
    %vm232 = vcmp.le.f32.partialorder %v221, 30.0
    %vm233 = vmand %vm231, %vm232
    %s234 = sadd.s32 %s200, 5
    %s235 = sld [smem:[#allocation2 + %s234]]
    %s236 = sadd.s32 %s200, 6
    %s237 = sld [smem:[#allocation2 + %s236]]
    %s238 = sadd.s32 %s200, 7
    %s239 = sld [smem:[#allocation2 + %s238]]
    %v240 = vstv %s235
    %v241 = vmul.f32 %v240, %v53
    %v242 = vstv %s237
    %v243 = vmul.f32 %v242, %v55
    %v244 = vadd.f32 %v241, %v243
    %v245 = vstv %s239
    %v246 = vadd.f32 %v244, %v245
    %v247 = vadd.f32 %v217, %v246
    %vm248 = vmand %vm224, %vm230
    %v249 = vsel %vm248, %v247, -1e+30
    %v250 = vmul.f32 %v249, 1.442695
    %v251 = vpow.pop %v250
    %s252 = sadd.s32 %s200, 8
    %s253 = sld [smem:[#allocation2 + %s252]]
    %s254 = sadd.s32 %s200, 9
    %s255 = sld [smem:[#allocation2 + %s254]]
    %s256 = sadd.s32 %s200, 10
    %s257 = sld [smem:[#allocation2 + %s256]]
    %v258 = vstv %s253
    %v259 = vmul.f32 %v258, %v53
    %v260 = vstv %s255
    %v261 = vmul.f32 %v260, %v55
    %v262 = vadd.f32 %v259, %v261
    %v263 = vstv %s257
    %v264 = vadd.f32 %v262, %v263
    %v265 = vadd.f32 %v217, %v264
    %vm266 = vmand %vm224, %vm233
    %v267 = vsel %vm266, %v265, -1e+30
    %v268 = vmul.f32 %v267, 1.442695
    %v269 = vpow.pop %v268
    %v270 = vadd.f32 %v251, %v269
    %s271 = sadd.s32 %s200, 11
    %s272 = sld [smem:[#allocation2 + %s271]]
    %s273 = sadd.s32 %s200, 12
    %s274 = sld [smem:[#allocation2 + %s273]]
    %s275 = sadd.s32 %s200, 13
    %s276 = sld [smem:[#allocation2 + %s275]]
    %v277 = vstv %s272
    %v278 = vmul.f32 %v277, %v53
    %v279 = vstv %s274
    %v280 = vmul.f32 %v279, %v55
    %v281 = vadd.f32 %v278, %v280
    %v282 = vstv %s276
    %v283 = vadd.f32 %v281, %v282
    %v284 = vadd.f32 %v217, %v283
    %vm285 = vmand %vm227, %vm230
    %v286 = vsel %vm285, %v284, -1e+30
    %v287 = vmul.f32 %v286, 1.442695
    %v288 = vpow.pop %v287
    %v289 = vadd.f32 %v270, %v288
    %s290 = sadd.s32 %s200, 14
    %s291 = sld [smem:[#allocation2 + %s290]]
    %s292 = sadd.s32 %s200, 15
    %s293 = sld [smem:[#allocation2 + %s292]]
    %s294 = sadd.s32 %s200, 16
    %s295 = sld [smem:[#allocation2 + %s294]]
    %v296 = vstv %s291
    %v297 = vmul.f32 %v296, %v53
    %v298 = vstv %s293
    %v299 = vmul.f32 %v298, %v55
    %v300 = vadd.f32 %v297, %v299
    %v301 = vstv %s295
    %v302 = vadd.f32 %v300, %v301
    %v303 = vadd.f32 %v217, %v302
    %vm304 = vmand %vm227, %vm233
    %v305 = vsel %vm304, %v303, -1e+30
    %v306 = vmul.f32 %v305, 1.442695
    %v307 = vpow.pop %v306
    %v308 = vadd.f32 %v289, %v307
    %s309 = sadd.s32 %s200, 17
    %s310 = sld [smem:[#allocation2 + %s309]]
    %v311 = vld [vmem:[#allocation9] sm:$0xff]
    %v312 = vstv %s310
    %v313 = vmul.f32 %v312, %v308
    %v314 = vadd.f32 %v311, %v313
    %315 = vst [vmem:[#allocation9] sm:$0xff] %v314
    %s316 = sadd.s32 %s200, 18
    %s317 = sld [smem:[#allocation2 + %s316]]
    %v318 = vld [vmem:[%s184] sm:$0xff]
    %v319 = vstv %s317
    %v320 = vmul.f32 %v319, %v308
    %v321 = vadd.f32 %v318, %v320
    %322 = vst [vmem:[%s184] sm:$0xff] %v321
    %s323 = sadd.s32 %s200, 19
    %s324 = sld [smem:[#allocation2 + %s323]]
    %v325 = vld [vmem:[%s192] sm:$0xff]
    %v326 = vstv %s324
    %v327 = vmul.f32 %v326, %v308
    %v328 = vadd.f32 %v325, %v327
    %329 = vst [vmem:[%s192] sm:$0xff] %v328
    %s330 = sadd.s32 %s198, 2
    %s331 = smul.u32 %s330, 20
    %s332 = sld [smem:[#allocation2 + %s331]]
    %s333 = sadd.s32 %s331, 1
    %s334 = sld [smem:[#allocation2 + %s333]]
    %s335 = sadd.s32 %s331, 2
    %s336 = sld [smem:[#allocation2 + %s335]]
    %s337 = sadd.s32 %s331, 3
    %s338 = sld [smem:[#allocation2 + %s337]]
    %s339 = sadd.s32 %s331, 4
    %s340 = sld [smem:[#allocation2 + %s339]]
    %v341 = vstv %s332
    %v342 = vmul.f32 %v341, %v56
    %v343 = vstv %s334
    %v344 = vmul.f32 %v343, %v58
    %v345 = vadd.f32 %v342, %v344
    %v346 = vstv %s336
    %v347 = vmul.f32 %v346, %v57
    %v348 = vadd.f32 %v345, %v347
    %v349 = vstv %s338
    %v350 = vadd.f32 %v50, %v349
    %v351 = vstv %s340
    %v352 = vadd.f32 %v51, %v351
    %vm353 = vcmp.ge.f32.partialorder %v350, 0.0
    %vm354 = vcmp.le.f32.partialorder %v350, 31.0
    %vm355 = vmand %vm353, %vm354
    %vm356 = vcmp.ge.f32.partialorder %v350, -1.0
    %vm357 = vcmp.le.f32.partialorder %v350, 30.0
    %vm358 = vmand %vm356, %vm357
    %vm359 = vcmp.ge.f32.partialorder %v352, 0.0
    %vm360 = vcmp.le.f32.partialorder %v352, 31.0
    %vm361 = vmand %vm359, %vm360
    %vm362 = vcmp.ge.f32.partialorder %v352, -1.0
    %vm363 = vcmp.le.f32.partialorder %v352, 30.0
    %vm364 = vmand %vm362, %vm363
    %s365 = sadd.s32 %s331, 5
    %s366 = sld [smem:[#allocation2 + %s365]]
    %s367 = sadd.s32 %s331, 6
    %s368 = sld [smem:[#allocation2 + %s367]]
    %s369 = sadd.s32 %s331, 7
    %s370 = sld [smem:[#allocation2 + %s369]]
    %v371 = vstv %s366
    %v372 = vmul.f32 %v371, %v53
    %v373 = vstv %s368
    %v374 = vmul.f32 %v373, %v55
    %v375 = vadd.f32 %v372, %v374
    %v376 = vstv %s370
    %v377 = vadd.f32 %v375, %v376
    %v378 = vadd.f32 %v348, %v377
    %vm379 = vmand %vm355, %vm361
    %v380 = vsel %vm379, %v378, -1e+30
    %v381 = vmul.f32 %v380, 1.442695
    %v382 = vpow.pop %v381
    %s383 = sadd.s32 %s331, 8
    %s384 = sld [smem:[#allocation2 + %s383]]
    %s385 = sadd.s32 %s331, 9
    %s386 = sld [smem:[#allocation2 + %s385]]
    %s387 = sadd.s32 %s331, 10
    %s388 = sld [smem:[#allocation2 + %s387]]
    %v389 = vstv %s384
    %v390 = vmul.f32 %v389, %v53
    %v391 = vstv %s386
    %v392 = vmul.f32 %v391, %v55
    %v393 = vadd.f32 %v390, %v392
    %v394 = vstv %s388
    %v395 = vadd.f32 %v393, %v394
    %v396 = vadd.f32 %v348, %v395
    %vm397 = vmand %vm355, %vm364
    %v398 = vsel %vm397, %v396, -1e+30
    %v399 = vmul.f32 %v398, 1.442695
    %v400 = vpow.pop %v399
    %v401 = vadd.f32 %v382, %v400
    %s402 = sadd.s32 %s331, 11
    %s403 = sld [smem:[#allocation2 + %s402]]
    %s404 = sadd.s32 %s331, 12
    %s405 = sld [smem:[#allocation2 + %s404]]
    %s406 = sadd.s32 %s331, 13
    %s407 = sld [smem:[#allocation2 + %s406]]
    %v408 = vstv %s403
    %v409 = vmul.f32 %v408, %v53
    %v410 = vstv %s405
    %v411 = vmul.f32 %v410, %v55
    %v412 = vadd.f32 %v409, %v411
    %v413 = vstv %s407
    %v414 = vadd.f32 %v412, %v413
    %v415 = vadd.f32 %v348, %v414
    %vm416 = vmand %vm358, %vm361
    %v417 = vsel %vm416, %v415, -1e+30
    %v418 = vmul.f32 %v417, 1.442695
    %v419 = vpow.pop %v418
    %v420 = vadd.f32 %v401, %v419
    %s421 = sadd.s32 %s331, 14
    %s422 = sld [smem:[#allocation2 + %s421]]
    %s423 = sadd.s32 %s331, 15
    %s424 = sld [smem:[#allocation2 + %s423]]
    %s425 = sadd.s32 %s331, 16
    %s426 = sld [smem:[#allocation2 + %s425]]
    %v427 = vstv %s422
    %v428 = vmul.f32 %v427, %v53
    %v429 = vstv %s424
    %v430 = vmul.f32 %v429, %v55
    %v431 = vadd.f32 %v428, %v430
    %v432 = vstv %s426
    %v433 = vadd.f32 %v431, %v432
    %v434 = vadd.f32 %v348, %v433
    %vm435 = vmand %vm358, %vm364
    %v436 = vsel %vm435, %v434, -1e+30
    %v437 = vmul.f32 %v436, 1.442695
    %v438 = vpow.pop %v437
    %v439 = vadd.f32 %v420, %v438
    %s440 = sadd.s32 %s331, 17
    %s441 = sld [smem:[#allocation2 + %s440]]
    %v442 = vld [vmem:[#allocation9] sm:$0xff]
    %v443 = vstv %s441
    %v444 = vmul.f32 %v443, %v439
    %v445 = vadd.f32 %v442, %v444
    %446 = vst [vmem:[#allocation9] sm:$0xff] %v445
    %s447 = sadd.s32 %s331, 18
    %s448 = sld [smem:[#allocation2 + %s447]]
    %v449 = vld [vmem:[%s184] sm:$0xff]
    %v450 = vstv %s448
    %v451 = vmul.f32 %v450, %v439
    %v452 = vadd.f32 %v449, %v451
    %453 = vst [vmem:[%s184] sm:$0xff] %v452
    %s454 = sadd.s32 %s331, 19
    %s455 = sld [smem:[#allocation2 + %s454]]
    %v456 = vld [vmem:[%s192] sm:$0xff]
    %v457 = vstv %s455
    %v458 = vmul.f32 %v457, %v439
    %v459 = vadd.f32 %v456, %v458
    %460 = vst [vmem:[%s192] sm:$0xff] %v459
    %s461 = sadd.s32 %s198, 3
    %s462 = smul.u32 %s461, 20
    %s463 = sld [smem:[#allocation2 + %s462]]
    %s464 = sadd.s32 %s462, 1
    %s465 = sld [smem:[#allocation2 + %s464]]
    %s466 = sadd.s32 %s462, 2
    %s467 = sld [smem:[#allocation2 + %s466]]
    %s468 = sadd.s32 %s462, 3
    %s469 = sld [smem:[#allocation2 + %s468]]
    %s470 = sadd.s32 %s462, 4
    %s471 = sld [smem:[#allocation2 + %s470]]
    %v472 = vstv %s463
    %v473 = vmul.f32 %v472, %v56
    %v474 = vstv %s465
    %v475 = vmul.f32 %v474, %v58
    %v476 = vadd.f32 %v473, %v475
    %v477 = vstv %s467
    %v478 = vmul.f32 %v477, %v57
    %v479 = vadd.f32 %v476, %v478
    %v480 = vstv %s469
    %v481 = vadd.f32 %v50, %v480
    %v482 = vstv %s471
    %v483 = vadd.f32 %v51, %v482
    %vm484 = vcmp.ge.f32.partialorder %v481, 0.0
    %vm485 = vcmp.le.f32.partialorder %v481, 31.0
    %vm486 = vmand %vm484, %vm485
    %vm487 = vcmp.ge.f32.partialorder %v481, -1.0
    %vm488 = vcmp.le.f32.partialorder %v481, 30.0
    %vm489 = vmand %vm487, %vm488
    %vm490 = vcmp.ge.f32.partialorder %v483, 0.0
    %vm491 = vcmp.le.f32.partialorder %v483, 31.0
    %vm492 = vmand %vm490, %vm491
    %vm493 = vcmp.ge.f32.partialorder %v483, -1.0
    %vm494 = vcmp.le.f32.partialorder %v483, 30.0
    %vm495 = vmand %vm493, %vm494
    %s496 = sadd.s32 %s462, 5
    %s497 = sld [smem:[#allocation2 + %s496]]
    %s498 = sadd.s32 %s462, 6
    %s499 = sld [smem:[#allocation2 + %s498]]
    %s500 = sadd.s32 %s462, 7
    %s501 = sld [smem:[#allocation2 + %s500]]
    %v502 = vstv %s497
    %v503 = vmul.f32 %v502, %v53
    %v504 = vstv %s499
    %v505 = vmul.f32 %v504, %v55
    %v506 = vadd.f32 %v503, %v505
    %v507 = vstv %s501
    %v508 = vadd.f32 %v506, %v507
    %v509 = vadd.f32 %v479, %v508
    %vm510 = vmand %vm486, %vm492
    %v511 = vsel %vm510, %v509, -1e+30
    %v512 = vmul.f32 %v511, 1.442695
    %v513 = vpow.pop %v512
    %s514 = sadd.s32 %s462, 8
    %s515 = sld [smem:[#allocation2 + %s514]]
    %s516 = sadd.s32 %s462, 9
    %s517 = sld [smem:[#allocation2 + %s516]]
    %s518 = sadd.s32 %s462, 10
    %s519 = sld [smem:[#allocation2 + %s518]]
    %v520 = vstv %s515
    %v521 = vmul.f32 %v520, %v53
    %v522 = vstv %s517
    %v523 = vmul.f32 %v522, %v55
    %v524 = vadd.f32 %v521, %v523
    %v525 = vstv %s519
    %v526 = vadd.f32 %v524, %v525
    %v527 = vadd.f32 %v479, %v526
    %vm528 = vmand %vm486, %vm495
    %v529 = vsel %vm528, %v527, -1e+30
    %v530 = vmul.f32 %v529, 1.442695
    %v531 = vpow.pop %v530
    %v532 = vadd.f32 %v513, %v531
    %s533 = sadd.s32 %s462, 11
    %s534 = sld [smem:[#allocation2 + %s533]]
    %s535 = sadd.s32 %s462, 12
    %s536 = sld [smem:[#allocation2 + %s535]]
    %s537 = sadd.s32 %s462, 13
    %s538 = sld [smem:[#allocation2 + %s537]]
    %v539 = vstv %s534
    %v540 = vmul.f32 %v539, %v53
    %v541 = vstv %s536
    %v542 = vmul.f32 %v541, %v55
    %v543 = vadd.f32 %v540, %v542
    %v544 = vstv %s538
    %v545 = vadd.f32 %v543, %v544
    %v546 = vadd.f32 %v479, %v545
    %vm547 = vmand %vm489, %vm492
    %v548 = vsel %vm547, %v546, -1e+30
    %v549 = vmul.f32 %v548, 1.442695
    %v550 = vpow.pop %v549
    %v551 = vadd.f32 %v532, %v550
    %s552 = sadd.s32 %s462, 14
    %s553 = sld [smem:[#allocation2 + %s552]]
    %s554 = sadd.s32 %s462, 15
    %s555 = sld [smem:[#allocation2 + %s554]]
    %s556 = sadd.s32 %s462, 16
    %s557 = sld [smem:[#allocation2 + %s556]]
    %v558 = vstv %s553
    %v559 = vmul.f32 %v558, %v53
    %v560 = vstv %s555
    %v561 = vmul.f32 %v560, %v55
    %v562 = vadd.f32 %v559, %v561
    %v563 = vstv %s557
    %v564 = vadd.f32 %v562, %v563
    %v565 = vadd.f32 %v479, %v564
    %vm566 = vmand %vm489, %vm495
    %v567 = vsel %vm566, %v565, -1e+30
    %v568 = vmul.f32 %v567, 1.442695
    %v569 = vpow.pop %v568
    %v570 = vadd.f32 %v551, %v569
    %s571 = sadd.s32 %s462, 17
    %s572 = sld [smem:[#allocation2 + %s571]]
    %v573 = vld [vmem:[#allocation9] sm:$0xff]
    %v574 = vstv %s572
    %v575 = vmul.f32 %v574, %v570
    %v576 = vadd.f32 %v573, %v575
    %577 = vst [vmem:[#allocation9] sm:$0xff] %v576
    %s578 = sadd.s32 %s462, 18
    %s579 = sld [smem:[#allocation2 + %s578]]
    %v580 = vld [vmem:[%s184] sm:$0xff]
    %v581 = vstv %s579
    %v582 = vmul.f32 %v581, %v570
    %v583 = vadd.f32 %v580, %v582
    %584 = vst [vmem:[%s184] sm:$0xff] %v583
    %s585 = sadd.s32 %s462, 19
    %s586 = sld [smem:[#allocation2 + %s585]]
    %v587 = vld [vmem:[%s192] sm:$0xff]
    %v588 = vstv %s586
    %v589 = vmul.f32 %v588, %v570
    %v590 = vadd.f32 %v587, %v589
    %591 = vst [vmem:[%s192] sm:$0xff] %v590
    %s592 = sadd.s32 %s198, 4
    %s593 = smul.u32 %s592, 20
    %s594 = sld [smem:[#allocation2 + %s593]]
    %s595 = sadd.s32 %s593, 1
    %s596 = sld [smem:[#allocation2 + %s595]]
    %s597 = sadd.s32 %s593, 2
    %s598 = sld [smem:[#allocation2 + %s597]]
    %s599 = sadd.s32 %s593, 3
    %s600 = sld [smem:[#allocation2 + %s599]]
    %s601 = sadd.s32 %s593, 4
    %s602 = sld [smem:[#allocation2 + %s601]]
    %v603 = vstv %s594
    %v604 = vmul.f32 %v603, %v56
    %v605 = vstv %s596
    %v606 = vmul.f32 %v605, %v58
    %v607 = vadd.f32 %v604, %v606
    %v608 = vstv %s598
    %v609 = vmul.f32 %v608, %v57
    %v610 = vadd.f32 %v607, %v609
    %v611 = vstv %s600
    %v612 = vadd.f32 %v50, %v611
    %v613 = vstv %s602
    %v614 = vadd.f32 %v51, %v613
    %vm615 = vcmp.ge.f32.partialorder %v612, 0.0
    %vm616 = vcmp.le.f32.partialorder %v612, 31.0
    %vm617 = vmand %vm615, %vm616
    %vm618 = vcmp.ge.f32.partialorder %v612, -1.0
    %vm619 = vcmp.le.f32.partialorder %v612, 30.0
    %vm620 = vmand %vm618, %vm619
    %vm621 = vcmp.ge.f32.partialorder %v614, 0.0
    %vm622 = vcmp.le.f32.partialorder %v614, 31.0
    %vm623 = vmand %vm621, %vm622
    %vm624 = vcmp.ge.f32.partialorder %v614, -1.0
    %vm625 = vcmp.le.f32.partialorder %v614, 30.0
    %vm626 = vmand %vm624, %vm625
    %s627 = sadd.s32 %s593, 5
    %s628 = sld [smem:[#allocation2 + %s627]]
    %s629 = sadd.s32 %s593, 6
    %s630 = sld [smem:[#allocation2 + %s629]]
    %s631 = sadd.s32 %s593, 7
    %s632 = sld [smem:[#allocation2 + %s631]]
    %v633 = vstv %s628
    %v634 = vmul.f32 %v633, %v53
    %v635 = vstv %s630
    %v636 = vmul.f32 %v635, %v55
    %v637 = vadd.f32 %v634, %v636
    %v638 = vstv %s632
    %v639 = vadd.f32 %v637, %v638
    %v640 = vadd.f32 %v610, %v639
    %vm641 = vmand %vm617, %vm623
    %v642 = vsel %vm641, %v640, -1e+30
    %v643 = vmul.f32 %v642, 1.442695
    %v644 = vpow.pop %v643
    %s645 = sadd.s32 %s593, 8
    %s646 = sld [smem:[#allocation2 + %s645]]
    %s647 = sadd.s32 %s593, 9
    %s648 = sld [smem:[#allocation2 + %s647]]
    %s649 = sadd.s32 %s593, 10
    %s650 = sld [smem:[#allocation2 + %s649]]
    %v651 = vstv %s646
    %v652 = vmul.f32 %v651, %v53
    %v653 = vstv %s648
    %v654 = vmul.f32 %v653, %v55
    %v655 = vadd.f32 %v652, %v654
    %v656 = vstv %s650
    %v657 = vadd.f32 %v655, %v656
    %v658 = vadd.f32 %v610, %v657
    %vm659 = vmand %vm617, %vm626
    %v660 = vsel %vm659, %v658, -1e+30
    %v661 = vmul.f32 %v660, 1.442695
    %v662 = vpow.pop %v661
    %v663 = vadd.f32 %v644, %v662
    %s664 = sadd.s32 %s593, 11
    %s665 = sld [smem:[#allocation2 + %s664]]
    %s666 = sadd.s32 %s593, 12
    %s667 = sld [smem:[#allocation2 + %s666]]
    %s668 = sadd.s32 %s593, 13
    %s669 = sld [smem:[#allocation2 + %s668]]
    %v670 = vstv %s665
    %v671 = vmul.f32 %v670, %v53
    %v672 = vstv %s667
    %v673 = vmul.f32 %v672, %v55
    %v674 = vadd.f32 %v671, %v673
    %v675 = vstv %s669
    %v676 = vadd.f32 %v674, %v675
    %v677 = vadd.f32 %v610, %v676
    %vm678 = vmand %vm620, %vm623
    %v679 = vsel %vm678, %v677, -1e+30
    %v680 = vmul.f32 %v679, 1.442695
    %v681 = vpow.pop %v680
    %v682 = vadd.f32 %v663, %v681
    %s683 = sadd.s32 %s593, 14
    %s684 = sld [smem:[#allocation2 + %s683]]
    %s685 = sadd.s32 %s593, 15
    %s686 = sld [smem:[#allocation2 + %s685]]
    %s687 = sadd.s32 %s593, 16
    %s688 = sld [smem:[#allocation2 + %s687]]
    %v689 = vstv %s684
    %v690 = vmul.f32 %v689, %v53
    %v691 = vstv %s686
    %v692 = vmul.f32 %v691, %v55
    %v693 = vadd.f32 %v690, %v692
    %v694 = vstv %s688
    %v695 = vadd.f32 %v693, %v694
    %v696 = vadd.f32 %v610, %v695
    %vm697 = vmand %vm620, %vm626
    %v698 = vsel %vm697, %v696, -1e+30
    %v699 = vmul.f32 %v698, 1.442695
    %v700 = vpow.pop %v699
    %v701 = vadd.f32 %v682, %v700
    %s702 = sadd.s32 %s593, 17
    %s703 = sld [smem:[#allocation2 + %s702]]
    %v704 = vld [vmem:[#allocation9] sm:$0xff]
    %v705 = vstv %s703
    %v706 = vmul.f32 %v705, %v701
    %v707 = vadd.f32 %v704, %v706
    %708 = vst [vmem:[#allocation9] sm:$0xff] %v707
    %s709 = sadd.s32 %s593, 18
    %s710 = sld [smem:[#allocation2 + %s709]]
    %v711 = vld [vmem:[%s184] sm:$0xff]
    %v712 = vstv %s710
    %v713 = vmul.f32 %v712, %v701
    %v714 = vadd.f32 %v711, %v713
    %715 = vst [vmem:[%s184] sm:$0xff] %v714
    %s716 = sadd.s32 %s593, 19
    %s717 = sld [smem:[#allocation2 + %s716]]
    %v718 = vld [vmem:[%s192] sm:$0xff]
    %v719 = vstv %s717
    %v720 = vmul.f32 %v719, %v701
    %v721 = vadd.f32 %v718, %v720
    %722 = vst [vmem:[%s192] sm:$0xff] %v721
    %s723 = sadd.s32 %s198, 5
    %s724 = smul.u32 %s723, 20
    %s725 = sld [smem:[#allocation2 + %s724]]
    %s726 = sadd.s32 %s724, 1
    %s727 = sld [smem:[#allocation2 + %s726]]
    %s728 = sadd.s32 %s724, 2
    %s729 = sld [smem:[#allocation2 + %s728]]
    %s730 = sadd.s32 %s724, 3
    %s731 = sld [smem:[#allocation2 + %s730]]
    %s732 = sadd.s32 %s724, 4
    %s733 = sld [smem:[#allocation2 + %s732]]
    %v734 = vstv %s725
    %v735 = vmul.f32 %v734, %v56
    %v736 = vstv %s727
    %v737 = vmul.f32 %v736, %v58
    %v738 = vadd.f32 %v735, %v737
    %v739 = vstv %s729
    %v740 = vmul.f32 %v739, %v57
    %v741 = vadd.f32 %v738, %v740
    %v742 = vstv %s731
    %v743 = vadd.f32 %v50, %v742
    %v744 = vstv %s733
    %v745 = vadd.f32 %v51, %v744
    %vm746 = vcmp.ge.f32.partialorder %v743, 0.0
    %vm747 = vcmp.le.f32.partialorder %v743, 31.0
    %vm748 = vmand %vm746, %vm747
    %vm749 = vcmp.ge.f32.partialorder %v743, -1.0
    %vm750 = vcmp.le.f32.partialorder %v743, 30.0
    %vm751 = vmand %vm749, %vm750
    %vm752 = vcmp.ge.f32.partialorder %v745, 0.0
    %vm753 = vcmp.le.f32.partialorder %v745, 31.0
    %vm754 = vmand %vm752, %vm753
    %vm755 = vcmp.ge.f32.partialorder %v745, -1.0
    %vm756 = vcmp.le.f32.partialorder %v745, 30.0
    %vm757 = vmand %vm755, %vm756
    %s758 = sadd.s32 %s724, 5
    %s759 = sld [smem:[#allocation2 + %s758]]
    %s760 = sadd.s32 %s724, 6
    %s761 = sld [smem:[#allocation2 + %s760]]
    %s762 = sadd.s32 %s724, 7
    %s763 = sld [smem:[#allocation2 + %s762]]
    %v764 = vstv %s759
    %v765 = vmul.f32 %v764, %v53
    %v766 = vstv %s761
    %v767 = vmul.f32 %v766, %v55
    %v768 = vadd.f32 %v765, %v767
    %v769 = vstv %s763
    %v770 = vadd.f32 %v768, %v769
    %v771 = vadd.f32 %v741, %v770
    %vm772 = vmand %vm748, %vm754
    %v773 = vsel %vm772, %v771, -1e+30
    %v774 = vmul.f32 %v773, 1.442695
    %v775 = vpow.pop %v774
    %s776 = sadd.s32 %s724, 8
    %s777 = sld [smem:[#allocation2 + %s776]]
    %s778 = sadd.s32 %s724, 9
    %s779 = sld [smem:[#allocation2 + %s778]]
    %s780 = sadd.s32 %s724, 10
    %s781 = sld [smem:[#allocation2 + %s780]]
    %v782 = vstv %s777
    %v783 = vmul.f32 %v782, %v53
    %v784 = vstv %s779
    %v785 = vmul.f32 %v784, %v55
    %v786 = vadd.f32 %v783, %v785
    %v787 = vstv %s781
    %v788 = vadd.f32 %v786, %v787
    %v789 = vadd.f32 %v741, %v788
    %vm790 = vmand %vm748, %vm757
    %v791 = vsel %vm790, %v789, -1e+30
    %v792 = vmul.f32 %v791, 1.442695
    %v793 = vpow.pop %v792
    %v794 = vadd.f32 %v775, %v793
    %s795 = sadd.s32 %s724, 11
    %s796 = sld [smem:[#allocation2 + %s795]]
    %s797 = sadd.s32 %s724, 12
    %s798 = sld [smem:[#allocation2 + %s797]]
    %s799 = sadd.s32 %s724, 13
    %s800 = sld [smem:[#allocation2 + %s799]]
    %v801 = vstv %s796
    %v802 = vmul.f32 %v801, %v53
    %v803 = vstv %s798
    %v804 = vmul.f32 %v803, %v55
    %v805 = vadd.f32 %v802, %v804
    %v806 = vstv %s800
    %v807 = vadd.f32 %v805, %v806
    %v808 = vadd.f32 %v741, %v807
    %vm809 = vmand %vm751, %vm754
    %v810 = vsel %vm809, %v808, -1e+30
    %v811 = vmul.f32 %v810, 1.442695
    %v812 = vpow.pop %v811
    %v813 = vadd.f32 %v794, %v812
    %s814 = sadd.s32 %s724, 14
    %s815 = sld [smem:[#allocation2 + %s814]]
    %s816 = sadd.s32 %s724, 15
    %s817 = sld [smem:[#allocation2 + %s816]]
    %s818 = sadd.s32 %s724, 16
    %s819 = sld [smem:[#allocation2 + %s818]]
    %v820 = vstv %s815
    %v821 = vmul.f32 %v820, %v53
    %v822 = vstv %s817
    %v823 = vmul.f32 %v822, %v55
    %v824 = vadd.f32 %v821, %v823
    %v825 = vstv %s819
    %v826 = vadd.f32 %v824, %v825
    %v827 = vadd.f32 %v741, %v826
    %vm828 = vmand %vm751, %vm757
    %v829 = vsel %vm828, %v827, -1e+30
    %v830 = vmul.f32 %v829, 1.442695
    %v831 = vpow.pop %v830
    %v832 = vadd.f32 %v813, %v831
    %s833 = sadd.s32 %s724, 17
    %s834 = sld [smem:[#allocation2 + %s833]]
    %v835 = vld [vmem:[#allocation9] sm:$0xff]
    %v836 = vstv %s834
    %v837 = vmul.f32 %v836, %v832
    %v838 = vadd.f32 %v835, %v837
    %839 = vst [vmem:[#allocation9] sm:$0xff] %v838
    %s840 = sadd.s32 %s724, 18
    %s841 = sld [smem:[#allocation2 + %s840]]
    %v842 = vld [vmem:[%s184] sm:$0xff]
    %v843 = vstv %s841
    %v844 = vmul.f32 %v843, %v832
    %v845 = vadd.f32 %v842, %v844
    %846 = vst [vmem:[%s184] sm:$0xff] %v845
    %s847 = sadd.s32 %s724, 19
    %s848 = sld [smem:[#allocation2 + %s847]]
    %v849 = vld [vmem:[%s192] sm:$0xff]
    %v850 = vstv %s848
    %v851 = vmul.f32 %v850, %v832
    %v852 = vadd.f32 %v849, %v851
    %853 = vst [vmem:[%s192] sm:$0xff] %v852
    %s854 = sadd.s32 %s198, 6
    %s855 = smul.u32 %s854, 20
    %s856 = sld [smem:[#allocation2 + %s855]]
    %s857 = sadd.s32 %s855, 1
    %s858 = sld [smem:[#allocation2 + %s857]]
    %s859 = sadd.s32 %s855, 2
    %s860 = sld [smem:[#allocation2 + %s859]]
    %s861 = sadd.s32 %s855, 3
    %s862 = sld [smem:[#allocation2 + %s861]]
    %s863 = sadd.s32 %s855, 4
    %s864 = sld [smem:[#allocation2 + %s863]]
    %v865 = vstv %s856
    %v866 = vmul.f32 %v865, %v56
    %v867 = vstv %s858
    %v868 = vmul.f32 %v867, %v58
    %v869 = vadd.f32 %v866, %v868
    %v870 = vstv %s860
    %v871 = vmul.f32 %v870, %v57
    %v872 = vadd.f32 %v869, %v871
    %v873 = vstv %s862
    %v874 = vadd.f32 %v50, %v873
    %v875 = vstv %s864
    %v876 = vadd.f32 %v51, %v875
    %vm877 = vcmp.ge.f32.partialorder %v874, 0.0
    %vm878 = vcmp.le.f32.partialorder %v874, 31.0
    %vm879 = vmand %vm877, %vm878
    %vm880 = vcmp.ge.f32.partialorder %v874, -1.0
    %vm881 = vcmp.le.f32.partialorder %v874, 30.0
    %vm882 = vmand %vm880, %vm881
    %vm883 = vcmp.ge.f32.partialorder %v876, 0.0
    %vm884 = vcmp.le.f32.partialorder %v876, 31.0
    %vm885 = vmand %vm883, %vm884
    %vm886 = vcmp.ge.f32.partialorder %v876, -1.0
    %vm887 = vcmp.le.f32.partialorder %v876, 30.0
    %vm888 = vmand %vm886, %vm887
    %s889 = sadd.s32 %s855, 5
    %s890 = sld [smem:[#allocation2 + %s889]]
    %s891 = sadd.s32 %s855, 6
    %s892 = sld [smem:[#allocation2 + %s891]]
    %s893 = sadd.s32 %s855, 7
    %s894 = sld [smem:[#allocation2 + %s893]]
    %v895 = vstv %s890
    %v896 = vmul.f32 %v895, %v53
    %v897 = vstv %s892
    %v898 = vmul.f32 %v897, %v55
    %v899 = vadd.f32 %v896, %v898
    %v900 = vstv %s894
    %v901 = vadd.f32 %v899, %v900
    %v902 = vadd.f32 %v872, %v901
    %vm903 = vmand %vm879, %vm885
    %v904 = vsel %vm903, %v902, -1e+30
    %v905 = vmul.f32 %v904, 1.442695
    %v906 = vpow.pop %v905
    %s907 = sadd.s32 %s855, 8
    %s908 = sld [smem:[#allocation2 + %s907]]
    %s909 = sadd.s32 %s855, 9
    %s910 = sld [smem:[#allocation2 + %s909]]
    %s911 = sadd.s32 %s855, 10
    %s912 = sld [smem:[#allocation2 + %s911]]
    %v913 = vstv %s908
    %v914 = vmul.f32 %v913, %v53
    %v915 = vstv %s910
    %v916 = vmul.f32 %v915, %v55
    %v917 = vadd.f32 %v914, %v916
    %v918 = vstv %s912
    %v919 = vadd.f32 %v917, %v918
    %v920 = vadd.f32 %v872, %v919
    %vm921 = vmand %vm879, %vm888
    %v922 = vsel %vm921, %v920, -1e+30
    %v923 = vmul.f32 %v922, 1.442695
    %v924 = vpow.pop %v923
    %v925 = vadd.f32 %v906, %v924
    %s926 = sadd.s32 %s855, 11
    %s927 = sld [smem:[#allocation2 + %s926]]
    %s928 = sadd.s32 %s855, 12
    %s929 = sld [smem:[#allocation2 + %s928]]
    %s930 = sadd.s32 %s855, 13
    %s931 = sld [smem:[#allocation2 + %s930]]
    %v932 = vstv %s927
    %v933 = vmul.f32 %v932, %v53
    %v934 = vstv %s929
    %v935 = vmul.f32 %v934, %v55
    %v936 = vadd.f32 %v933, %v935
    %v937 = vstv %s931
    %v938 = vadd.f32 %v936, %v937
    %v939 = vadd.f32 %v872, %v938
    %vm940 = vmand %vm882, %vm885
    %v941 = vsel %vm940, %v939, -1e+30
    %v942 = vmul.f32 %v941, 1.442695
    %v943 = vpow.pop %v942
    %v944 = vadd.f32 %v925, %v943
    %s945 = sadd.s32 %s855, 14
    %s946 = sld [smem:[#allocation2 + %s945]]
    %s947 = sadd.s32 %s855, 15
    %s948 = sld [smem:[#allocation2 + %s947]]
    %s949 = sadd.s32 %s855, 16
    %s950 = sld [smem:[#allocation2 + %s949]]
    %v951 = vstv %s946
    %v952 = vmul.f32 %v951, %v53
    %v953 = vstv %s948
    %v954 = vmul.f32 %v953, %v55
    %v955 = vadd.f32 %v952, %v954
    %v956 = vstv %s950
    %v957 = vadd.f32 %v955, %v956
    %v958 = vadd.f32 %v872, %v957
    %vm959 = vmand %vm882, %vm888
    %v960 = vsel %vm959, %v958, -1e+30
    %v961 = vmul.f32 %v960, 1.442695
    %v962 = vpow.pop %v961
    %v963 = vadd.f32 %v944, %v962
    %s964 = sadd.s32 %s855, 17
    %s965 = sld [smem:[#allocation2 + %s964]]
    %v966 = vld [vmem:[#allocation9] sm:$0xff]
    %v967 = vstv %s965
    %v968 = vmul.f32 %v967, %v963
    %v969 = vadd.f32 %v966, %v968
    %970 = vst [vmem:[#allocation9] sm:$0xff] %v969
    %s971 = sadd.s32 %s855, 18
    %s972 = sld [smem:[#allocation2 + %s971]]
    %v973 = vld [vmem:[%s184] sm:$0xff]
    %v974 = vstv %s972
    %v975 = vmul.f32 %v974, %v963
    %v976 = vadd.f32 %v973, %v975
    %977 = vst [vmem:[%s184] sm:$0xff] %v976
    %s978 = sadd.s32 %s855, 19
    %s979 = sld [smem:[#allocation2 + %s978]]
    %v980 = vld [vmem:[%s192] sm:$0xff]
    %v981 = vstv %s979
    %v982 = vmul.f32 %v981, %v963
    %v983 = vadd.f32 %v980, %v982
    %984 = vst [vmem:[%s192] sm:$0xff] %v983
    %s985 = sadd.s32 %s198, 7
    %s986 = smul.u32 %s985, 20
    %s987 = sld [smem:[#allocation2 + %s986]]
    %s988 = sadd.s32 %s986, 1
    %s989 = sld [smem:[#allocation2 + %s988]]
    %s990 = sadd.s32 %s986, 2
    %s991 = sld [smem:[#allocation2 + %s990]]
    %s992 = sadd.s32 %s986, 3
    %s993 = sld [smem:[#allocation2 + %s992]]
    %s994 = sadd.s32 %s986, 4
    %s995 = sld [smem:[#allocation2 + %s994]]
    %v996 = vstv %s987
    %v997 = vmul.f32 %v996, %v56
    %v998 = vstv %s989
    %v999 = vmul.f32 %v998, %v58
    %v1000 = vadd.f32 %v997, %v999
    %v1001 = vstv %s991
    %v1002 = vmul.f32 %v1001, %v57
    %v1003 = vadd.f32 %v1000, %v1002
    %v1004 = vstv %s993
    %v1005 = vadd.f32 %v50, %v1004
    %v1006 = vstv %s995
    %v1007 = vadd.f32 %v51, %v1006
    %vm1008 = vcmp.ge.f32.partialorder %v1005, 0.0
    %vm1009 = vcmp.le.f32.partialorder %v1005, 31.0
    %vm1010 = vmand %vm1008, %vm1009
    %vm1011 = vcmp.ge.f32.partialorder %v1005, -1.0
    %vm1012 = vcmp.le.f32.partialorder %v1005, 30.0
    %vm1013 = vmand %vm1011, %vm1012
    %vm1014 = vcmp.ge.f32.partialorder %v1007, 0.0
    %vm1015 = vcmp.le.f32.partialorder %v1007, 31.0
    %vm1016 = vmand %vm1014, %vm1015
    %vm1017 = vcmp.ge.f32.partialorder %v1007, -1.0
    %vm1018 = vcmp.le.f32.partialorder %v1007, 30.0
    %vm1019 = vmand %vm1017, %vm1018
    %s1020 = sadd.s32 %s986, 5
    %s1021 = sld [smem:[#allocation2 + %s1020]]
    %s1022 = sadd.s32 %s986, 6
    %s1023 = sld [smem:[#allocation2 + %s1022]]
    %s1024 = sadd.s32 %s986, 7
    %s1025 = sld [smem:[#allocation2 + %s1024]]
    %v1026 = vstv %s1021
    %v1027 = vmul.f32 %v1026, %v53
    %v1028 = vstv %s1023
    %v1029 = vmul.f32 %v1028, %v55
    %v1030 = vadd.f32 %v1027, %v1029
    %v1031 = vstv %s1025
    %v1032 = vadd.f32 %v1030, %v1031
    %v1033 = vadd.f32 %v1003, %v1032
    %vm1034 = vmand %vm1010, %vm1016
    %v1035 = vsel %vm1034, %v1033, -1e+30
    %v1036 = vmul.f32 %v1035, 1.442695
    %v1037 = vpow.pop %v1036
    %s1038 = sadd.s32 %s986, 8
    %s1039 = sld [smem:[#allocation2 + %s1038]]
    %s1040 = sadd.s32 %s986, 9
    %s1041 = sld [smem:[#allocation2 + %s1040]]
    %s1042 = sadd.s32 %s986, 10
    %s1043 = sld [smem:[#allocation2 + %s1042]]
    %v1044 = vstv %s1039
    %v1045 = vmul.f32 %v1044, %v53
    %v1046 = vstv %s1041
    %v1047 = vmul.f32 %v1046, %v55
    %v1048 = vadd.f32 %v1045, %v1047
    %v1049 = vstv %s1043
    %v1050 = vadd.f32 %v1048, %v1049
    %v1051 = vadd.f32 %v1003, %v1050
    %vm1052 = vmand %vm1010, %vm1019
    %v1053 = vsel %vm1052, %v1051, -1e+30
    %v1054 = vmul.f32 %v1053, 1.442695
    %v1055 = vpow.pop %v1054
    %v1056 = vadd.f32 %v1037, %v1055
    %s1057 = sadd.s32 %s986, 11
    %s1058 = sld [smem:[#allocation2 + %s1057]]
    %s1059 = sadd.s32 %s986, 12
    %s1060 = sld [smem:[#allocation2 + %s1059]]
    %s1061 = sadd.s32 %s986, 13
    %s1062 = sld [smem:[#allocation2 + %s1061]]
    %v1063 = vstv %s1058
    %v1064 = vmul.f32 %v1063, %v53
    %v1065 = vstv %s1060
    %v1066 = vmul.f32 %v1065, %v55
    %v1067 = vadd.f32 %v1064, %v1066
    %v1068 = vstv %s1062
    %v1069 = vadd.f32 %v1067, %v1068
    %v1070 = vadd.f32 %v1003, %v1069
    %vm1071 = vmand %vm1013, %vm1016
    %v1072 = vsel %vm1071, %v1070, -1e+30
    %v1073 = vmul.f32 %v1072, 1.442695
    %v1074 = vpow.pop %v1073
    %v1075 = vadd.f32 %v1056, %v1074
    %s1076 = sadd.s32 %s986, 14
    %s1077 = sld [smem:[#allocation2 + %s1076]]
    %s1078 = sadd.s32 %s986, 15
    %s1079 = sld [smem:[#allocation2 + %s1078]]
    %s1080 = sadd.s32 %s986, 16
    %s1081 = sld [smem:[#allocation2 + %s1080]]
    %v1082 = vstv %s1077
    %v1083 = vmul.f32 %v1082, %v53
    %v1084 = vstv %s1079
    %v1085 = vmul.f32 %v1084, %v55
    %v1086 = vadd.f32 %v1083, %v1085
    %v1087 = vstv %s1081
    %v1088 = vadd.f32 %v1086, %v1087
    %v1089 = vadd.f32 %v1003, %v1088
    %vm1090 = vmand %vm1013, %vm1019
    %v1091 = vsel %vm1090, %v1089, -1e+30
    %v1092 = vmul.f32 %v1091, 1.442695
    %v1093 = vpow.pop %v1092
    %v1094 = vadd.f32 %v1075, %v1093
    %s1095 = sadd.s32 %s986, 17
    %s1096 = sld [smem:[#allocation2 + %s1095]]
    %v1097 = vld [vmem:[#allocation9] sm:$0xff]
    %v1098 = vstv %s1096
    %v1099 = vmul.f32 %v1098, %v1094
    %v1100 = vadd.f32 %v1097, %v1099
    %1101 = vst [vmem:[#allocation9] sm:$0xff] %v1100
    %s1102 = sadd.s32 %s986, 18
    %s1103 = sld [smem:[#allocation2 + %s1102]]
    %v1104 = vld [vmem:[%s184] sm:$0xff]
    %v1105 = vstv %s1103
    %v1106 = vmul.f32 %v1105, %v1094
    %v1107 = vadd.f32 %v1104, %v1106
    %1108 = vst [vmem:[%s184] sm:$0xff] %v1107
    %s1109 = sadd.s32 %s986, 19
    %s1110 = sld [smem:[#allocation2 + %s1109]]
    %v1111 = vld [vmem:[%s192] sm:$0xff]
    %v1112 = vstv %s1110
    %v1113 = vmul.f32 %v1112, %v1094
    %v1114 = vadd.f32 %v1111, %v1113
    %1115 = vst [vmem:[%s192] sm:$0xff] %v1114
    // Predicated region
    $region30: #{tpu_custom_call.1} parent=1 // pred_check
      %p1116 = pneg %p59
    $region31: #{tpu_custom_call.1} parent=1 // pred_check_branch
      %1118 = sbr.rel (%p1116) target = $region33
    $region32: #{tpu_custom_call.1} parent=1 // pred_region
      %v1119 = vld [vmem:[#allocation9] sm:$0xff]
      %v1120 = vld [vmem:[#allocation9 + $0x8] sm:$0xff]
      %v1121 = vld [vmem:[#allocation9 + $0x10] sm:$0xff]
      %v1122 = vmax.f32 %v1119, 0.0
      %v1123 = vmax.f32 %v1120, 0.0
      %v1124 = vmax.f32 %v1121, 0.0
      %v1125 = vmin.f32 %v1122, 1.0
      %v1126 = vmin.f32 %v1123, 1.0
      %v1127 = vmin.f32 %v1124, 1.0
      %1128 = vst [vmem:[#allocation9] sm:$0xff] %v1125
      %1129 = vst [vmem:[#allocation9 + $0x8] sm:$0xff] %v1126
      %1130 = vst [vmem:[#allocation9 + $0x10] sm:$0xff] %v1127
    $region33: #{tpu_custom_call.1} parent=1 // pred_fallthru
      _
    // Predicated region
    $region34: #{tpu_custom_call.1} parent=1 // pred_check
      _
    $region35: #{tpu_custom_call.1} parent=1 // pred_check_branch
      %1132 = sbr.rel (0) target = $region37
    $region36: #{tpu_custom_call.1} parent=1 // pred_region
      %s1134 = ssub.s32 384, 384
      %1135 = vsyncadd [#allocation4], %s1134
      %s1136 = sshll.u32 [#allocation9], 4
      %s1137 = int_to_ptr.vmem [resolvable:$true] %s1136
      %1142 = dma.vmem_to_hbm [thread:$0]  %s1137, 384, %s3, [#allocation4], 128, 128, 8
    $region37: #{tpu_custom_call.1} parent=1 // pred_fallthru
      _
    // Predicated region
    $region38: #{tpu_custom_call.1} parent=1 // pred_check
      _
    $region39: #{tpu_custom_call.1} parent=1 // pred_check_branch
      %1144 = sbr.rel (0) target = $region41
    $region40: #{tpu_custom_call.1} parent=1 // pred_region
      %1145 = dma.done [#allocation4], 384
    $region41: #{tpu_custom_call.1} parent=1 // pred_fallthru
      _
    %1146 = vsyncpa [#allocation3], 1
    %1147 = vsyncpa [#allocation8], 1
    %1148 = vsyncpa [#allocation4], 1
    %1149 = vsyncpa [#allocation5], 1

</llo_original>
